<compile_context>
chip_gen: v6e
topology: v6e:2x2x1
jax: 0.10.0
libtpu: 0.0.40
codegen_flags: <defaults>
</compile_context>

<pallas_src>
import math

import jax
import jax.numpy as jnp
from jax.experimental import pallas as pl
from jax.experimental.pallas import tpu as pltpu

NEG_SLOPE = 0.01  # F.leaky_relu default
BIG = 1e8
F32 = jnp.float32
BF16 = jnp.bfloat16


def _lrelu(x):
    return jnp.where(x >= 0, x, NEG_SLOPE * x)


# --------------------------- fused Pallas kernel ------------------------------

def _make_kernel(num_layers, n_seg, nfh, n_way):
    """num_layers intermediate GNN layers + 1 last layer; n_seg = num_layers+1."""
    S = n_seg

    def kernel(*refs):
        (x0_ref, dmat_ref, qmat_ref, adjbd_ref, adjq_ref,
         maskbd_ref, maskq_ref, f1_ref, f2_ref, f1q_ref, f2q_ref,
         w2_ref, w3_ref, w4_ref, w5t_ref,
         b1_ref, b2_ref, b3_ref, b4_ref, b5_ref, fb_ref) = refs[:21]
        w1_segs = refs[21:21 + S]
        fw0_segs = refs[21 + S:21 + 2 * S]
        fw1_segs = refs[21 + 2 * S:21 + 3 * S]
        out_ref = refs[21 + 3 * S]

        dmat = dmat_ref[...]               # (B*N*N, B*N) bf16  block-diag +/-1 pair selector
        adj_bd = adjbd_ref[...]            # (B*N, B*N)   bf16  block-diag W_id
        mask_big = maskbd_ref[...] * BIG   # (B*N, B*N)   f32   adj mask + off-block mask
        f1 = f1_ref[...]                   # (B*N, B*N*N) f32   pair-row -> node-row fold
        f2 = f2_ref[...]                   # (B*N*N, B*N) f32   pair-row -> node-col fold

        def edge_mlp(d_list, l):
            """Wcompute MLP on a stack of pair rows (input features split per segment)."""
            acc = b1_ref[l]
            for s, d in enumerate(d_list):
                acc = acc + jnp.dot(d, w1_segs[s][l - s],
                                    preferred_element_type=F32)
            h = _lrelu(acc).astype(BF16)
            h = _lrelu(jnp.dot(h, w2_ref[l], preferred_element_type=F32)
                       + b2_ref[l]).astype(BF16)
            h = _lrelu(jnp.dot(h, w3_ref[l], preferred_element_type=F32)
                       + b3_ref[l]).astype(BF16)
            h = _lrelu(jnp.dot(h, w4_ref[l], preferred_element_type=F32)
                       + b4_ref[l])
            # final nf -> 1 conv: VPU multiply + lane reduce (keeps the MXU free)
            return jnp.sum(h * w5t_ref[l], axis=-1, keepdims=True) + b5_ref[l]

        def row_softmax(z):
            m = jnp.max(z, axis=-1, keepdims=True)
            e = jnp.exp(z - m)
            return e * pl.reciprocal(jnp.sum(e, axis=-1, keepdims=True),
                                     approx=True)

        segs = [x0_ref[...]]   # bf16 feature segments (never lane-concatenated)
        d_segs = []            # cached |x_i - x_j| pair rows per segment
        agg0_segs = []         # cached adj_bd @ segment

        for l in range(num_layers):
            xs = segs[l]       # segment produced by the previous layer (or input)
            d_segs.append(jnp.abs(
                jnp.dot(dmat, xs, preferred_element_type=F32)).astype(BF16))
            agg0_segs.append(
                jnp.dot(adj_bd, xs, preferred_element_type=F32).astype(BF16))

            logit = edge_mlp(d_segs, l)                        # (B*N*N, 1) f32
            # fold the pair-row column into the block-diagonal (B*N, B*N) matrix
            lbd = jnp.dot(f1, logit * f2, preferred_element_type=F32)
            p = row_softmax(lbd - mask_big).astype(BF16)       # edge weights W_new

            y = fb_ref[l]
            for s in range(l + 1):
                agg1 = jnp.dot(p, segs[s],
                               preferred_element_type=F32).astype(BF16)
                y = y + jnp.dot(agg0_segs[s], fw0_segs[s][l - s],
                                preferred_element_type=F32)
                y = y + jnp.dot(agg1, fw1_segs[s][l - s],
                                preferred_element_type=F32)
            segs.append(_lrelu(y)[:, :nfh].astype(BF16))       # new feature segment

        # ---- last layer: only the query node (node 0) of each batch element ----
        l = num_layers
        qmat = qmat_ref[...]               # (B*N, B*N)  pairs (0, j) selector
        adjq = adjq_ref[...]               # (B, B*N)    adj[b, 0, :] in block layout
        maskq_big = maskq_ref[...] * BIG   # (B, B*N)
        f1q = f1q_ref[...]                 # (B, B*N)
        f2q = f2q_ref[...]                 # (B*N, B*N)  identity

        dq = [jnp.abs(jnp.dot(qmat, seg, preferred_element_type=F32)).astype(BF16)
              for seg in segs]
        logit_q = edge_mlp(dq, l)                              # (B*N, 1) f32
        lq = jnp.dot(f1q, logit_q * f2q, preferred_element_type=F32)  # (B, B*N)
        pq = row_softmax(lq - maskq_big).astype(BF16)

        y = fb_ref[l]
        for s in range(S):
            agg0 = jnp.dot(adjq, segs[s], preferred_element_type=F32).astype(BF16)
            agg1 = jnp.dot(pq, segs[s], preferred_element_type=F32).astype(BF16)
            y = y + jnp.dot(agg0, fw0_segs[s][l - s], preferred_element_type=F32)
            y = y + jnp.dot(agg1, fw1_segs[s][l - s], preferred_element_type=F32)
        out_ref[...] = y[:, :n_way]

    return kernel


# --------------------------- weight packing -----------------------------------

def _pack_params(params):
    """Split Wcompute w1 / Gconv fw per feature segment, stack equal-shaped
    pieces across layers, fold the J2 split, and cast matmul weights to bf16."""
    num_layers = len(params["w"])
    S = num_layers + 1
    wcomputes = list(params["w"]) + [params["w_last"]]
    gconvs = list(params["l"]) + [params["l_last"]]

    f0 = wcomputes[0][0][0].shape[0]        # input feature width
    nfh = gconvs[0][1].shape[1]             # nf // 2 (intermediate Gconv width)
    n_way = gconvs[-1][1].shape[1]
    seg_w = [f0] + [nfh] * num_layers
    outw = max(nfh, n_way)

    w1_p = [[] for _ in range(S)]
    fw0_p = [[] for _ in range(S)]
    fw1_p = [[] for _ in range(S)]
    w2s, w3s, w4s, w5ts = [], [], [], []
    b1s, b2s, b3s, b4s, b5s, fbs = [], [], [], [], [], []

    for l in range(S):
        (w1, b1), (w2, b2), (w3, b3), (w4, b4), (w5, b5) = wcomputes[l]
        fw, fb = gconvs[l]
        f_in = sum(seg_w[:l + 1])
        assert w1.shape[0] == f_in and fw.shape[0] == 2 * f_in
        pad = outw - fw.shape[1]
        fw = jnp.pad(fw, ((0, 0), (0, pad)))
        fbs.append(jnp.pad(fb, ((0, 0), (0, pad))))
        w2s.append(w2); w3s.append(w3); w4s.append(w4)
        w5ts.append(jnp.transpose(w5))
        b1s.append(b1); b2s.append(b2); b3s.append(b3); b4s.append(b4); b5s.append(b5)
        off = 0
        for s in range(l + 1):
            w = seg_w[s]
            w1_p[s].append(w1[off:off + w])
            fw0_p[s].append(fw[off:off + w])                 # J=W_id half
            fw1_p[s].append(fw[f_in + off:f_in + off + w])   # J=W_new half
            off += w

    bf = lambda a: a.astype(BF16)
    st = lambda lst: jnp.stack(lst, axis=0)
    stacked = [bf(st(w2s)), bf(st(w3s)), bf(st(w4s)), st(w5ts),
               st(b1s), st(b2s), st(b3s), st(b4s), st(b5s), st(fbs)]
    seg_weights = ([bf(st(w1_p[s])) for s in range(S)]
                   + [bf(st(fw0_p[s])) for s in range(S)]
                   + [bf(st(fw1_p[s])) for s in range(S)])
    return stacked, seg_weights, seg_w, nfh, n_way, num_layers


# --------------------------- Pallas wrapper -----------------------------------

def gnn_nl_forward(x, adj, params):
    """x: (B, N, num_inputs); adj plays the role of W_init/W_id (the w_change).
    Returns the query-node logits, shape (B, n_way)."""
    B, N, F0 = x.shape
    BN, R = B * N, B * N * N
    stacked, seg_weights, seg_w, nfh, n_way, num_layers = _pack_params(params)
    assert seg_w[0] == F0
    S = num_layers + 1

    adj = adj.astype(F32)
    eyeB = jnp.eye(B, dtype=F32)
    eyeN = jnp.eye(N, dtype=F32)

    # data-side constants / block-diagonal batch folding (built by XLA, tiny)
    x0 = x.reshape(BN, F0).astype(BF16)
    adj_bd = jnp.einsum('bc,bij->bicj', eyeB, adj).reshape(BN, BN)
    blk = jnp.einsum('bc,ij->bicj', eyeB, jnp.ones((N, N), F32)).reshape(BN, BN)
    mask_bd = adj_bd + (1.0 - blk)                   # masks adj entries + off-block
    dm = (eyeN[:, None, :] - eyeN[None, :, :]).reshape(N * N, N)
    dmat_bd = jnp.einsum('bc,rk->brck', eyeB, dm).reshape(R, BN)       # pair selector
    qm = eyeN[0:1, :] - eyeN
    qmat_bd = jnp.einsum('bc,rk->brck', eyeB, qm).reshape(BN, BN)      # (0, j) pairs
    adjq_bd = jnp.einsum('bc,bj->bcj', eyeB, adj[:, 0, :]).reshape(B, BN)
    f1q = jnp.repeat(eyeB, N, axis=1)                                  # block indicator
    maskq_bd = adjq_bd + (1.0 - f1q)
    rows = jnp.arange(R)
    f1 = (rows[None, :] // N == jnp.arange(BN)[:, None]).astype(F32)   # (BN, R)
    colnode = (rows // (N * N)) * N + (rows % N)
    f2 = (colnode[:, None] == jnp.arange(BN)[None, :]).astype(F32)     # (R, BN)
    f2q = jnp.eye(BN, dtype=F32)

    operands = ([x0, dmat_bd.astype(BF16), qmat_bd.astype(BF16),
                 adj_bd.astype(BF16), adjq_bd.astype(BF16),
                 mask_bd, maskq_bd, f1, f2, f1q, f2q]
                + stacked + seg_weights)

    def full_spec(a):
        nd = a.ndim
        return pl.BlockSpec(a.shape, lambda i, _nd=nd: (0,) * _nd)

    out = pl.pallas_call(
        _make_kernel(num_layers, S, nfh, n_way),
        out_shape=jax.ShapeDtypeStruct((B, n_way), F32),
        grid=(1,),                       # whole batch folded into one step
        in_specs=[full_spec(a) for a in operands],
        out_specs=pl.BlockSpec((B, n_way), lambda i: (0, 0)),
        compiler_params=pltpu.CompilerParams(
            dimension_semantics=("arbitrary",)),
    )(*operands)
    return out


# --------------------------- deterministic params ----------------------------

def _uniform(key, shape, bound):
    return jax.random.uniform(key, shape, F32, -bound, bound)


def _init_affine(key, fan_in, fan_out):
    kw, kb = jax.random.split(key)
    bound = 1.0 / math.sqrt(fan_in)
    return _uniform(kw, (fan_in, fan_out), bound), _uniform(kb, (1, fan_out), bound)


def _fold_bn(w, b, c, eps=1e-5):
    # fresh BatchNorm (gamma=1, beta=0, mean=0, var=1) in eval mode, folded.
    gamma = jnp.ones((c,), F32)
    beta = jnp.zeros((c,), F32)
    mean = jnp.zeros((c,), F32)
    var = jnp.ones((c,), F32)
    scale = gamma / jnp.sqrt(var + eps)
    return w * scale[None, :], (b - mean[None, :]) * scale[None, :] + beta[None, :]


def init_wcompute(key, in_feat, nf=96, ratio=(2, 2, 1, 1)):
    dims = [in_feat, nf * ratio[0], nf * ratio[1], nf * ratio[2], nf * ratio[3], 1]
    keys = jax.random.split(key, 5)
    layers = []
    for i in range(5):
        w, b = _init_affine(keys[i], dims[i], dims[i + 1])
        if i < 4:                                   # BatchNorm2d after first 4 convs
            w, b = _fold_bn(w, b, dims[i + 1])
        layers.append((w, b))
    return layers


def init_gconv(key, in_feat, out_feat, bn=True):
    w, b = _init_affine(key, 2 * in_feat, out_feat)   # J=2 operators -> 2*in features
    if bn:
        w, b = _fold_bn(w, b, out_feat)
    return (w, b)


def init_gnn_nl(key, input_features, n_way, nf=96, num_layers=2):
    keys = jax.random.split(key, 2 * num_layers + 2)
    params = {"w": [], "l": []}
    for i in range(num_layers):
        in_f = input_features + (nf // 2) * i
        params["w"].append(init_wcompute(keys[2 * i], in_f, nf))
        params["l"].append(init_gconv(keys[2 * i + 1], in_f, nf // 2, bn=True))
    in_last = input_features + (nf // 2) * num_layers
    params["w_last"] = init_wcompute(keys[-2], in_last, nf)
    params["l_last"] = init_gconv(keys[-1], in_last, n_way, bn=False)
    return params


# --------------------------- forward (glue) -----------------------------------

def amgnn_forward(inputs, params):
    z_c, z, zi_c, zi_s, labels_yi, oracles_yi, adj = inputs
    del oracles_yi                                                  # unused in forward
    zero_pad = jnp.zeros_like(labels_yi[0])
    labels = [zero_pad] + list(labels_yi)
    zi_s_all = [z] + list(zi_s)
    zi_c_all = [z_c] + list(zi_c)
    # torch.squeeze on (B,1,z); axis=1 matches it for B>1 and guards B==1.
    zi_s_all = [jnp.squeeze(a, axis=1) for a in zi_s_all]
    zi_cat = [jnp.concatenate([zc, zs], axis=1) for zs, zc in zip(zi_s_all, zi_c_all)]
    nodes = [jnp.concatenate([lab, f], axis=1) for f, lab in zip(zi_cat, labels)]
    nodes = jnp.stack(nodes, axis=1)                                # (B, N, n_way+feat)
    logits = gnn_nl_forward(nodes, adj, params)                     # (B, n_way)
    if logits.shape[-1] == 1:                                       # torch .squeeze(-1)
        logits = logits[..., 0]
    outputs = jax.nn.sigmoid(logits)
    return outputs, logits


# --------------------------- demo ---------------------------------------------

if __name__ == "__main__":
    key = jax.random.PRNGKey(0)
    B, n_way, shots = 2, 4, 1
    z_dim, c_dim = 20, 12
    feature_num = z_dim + c_dim          # args.feature_num (= emb_size)
    num_support = n_way * shots
    N = num_support + 1                  # query node + supports

    keys = jax.random.split(key, 4 + 3 * num_support)
    z_c = jax.random.normal(keys[0], (B, c_dim), F32)
    z = jax.random.normal(keys[1], (B, 1, z_dim), F32)
    zi_c, zi_s, labels_yi = [], [], []
    for i in range(num_support):
        zi_c.append(jax.random.normal(keys[2 + 3 * i], (B, c_dim), F32))
        zi_s.append(jax.random.normal(keys[3 + 3 * i], (B, 1, z_dim), F32))
        labels_yi.append(jax.nn.one_hot(jnp.full((B,), i % n_way), n_way, dtype=F32))
    oracles_yi = labels_yi
    adj = jnp.tile(jnp.eye(N, dtype=F32)[None], (B, 1, 1))          # W_id role

    params = init_gnn_nl(jax.random.PRNGKey(42), feature_num + n_way, n_way, nf=96)

    outputs, logits = amgnn_forward(
        [z_c, z, zi_c, zi_s, labels_yi, oracles_yi, adj], params)
    jax.block_until_ready((outputs, logits))
    assert outputs.shape == (B, n_way) and logits.shape == (B, n_way)
    print("KERNEL_OK")
</pallas_src>

<mosaic_0001>
module attributes {stable_mosaic.version = 11 : i64} {
  func.func @kernel(%arg0: i32, %arg1: memref<10x36xbf16, #tpu.memory_space<vmem>>, %arg2: memref<50x10xbf16, #tpu.memory_space<vmem>>, %arg3: memref<10x10xbf16, #tpu.memory_space<vmem>>, %arg4: memref<10x10xbf16, #tpu.memory_space<vmem>>, %arg5: memref<2x10xbf16, #tpu.memory_space<vmem>>, %arg6: memref<10x10xf32, #tpu.memory_space<vmem>>, %arg7: memref<2x10xf32, #tpu.memory_space<vmem>>, %arg8: memref<10x50xf32, #tpu.memory_space<vmem>>, %arg9: memref<50x10xf32, #tpu.memory_space<vmem>>, %arg10: memref<2x10xf32, #tpu.memory_space<vmem>>, %arg11: memref<10x10xf32, #tpu.memory_space<vmem>>, %arg12: memref<3x192x192xbf16, #tpu.memory_space<vmem>>, %arg13: memref<3x192x96xbf16, #tpu.memory_space<vmem>>, %arg14: memref<3x96x96xbf16, #tpu.memory_space<vmem>>, %arg15: memref<3x1x96xf32, #tpu.memory_space<vmem>>, %arg16: memref<3x1x192xf32, #tpu.memory_space<vmem>>, %arg17: memref<3x1x192xf32, #tpu.memory_space<vmem>>, %arg18: memref<3x1x96xf32, #tpu.memory_space<vmem>>, %arg19: memref<3x1x96xf32, #tpu.memory_space<vmem>>, %arg20: memref<3x1x1xf32, #tpu.memory_space<vmem>>, %arg21: memref<3x1x48xf32, #tpu.memory_space<vmem>>, %arg22: memref<3x36x192xbf16, #tpu.memory_space<vmem>>, %arg23: memref<2x48x192xbf16, #tpu.memory_space<vmem>>, %arg24: memref<1x48x192xbf16, #tpu.memory_space<vmem>>, %arg25: memref<3x36x48xbf16, #tpu.memory_space<vmem>>, %arg26: memref<2x48x48xbf16, #tpu.memory_space<vmem>>, %arg27: memref<1x48x48xbf16, #tpu.memory_space<vmem>>, %arg28: memref<3x36x48xbf16, #tpu.memory_space<vmem>>, %arg29: memref<2x48x48xbf16, #tpu.memory_space<vmem>>, %arg30: memref<1x48x48xbf16, #tpu.memory_space<vmem>>, %arg31: memref<2x4xf32, #tpu.memory_space<vmem>>) attributes {dimension_semantics = [#tpu.dimension_semantics<arbitrary>], iteration_bounds = array<i64: 1>, scalar_prefetch = 0 : i64, scratch_operands = 0 : i64, tpu.core_type = #tpu.core_type<tc>, window_params = [{pipeline_mode = #tpu.pipeline_mode<synchronous>, transform_indices = @transform_0, window_bounds = array<i64: 10, 36>}, {pipeline_mode = #tpu.pipeline_mode<synchronous>, transform_indices = @transform_1, window_bounds = array<i64: 50, 10>}, {pipeline_mode = #tpu.pipeline_mode<synchronous>, transform_indices = @transform_2, window_bounds = array<i64: 10, 10>}, {pipeline_mode = #tpu.pipeline_mode<synchronous>, transform_indices = @transform_3, window_bounds = array<i64: 10, 10>}, {pipeline_mode = #tpu.pipeline_mode<synchronous>, transform_indices = @transform_4, window_bounds = array<i64: 2, 10>}, {pipeline_mode = #tpu.pipeline_mode<synchronous>, transform_indices = @transform_5, window_bounds = array<i64: 10, 10>}, {pipeline_mode = #tpu.pipeline_mode<synchronous>, transform_indices = @transform_6, window_bounds = array<i64: 2, 10>}, {pipeline_mode = #tpu.pipeline_mode<synchronous>, transform_indices = @transform_7, window_bounds = array<i64: 10, 50>}, {pipeline_mode = #tpu.pipeline_mode<synchronous>, transform_indices = @transform_8, window_bounds = array<i64: 50, 10>}, {pipeline_mode = #tpu.pipeline_mode<synchronous>, transform_indices = @transform_9, window_bounds = array<i64: 2, 10>}, {pipeline_mode = #tpu.pipeline_mode<synchronous>, transform_indices = @transform_10, window_bounds = array<i64: 10, 10>}, {pipeline_mode = #tpu.pipeline_mode<synchronous>, transform_indices = @transform_11, window_bounds = array<i64: 3, 192, 192>}, {pipeline_mode = #tpu.pipeline_mode<synchronous>, transform_indices = @transform_12, window_bounds = array<i64: 3, 192, 96>}, {pipeline_mode = #tpu.pipeline_mode<synchronous>, transform_indices = @transform_13, window_bounds = array<i64: 3, 96, 96>}, {pipeline_mode = #tpu.pipeline_mode<synchronous>, transform_indices = @transform_14, window_bounds = array<i64: 3, 1, 96>}, {pipeline_mode = #tpu.pipeline_mode<synchronous>, transform_indices = @transform_15, window_bounds = array<i64: 3, 1, 192>}, {pipeline_mode = #tpu.pipeline_mode<synchronous>, transform_indices = @transform_16, window_bounds = array<i64: 3, 1, 192>}, {pipeline_mode = #tpu.pipeline_mode<synchronous>, transform_indices = @transform_17, window_bounds = array<i64: 3, 1, 96>}, {pipeline_mode = #tpu.pipeline_mode<synchronous>, transform_indices = @transform_18, window_bounds = array<i64: 3, 1, 96>}, {pipeline_mode = #tpu.pipeline_mode<synchronous>, transform_indices = @transform_19, window_bounds = array<i64: 3, 1, 1>}, {pipeline_mode = #tpu.pipeline_mode<synchronous>, transform_indices = @transform_20, window_bounds = array<i64: 3, 1, 48>}, {pipeline_mode = #tpu.pipeline_mode<synchronous>, transform_indices = @transform_21, window_bounds = array<i64: 3, 36, 192>}, {pipeline_mode = #tpu.pipeline_mode<synchronous>, transform_indices = @transform_22, window_bounds = array<i64: 2, 48, 192>}, {pipeline_mode = #tpu.pipeline_mode<synchronous>, transform_indices = @transform_23, window_bounds = array<i64: 1, 48, 192>}, {pipeline_mode = #tpu.pipeline_mode<synchronous>, transform_indices = @transform_24, window_bounds = array<i64: 3, 36, 48>}, {pipeline_mode = #tpu.pipeline_mode<synchronous>, transform_indices = @transform_25, window_bounds = array<i64: 2, 48, 48>}, {pipeline_mode = #tpu.pipeline_mode<synchronous>, transform_indices = @transform_26, window_bounds = array<i64: 1, 48, 48>}, {pipeline_mode = #tpu.pipeline_mode<synchronous>, transform_indices = @transform_27, window_bounds = array<i64: 3, 36, 48>}, {pipeline_mode = #tpu.pipeline_mode<synchronous>, transform_indices = @transform_28, window_bounds = array<i64: 2, 48, 48>}, {pipeline_mode = #tpu.pipeline_mode<synchronous>, transform_indices = @transform_29, window_bounds = array<i64: 1, 48, 48>}, {pipeline_mode = #tpu.pipeline_mode<synchronous>, transform_indices = @transform_30, window_bounds = array<i64: 2, 4>}]} {
    %c0 = arith.constant 0 : index
    %c0_0 = arith.constant 0 : index
    %0 = vector.load %arg2[%c0, %c0_0] : memref<50x10xbf16, #tpu.memory_space<vmem>>, vector<50x10xbf16>
    %c0_1 = arith.constant 0 : index
    %c0_2 = arith.constant 0 : index
    %1 = vector.load %arg4[%c0_1, %c0_2] : memref<10x10xbf16, #tpu.memory_space<vmem>>, vector<10x10xbf16>
    %c0_3 = arith.constant 0 : index
    %c0_4 = arith.constant 0 : index
    %2 = vector.load %arg6[%c0_3, %c0_4] : memref<10x10xf32, #tpu.memory_space<vmem>>, vector<10x10xf32>
    %cst = arith.constant 1.000000e+08 : f32
    %3 = vector.broadcast %cst : f32 to vector<10x10xf32>
    %4 = arith.mulf %2, %3 : vector<10x10xf32>
    %c0_5 = arith.constant 0 : index
    %c0_6 = arith.constant 0 : index
    %5 = vector.load %arg8[%c0_5, %c0_6] : memref<10x50xf32, #tpu.memory_space<vmem>>, vector<10x50xf32>
    %c0_7 = arith.constant 0 : index
    %c0_8 = arith.constant 0 : index
    %6 = vector.load %arg9[%c0_7, %c0_8] : memref<50x10xf32, #tpu.memory_space<vmem>>, vector<50x10xf32>
    %c0_9 = arith.constant 0 : index
    %c0_10 = arith.constant 0 : index
    %7 = vector.load %arg1[%c0_9, %c0_10] : memref<10x36xbf16, #tpu.memory_space<vmem>>, vector<10x36xbf16>
    %cst_11 = arith.constant dense<0.000000e+00> : vector<50x36xf32>
    %8 = tpu.matmul %0, %7, %cst_11 {dimension_numbers = #tpu.dot_dimension_numbers<[1], [0], [0], [1], [0, 0, 1, 1], [], []>} : vector<50x10xbf16>, vector<10x36xbf16>, vector<50x36xf32> -> vector<50x36xf32>
    %9 = math.absf %8 : vector<50x36xf32>
    %10 = arith.truncf %9 : vector<50x36xf32> to vector<50x36xbf16>
    %cst_12 = arith.constant dense<0.000000e+00> : vector<10x36xf32>
    %11 = tpu.matmul %1, %7, %cst_12 {dimension_numbers = #tpu.dot_dimension_numbers<[1], [0], [0], [1], [0, 0, 1, 1], [], []>} : vector<10x10xbf16>, vector<10x36xbf16>, vector<10x36xf32> -> vector<10x36xf32>
    %12 = arith.truncf %11 : vector<10x36xf32> to vector<10x36xbf16>
    %c0_13 = arith.constant 0 : index
    %c0_14 = arith.constant 0 : index
    %c0_15 = arith.constant 0 : index
    %13 = vector.load %arg16[%c0_13, %c0_14, %c0_15] : memref<3x1x192xf32, #tpu.memory_space<vmem>>, vector<1x1x192xf32>
    %14 = vector.shape_cast %13 : vector<1x1x192xf32> to vector<1x192xf32>
    %c0_16 = arith.constant 0 : index
    %c0_17 = arith.constant 0 : index
    %c0_18 = arith.constant 0 : index
    %15 = vector.load %arg22[%c0_16, %c0_17, %c0_18] : memref<3x36x192xbf16, #tpu.memory_space<vmem>>, vector<1x36x192xbf16>
    %16 = vector.shape_cast %15 : vector<1x36x192xbf16> to vector<36x192xbf16>
    %cst_19 = arith.constant dense<0.000000e+00> : vector<50x192xf32>
    %17 = tpu.matmul %10, %16, %cst_19 {dimension_numbers = #tpu.dot_dimension_numbers<[1], [0], [0], [1], [0, 0, 1, 1], [], []>} : vector<50x36xbf16>, vector<36x192xbf16>, vector<50x192xf32> -> vector<50x192xf32>
    %18 = vector.broadcast %14 : vector<1x192xf32> to vector<50x192xf32>
    %19 = arith.addf %18, %17 : vector<50x192xf32>
    %cst_20 = arith.constant 0.000000e+00 : f32
    %20 = vector.broadcast %cst_20 : f32 to vector<50x192xf32>
    %21 = arith.cmpf oge, %19, %20 : vector<50x192xf32>
    %cst_21 = arith.constant 0.00999999977 : f32
    %22 = vector.broadcast %cst_21 : f32 to vector<50x192xf32>
    %23 = arith.mulf %22, %19 : vector<50x192xf32>
    %24 = arith.select %21, %19, %23 : vector<50x192xi1>, vector<50x192xf32>
    %25 = arith.truncf %24 : vector<50x192xf32> to vector<50x192xbf16>
    %c0_22 = arith.constant 0 : index
    %c0_23 = arith.constant 0 : index
    %c0_24 = arith.constant 0 : index
    %26 = vector.load %arg12[%c0_22, %c0_23, %c0_24] : memref<3x192x192xbf16, #tpu.memory_space<vmem>>, vector<1x192x192xbf16>
    %27 = vector.shape_cast %26 : vector<1x192x192xbf16> to vector<192x192xbf16>
    %cst_25 = arith.constant dense<0.000000e+00> : vector<50x192xf32>
    %28 = tpu.matmul %25, %27, %cst_25 {dimension_numbers = #tpu.dot_dimension_numbers<[1], [0], [0], [1], [0, 0, 1, 1], [], []>} : vector<50x192xbf16>, vector<192x192xbf16>, vector<50x192xf32> -> vector<50x192xf32>
    %c0_26 = arith.constant 0 : index
    %c0_27 = arith.constant 0 : index
    %c0_28 = arith.constant 0 : index
    %29 = vector.load %arg17[%c0_26, %c0_27, %c0_28] : memref<3x1x192xf32, #tpu.memory_space<vmem>>, vector<1x1x192xf32>
    %30 = vector.shape_cast %29 : vector<1x1x192xf32> to vector<1x192xf32>
    %31 = vector.broadcast %30 : vector<1x192xf32> to vector<50x192xf32>
    %32 = arith.addf %28, %31 : vector<50x192xf32>
    %cst_29 = arith.constant 0.000000e+00 : f32
    %33 = vector.broadcast %cst_29 : f32 to vector<50x192xf32>
    %34 = arith.cmpf oge, %32, %33 : vector<50x192xf32>
    %cst_30 = arith.constant 0.00999999977 : f32
    %35 = vector.broadcast %cst_30 : f32 to vector<50x192xf32>
    %36 = arith.mulf %35, %32 : vector<50x192xf32>
    %37 = arith.select %34, %32, %36 : vector<50x192xi1>, vector<50x192xf32>
    %38 = arith.truncf %37 : vector<50x192xf32> to vector<50x192xbf16>
    %c0_31 = arith.constant 0 : index
    %c0_32 = arith.constant 0 : index
    %c0_33 = arith.constant 0 : index
    %39 = vector.load %arg13[%c0_31, %c0_32, %c0_33] : memref<3x192x96xbf16, #tpu.memory_space<vmem>>, vector<1x192x96xbf16>
    %40 = vector.shape_cast %39 : vector<1x192x96xbf16> to vector<192x96xbf16>
    %cst_34 = arith.constant dense<0.000000e+00> : vector<50x96xf32>
    %41 = tpu.matmul %38, %40, %cst_34 {dimension_numbers = #tpu.dot_dimension_numbers<[1], [0], [0], [1], [0, 0, 1, 1], [], []>} : vector<50x192xbf16>, vector<192x96xbf16>, vector<50x96xf32> -> vector<50x96xf32>
    %c0_35 = arith.constant 0 : index
    %c0_36 = arith.constant 0 : index
    %c0_37 = arith.constant 0 : index
    %42 = vector.load %arg18[%c0_35, %c0_36, %c0_37] : memref<3x1x96xf32, #tpu.memory_space<vmem>>, vector<1x1x96xf32>
    %43 = vector.shape_cast %42 : vector<1x1x96xf32> to vector<1x96xf32>
    %44 = vector.broadcast %43 : vector<1x96xf32> to vector<50x96xf32>
    %45 = arith.addf %41, %44 : vector<50x96xf32>
    %cst_38 = arith.constant 0.000000e+00 : f32
    %46 = vector.broadcast %cst_38 : f32 to vector<50x96xf32>
    %47 = arith.cmpf oge, %45, %46 : vector<50x96xf32>
    %cst_39 = arith.constant 0.00999999977 : f32
    %48 = vector.broadcast %cst_39 : f32 to vector<50x96xf32>
    %49 = arith.mulf %48, %45 : vector<50x96xf32>
    %50 = arith.select %47, %45, %49 : vector<50x96xi1>, vector<50x96xf32>
    %51 = arith.truncf %50 : vector<50x96xf32> to vector<50x96xbf16>
    %c0_40 = arith.constant 0 : index
    %c0_41 = arith.constant 0 : index
    %c0_42 = arith.constant 0 : index
    %52 = vector.load %arg14[%c0_40, %c0_41, %c0_42] : memref<3x96x96xbf16, #tpu.memory_space<vmem>>, vector<1x96x96xbf16>
    %53 = vector.shape_cast %52 : vector<1x96x96xbf16> to vector<96x96xbf16>
    %cst_43 = arith.constant dense<0.000000e+00> : vector<50x96xf32>
    %54 = tpu.matmul %51, %53, %cst_43 {dimension_numbers = #tpu.dot_dimension_numbers<[1], [0], [0], [1], [0, 0, 1, 1], [], []>} : vector<50x96xbf16>, vector<96x96xbf16>, vector<50x96xf32> -> vector<50x96xf32>
    %c0_44 = arith.constant 0 : index
    %c0_45 = arith.constant 0 : index
    %c0_46 = arith.constant 0 : index
    %55 = vector.load %arg19[%c0_44, %c0_45, %c0_46] : memref<3x1x96xf32, #tpu.memory_space<vmem>>, vector<1x1x96xf32>
    %56 = vector.shape_cast %55 : vector<1x1x96xf32> to vector<1x96xf32>
    %57 = vector.broadcast %56 : vector<1x96xf32> to vector<50x96xf32>
    %58 = arith.addf %54, %57 : vector<50x96xf32>
    %cst_47 = arith.constant 0.000000e+00 : f32
    %59 = vector.broadcast %cst_47 : f32 to vector<50x96xf32>
    %60 = arith.cmpf oge, %58, %59 : vector<50x96xf32>
    %cst_48 = arith.constant 0.00999999977 : f32
    %61 = vector.broadcast %cst_48 : f32 to vector<50x96xf32>
    %62 = arith.mulf %61, %58 : vector<50x96xf32>
    %63 = arith.select %60, %58, %62 : vector<50x96xi1>, vector<50x96xf32>
    %c0_49 = arith.constant 0 : index
    %c0_50 = arith.constant 0 : index
    %c0_51 = arith.constant 0 : index
    %64 = vector.load %arg15[%c0_49, %c0_50, %c0_51] : memref<3x1x96xf32, #tpu.memory_space<vmem>>, vector<1x1x96xf32>
    %65 = vector.shape_cast %64 : vector<1x1x96xf32> to vector<1x96xf32>
    %66 = vector.broadcast %65 : vector<1x96xf32> to vector<50x96xf32>
    %67 = arith.mulf %63, %66 : vector<50x96xf32>
    %cst_52 = arith.constant dense<0.000000e+00> : vector<50xf32>
    %68 = vector.multi_reduction <add>, %67, %cst_52 [1] : vector<50x96xf32> to vector<50xf32>
    %69 = vector.shape_cast %68 : vector<50xf32> to vector<50x1xf32>
    %c0_53 = arith.constant 0 : index
    %c0_54 = arith.constant 0 : index
    %c0_55 = arith.constant 0 : index
    %70 = vector.load %arg20[%c0_53, %c0_54, %c0_55] : memref<3x1x1xf32, #tpu.memory_space<vmem>>, vector<1x1x1xf32>
    %71 = vector.shape_cast %70 : vector<1x1x1xf32> to vector<1x1xf32>
    %72 = vector.broadcast %71 : vector<1x1xf32> to vector<50x1xf32>
    %73 = arith.addf %69, %72 : vector<50x1xf32>
    %74 = vector.broadcast %73 : vector<50x1xf32> to vector<50x10xf32>
    %75 = arith.mulf %74, %6 : vector<50x10xf32>
    %cst_56 = arith.constant dense<0.000000e+00> : vector<10x10xf32>
    %76 = tpu.matmul %5, %75, %cst_56 {dimension_numbers = #tpu.dot_dimension_numbers<[1], [0], [0], [1], [0, 0, 1, 1], [], []>} : vector<10x50xf32>, vector<50x10xf32>, vector<10x10xf32> -> vector<10x10xf32>
    %77 = arith.subf %76, %4 : vector<10x10xf32>
    %cst_57 = arith.constant dense<0xFF800000> : vector<10xf32>
    %78 = vector.multi_reduction <maximumf>, %77, %cst_57 [1] : vector<10x10xf32> to vector<10xf32>
    %79 = vector.shape_cast %78 : vector<10xf32> to vector<10x1xf32>
    %80 = vector.broadcast %79 : vector<10x1xf32> to vector<10x10xf32>
    %81 = arith.subf %77, %80 : vector<10x10xf32>
    %82 = math.exp %81 : vector<10x10xf32>
    %cst_58 = arith.constant dense<0.000000e+00> : vector<10xf32>
    %83 = vector.multi_reduction <add>, %82, %cst_58 [1] : vector<10x10xf32> to vector<10xf32>
    %84 = vector.shape_cast %83 : vector<10xf32> to vector<10x1xf32>
    %85 = tpu.reciprocal %84 {approx = true} : vector<10x1xf32> -> vector<10x1xf32>
    %86 = vector.broadcast %85 : vector<10x1xf32> to vector<10x10xf32>
    %87 = arith.mulf %82, %86 : vector<10x10xf32>
    %88 = arith.truncf %87 : vector<10x10xf32> to vector<10x10xbf16>
    %c0_59 = arith.constant 0 : index
    %c0_60 = arith.constant 0 : index
    %c0_61 = arith.constant 0 : index
    %89 = vector.load %arg21[%c0_59, %c0_60, %c0_61] : memref<3x1x48xf32, #tpu.memory_space<vmem>>, vector<1x1x48xf32>
    %90 = vector.shape_cast %89 : vector<1x1x48xf32> to vector<1x48xf32>
    %cst_62 = arith.constant dense<0.000000e+00> : vector<10x36xf32>
    %91 = tpu.matmul %88, %7, %cst_62 {dimension_numbers = #tpu.dot_dimension_numbers<[1], [0], [0], [1], [0, 0, 1, 1], [], []>} : vector<10x10xbf16>, vector<10x36xbf16>, vector<10x36xf32> -> vector<10x36xf32>
    %92 = arith.truncf %91 : vector<10x36xf32> to vector<10x36xbf16>
    %c0_63 = arith.constant 0 : index
    %c0_64 = arith.constant 0 : index
    %c0_65 = arith.constant 0 : index
    %93 = vector.load %arg25[%c0_63, %c0_64, %c0_65] : memref<3x36x48xbf16, #tpu.memory_space<vmem>>, vector<1x36x48xbf16>
    %94 = vector.shape_cast %93 : vector<1x36x48xbf16> to vector<36x48xbf16>
    %cst_66 = arith.constant dense<0.000000e+00> : vector<10x48xf32>
    %95 = tpu.matmul %12, %94, %cst_66 {dimension_numbers = #tpu.dot_dimension_numbers<[1], [0], [0], [1], [0, 0, 1, 1], [], []>} : vector<10x36xbf16>, vector<36x48xbf16>, vector<10x48xf32> -> vector<10x48xf32>
    %96 = vector.broadcast %90 : vector<1x48xf32> to vector<10x48xf32>
    %97 = arith.addf %96, %95 : vector<10x48xf32>
    %c0_67 = arith.constant 0 : index
    %c0_68 = arith.constant 0 : index
    %c0_69 = arith.constant 0 : index
    %98 = vector.load %arg28[%c0_67, %c0_68, %c0_69] : memref<3x36x48xbf16, #tpu.memory_space<vmem>>, vector<1x36x48xbf16>
    %99 = vector.shape_cast %98 : vector<1x36x48xbf16> to vector<36x48xbf16>
    %cst_70 = arith.constant dense<0.000000e+00> : vector<10x48xf32>
    %100 = tpu.matmul %92, %99, %cst_70 {dimension_numbers = #tpu.dot_dimension_numbers<[1], [0], [0], [1], [0, 0, 1, 1], [], []>} : vector<10x36xbf16>, vector<36x48xbf16>, vector<10x48xf32> -> vector<10x48xf32>
    %101 = arith.addf %97, %100 : vector<10x48xf32>
    %cst_71 = arith.constant 0.000000e+00 : f32
    %102 = vector.broadcast %cst_71 : f32 to vector<10x48xf32>
    %103 = arith.cmpf oge, %101, %102 : vector<10x48xf32>
    %cst_72 = arith.constant 0.00999999977 : f32
    %104 = vector.broadcast %cst_72 : f32 to vector<10x48xf32>
    %105 = arith.mulf %104, %101 : vector<10x48xf32>
    %106 = arith.select %103, %101, %105 : vector<10x48xi1>, vector<10x48xf32>
    %107 = arith.truncf %106 : vector<10x48xf32> to vector<10x48xbf16>
    %cst_73 = arith.constant dense<0.000000e+00> : vector<50x48xf32>
    %108 = tpu.matmul %0, %107, %cst_73 {dimension_numbers = #tpu.dot_dimension_numbers<[1], [0], [0], [1], [0, 0, 1, 1], [], []>} : vector<50x10xbf16>, vector<10x48xbf16>, vector<50x48xf32> -> vector<50x48xf32>
    %109 = math.absf %108 : vector<50x48xf32>
    %110 = arith.truncf %109 : vector<50x48xf32> to vector<50x48xbf16>
    %cst_74 = arith.constant dense<0.000000e+00> : vector<10x48xf32>
    %111 = tpu.matmul %1, %107, %cst_74 {dimension_numbers = #tpu.dot_dimension_numbers<[1], [0], [0], [1], [0, 0, 1, 1], [], []>} : vector<10x10xbf16>, vector<10x48xbf16>, vector<10x48xf32> -> vector<10x48xf32>
    %112 = arith.truncf %111 : vector<10x48xf32> to vector<10x48xbf16>
    %c1 = arith.constant 1 : index
    %c0_75 = arith.constant 0 : index
    %c0_76 = arith.constant 0 : index
    %113 = vector.load %arg16[%c1, %c0_75, %c0_76] : memref<3x1x192xf32, #tpu.memory_space<vmem>>, vector<1x1x192xf32>
    %114 = vector.shape_cast %113 : vector<1x1x192xf32> to vector<1x192xf32>
    %c1_77 = arith.constant 1 : index
    %c0_78 = arith.constant 0 : index
    %c0_79 = arith.constant 0 : index
    %115 = vector.load %arg22[%c1_77, %c0_78, %c0_79] : memref<3x36x192xbf16, #tpu.memory_space<vmem>>, vector<1x36x192xbf16>
    %116 = vector.shape_cast %115 : vector<1x36x192xbf16> to vector<36x192xbf16>
    %cst_80 = arith.constant dense<0.000000e+00> : vector<50x192xf32>
    %117 = tpu.matmul %10, %116, %cst_80 {dimension_numbers = #tpu.dot_dimension_numbers<[1], [0], [0], [1], [0, 0, 1, 1], [], []>} : vector<50x36xbf16>, vector<36x192xbf16>, vector<50x192xf32> -> vector<50x192xf32>
    %118 = vector.broadcast %114 : vector<1x192xf32> to vector<50x192xf32>
    %119 = arith.addf %118, %117 : vector<50x192xf32>
    %c0_81 = arith.constant 0 : index
    %c0_82 = arith.constant 0 : index
    %c0_83 = arith.constant 0 : index
    %120 = vector.load %arg23[%c0_81, %c0_82, %c0_83] : memref<2x48x192xbf16, #tpu.memory_space<vmem>>, vector<1x48x192xbf16>
    %121 = vector.shape_cast %120 : vector<1x48x192xbf16> to vector<48x192xbf16>
    %cst_84 = arith.constant dense<0.000000e+00> : vector<50x192xf32>
    %122 = tpu.matmul %110, %121, %cst_84 {dimension_numbers = #tpu.dot_dimension_numbers<[1], [0], [0], [1], [0, 0, 1, 1], [], []>} : vector<50x48xbf16>, vector<48x192xbf16>, vector<50x192xf32> -> vector<50x192xf32>
    %123 = arith.addf %119, %122 : vector<50x192xf32>
    %cst_85 = arith.constant 0.000000e+00 : f32
    %124 = vector.broadcast %cst_85 : f32 to vector<50x192xf32>
    %125 = arith.cmpf oge, %123, %124 : vector<50x192xf32>
    %cst_86 = arith.constant 0.00999999977 : f32
    %126 = vector.broadcast %cst_86 : f32 to vector<50x192xf32>
    %127 = arith.mulf %126, %123 : vector<50x192xf32>
    %128 = arith.select %125, %123, %127 : vector<50x192xi1>, vector<50x192xf32>
    %129 = arith.truncf %128 : vector<50x192xf32> to vector<50x192xbf16>
    %c1_87 = arith.constant 1 : index
    %c0_88 = arith.constant 0 : index
    %c0_89 = arith.constant 0 : index
    %130 = vector.load %arg12[%c1_87, %c0_88, %c0_89] : memref<3x192x192xbf16, #tpu.memory_space<vmem>>, vector<1x192x192xbf16>
    %131 = vector.shape_cast %130 : vector<1x192x192xbf16> to vector<192x192xbf16>
    %cst_90 = arith.constant dense<0.000000e+00> : vector<50x192xf32>
    %132 = tpu.matmul %129, %131, %cst_90 {dimension_numbers = #tpu.dot_dimension_numbers<[1], [0], [0], [1], [0, 0, 1, 1], [], []>} : vector<50x192xbf16>, vector<192x192xbf16>, vector<50x192xf32> -> vector<50x192xf32>
    %c1_91 = arith.constant 1 : index
    %c0_92 = arith.constant 0 : index
    %c0_93 = arith.constant 0 : index
    %133 = vector.load %arg17[%c1_91, %c0_92, %c0_93] : memref<3x1x192xf32, #tpu.memory_space<vmem>>, vector<1x1x192xf32>
    %134 = vector.shape_cast %133 : vector<1x1x192xf32> to vector<1x192xf32>
    %135 = vector.broadcast %134 : vector<1x192xf32> to vector<50x192xf32>
    %136 = arith.addf %132, %135 : vector<50x192xf32>
    %cst_94 = arith.constant 0.000000e+00 : f32
    %137 = vector.broadcast %cst_94 : f32 to vector<50x192xf32>
    %138 = arith.cmpf oge, %136, %137 : vector<50x192xf32>
    %cst_95 = arith.constant 0.00999999977 : f32
    %139 = vector.broadcast %cst_95 : f32 to vector<50x192xf32>
    %140 = arith.mulf %139, %136 : vector<50x192xf32>
    %141 = arith.select %138, %136, %140 : vector<50x192xi1>, vector<50x192xf32>
    %142 = arith.truncf %141 : vector<50x192xf32> to vector<50x192xbf16>
    %c1_96 = arith.constant 1 : index
    %c0_97 = arith.constant 0 : index
    %c0_98 = arith.constant 0 : index
    %143 = vector.load %arg13[%c1_96, %c0_97, %c0_98] : memref<3x192x96xbf16, #tpu.memory_space<vmem>>, vector<1x192x96xbf16>
    %144 = vector.shape_cast %143 : vector<1x192x96xbf16> to vector<192x96xbf16>
    %cst_99 = arith.constant dense<0.000000e+00> : vector<50x96xf32>
    %145 = tpu.matmul %142, %144, %cst_99 {dimension_numbers = #tpu.dot_dimension_numbers<[1], [0], [0], [1], [0, 0, 1, 1], [], []>} : vector<50x192xbf16>, vector<192x96xbf16>, vector<50x96xf32> -> vector<50x96xf32>
    %c1_100 = arith.constant 1 : index
    %c0_101 = arith.constant 0 : index
    %c0_102 = arith.constant 0 : index
    %146 = vector.load %arg18[%c1_100, %c0_101, %c0_102] : memref<3x1x96xf32, #tpu.memory_space<vmem>>, vector<1x1x96xf32>
    %147 = vector.shape_cast %146 : vector<1x1x96xf32> to vector<1x96xf32>
    %148 = vector.broadcast %147 : vector<1x96xf32> to vector<50x96xf32>
    %149 = arith.addf %145, %148 : vector<50x96xf32>
    %cst_103 = arith.constant 0.000000e+00 : f32
    %150 = vector.broadcast %cst_103 : f32 to vector<50x96xf32>
    %151 = arith.cmpf oge, %149, %150 : vector<50x96xf32>
    %cst_104 = arith.constant 0.00999999977 : f32
    %152 = vector.broadcast %cst_104 : f32 to vector<50x96xf32>
    %153 = arith.mulf %152, %149 : vector<50x96xf32>
    %154 = arith.select %151, %149, %153 : vector<50x96xi1>, vector<50x96xf32>
    %155 = arith.truncf %154 : vector<50x96xf32> to vector<50x96xbf16>
    %c1_105 = arith.constant 1 : index
    %c0_106 = arith.constant 0 : index
    %c0_107 = arith.constant 0 : index
    %156 = vector.load %arg14[%c1_105, %c0_106, %c0_107] : memref<3x96x96xbf16, #tpu.memory_space<vmem>>, vector<1x96x96xbf16>
    %157 = vector.shape_cast %156 : vector<1x96x96xbf16> to vector<96x96xbf16>
    %cst_108 = arith.constant dense<0.000000e+00> : vector<50x96xf32>
    %158 = tpu.matmul %155, %157, %cst_108 {dimension_numbers = #tpu.dot_dimension_numbers<[1], [0], [0], [1], [0, 0, 1, 1], [], []>} : vector<50x96xbf16>, vector<96x96xbf16>, vector<50x96xf32> -> vector<50x96xf32>
    %c1_109 = arith.constant 1 : index
    %c0_110 = arith.constant 0 : index
    %c0_111 = arith.constant 0 : index
    %159 = vector.load %arg19[%c1_109, %c0_110, %c0_111] : memref<3x1x96xf32, #tpu.memory_space<vmem>>, vector<1x1x96xf32>
    %160 = vector.shape_cast %159 : vector<1x1x96xf32> to vector<1x96xf32>
    %161 = vector.broadcast %160 : vector<1x96xf32> to vector<50x96xf32>
    %162 = arith.addf %158, %161 : vector<50x96xf32>
    %cst_112 = arith.constant 0.000000e+00 : f32
    %163 = vector.broadcast %cst_112 : f32 to vector<50x96xf32>
    %164 = arith.cmpf oge, %162, %163 : vector<50x96xf32>
    %cst_113 = arith.constant 0.00999999977 : f32
    %165 = vector.broadcast %cst_113 : f32 to vector<50x96xf32>
    %166 = arith.mulf %165, %162 : vector<50x96xf32>
    %167 = arith.select %164, %162, %166 : vector<50x96xi1>, vector<50x96xf32>
    %c1_114 = arith.constant 1 : index
    %c0_115 = arith.constant 0 : index
    %c0_116 = arith.constant 0 : index
    %168 = vector.load %arg15[%c1_114, %c0_115, %c0_116] : memref<3x1x96xf32, #tpu.memory_space<vmem>>, vector<1x1x96xf32>
    %169 = vector.shape_cast %168 : vector<1x1x96xf32> to vector<1x96xf32>
    %170 = vector.broadcast %169 : vector<1x96xf32> to vector<50x96xf32>
    %171 = arith.mulf %167, %170 : vector<50x96xf32>
    %cst_117 = arith.constant dense<0.000000e+00> : vector<50xf32>
    %172 = vector.multi_reduction <add>, %171, %cst_117 [1] : vector<50x96xf32> to vector<50xf32>
    %173 = vector.shape_cast %172 : vector<50xf32> to vector<50x1xf32>
    %c1_118 = arith.constant 1 : index
    %c0_119 = arith.constant 0 : index
    %c0_120 = arith.constant 0 : index
    %174 = vector.load %arg20[%c1_118, %c0_119, %c0_120] : memref<3x1x1xf32, #tpu.memory_space<vmem>>, vector<1x1x1xf32>
    %175 = vector.shape_cast %174 : vector<1x1x1xf32> to vector<1x1xf32>
    %176 = vector.broadcast %175 : vector<1x1xf32> to vector<50x1xf32>
    %177 = arith.addf %173, %176 : vector<50x1xf32>
    %178 = vector.broadcast %177 : vector<50x1xf32> to vector<50x10xf32>
    %179 = arith.mulf %178, %6 : vector<50x10xf32>
    %cst_121 = arith.constant dense<0.000000e+00> : vector<10x10xf32>
    %180 = tpu.matmul %5, %179, %cst_121 {dimension_numbers = #tpu.dot_dimension_numbers<[1], [0], [0], [1], [0, 0, 1, 1], [], []>} : vector<10x50xf32>, vector<50x10xf32>, vector<10x10xf32> -> vector<10x10xf32>
    %181 = arith.subf %180, %4 : vector<10x10xf32>
    %cst_122 = arith.constant dense<0xFF800000> : vector<10xf32>
    %182 = vector.multi_reduction <maximumf>, %181, %cst_122 [1] : vector<10x10xf32> to vector<10xf32>
    %183 = vector.shape_cast %182 : vector<10xf32> to vector<10x1xf32>
    %184 = vector.broadcast %183 : vector<10x1xf32> to vector<10x10xf32>
    %185 = arith.subf %181, %184 : vector<10x10xf32>
    %186 = math.exp %185 : vector<10x10xf32>
    %cst_123 = arith.constant dense<0.000000e+00> : vector<10xf32>
    %187 = vector.multi_reduction <add>, %186, %cst_123 [1] : vector<10x10xf32> to vector<10xf32>
    %188 = vector.shape_cast %187 : vector<10xf32> to vector<10x1xf32>
    %189 = tpu.reciprocal %188 {approx = true} : vector<10x1xf32> -> vector<10x1xf32>
    %190 = vector.broadcast %189 : vector<10x1xf32> to vector<10x10xf32>
    %191 = arith.mulf %186, %190 : vector<10x10xf32>
    %192 = arith.truncf %191 : vector<10x10xf32> to vector<10x10xbf16>
    %c1_124 = arith.constant 1 : index
    %c0_125 = arith.constant 0 : index
    %c0_126 = arith.constant 0 : index
    %193 = vector.load %arg21[%c1_124, %c0_125, %c0_126] : memref<3x1x48xf32, #tpu.memory_space<vmem>>, vector<1x1x48xf32>
    %194 = vector.shape_cast %193 : vector<1x1x48xf32> to vector<1x48xf32>
    %cst_127 = arith.constant dense<0.000000e+00> : vector<10x36xf32>
    %195 = tpu.matmul %192, %7, %cst_127 {dimension_numbers = #tpu.dot_dimension_numbers<[1], [0], [0], [1], [0, 0, 1, 1], [], []>} : vector<10x10xbf16>, vector<10x36xbf16>, vector<10x36xf32> -> vector<10x36xf32>
    %196 = arith.truncf %195 : vector<10x36xf32> to vector<10x36xbf16>
    %c1_128 = arith.constant 1 : index
    %c0_129 = arith.constant 0 : index
    %c0_130 = arith.constant 0 : index
    %197 = vector.load %arg25[%c1_128, %c0_129, %c0_130] : memref<3x36x48xbf16, #tpu.memory_space<vmem>>, vector<1x36x48xbf16>
    %198 = vector.shape_cast %197 : vector<1x36x48xbf16> to vector<36x48xbf16>
    %cst_131 = arith.constant dense<0.000000e+00> : vector<10x48xf32>
    %199 = tpu.matmul %12, %198, %cst_131 {dimension_numbers = #tpu.dot_dimension_numbers<[1], [0], [0], [1], [0, 0, 1, 1], [], []>} : vector<10x36xbf16>, vector<36x48xbf16>, vector<10x48xf32> -> vector<10x48xf32>
    %200 = vector.broadcast %194 : vector<1x48xf32> to vector<10x48xf32>
    %201 = arith.addf %200, %199 : vector<10x48xf32>
    %c1_132 = arith.constant 1 : index
    %c0_133 = arith.constant 0 : index
    %c0_134 = arith.constant 0 : index
    %202 = vector.load %arg28[%c1_132, %c0_133, %c0_134] : memref<3x36x48xbf16, #tpu.memory_space<vmem>>, vector<1x36x48xbf16>
    %203 = vector.shape_cast %202 : vector<1x36x48xbf16> to vector<36x48xbf16>
    %cst_135 = arith.constant dense<0.000000e+00> : vector<10x48xf32>
    %204 = tpu.matmul %196, %203, %cst_135 {dimension_numbers = #tpu.dot_dimension_numbers<[1], [0], [0], [1], [0, 0, 1, 1], [], []>} : vector<10x36xbf16>, vector<36x48xbf16>, vector<10x48xf32> -> vector<10x48xf32>
    %205 = arith.addf %201, %204 : vector<10x48xf32>
    %cst_136 = arith.constant dense<0.000000e+00> : vector<10x48xf32>
    %206 = tpu.matmul %192, %107, %cst_136 {dimension_numbers = #tpu.dot_dimension_numbers<[1], [0], [0], [1], [0, 0, 1, 1], [], []>} : vector<10x10xbf16>, vector<10x48xbf16>, vector<10x48xf32> -> vector<10x48xf32>
    %207 = arith.truncf %206 : vector<10x48xf32> to vector<10x48xbf16>
    %c0_137 = arith.constant 0 : index
    %c0_138 = arith.constant 0 : index
    %c0_139 = arith.constant 0 : index
    %208 = vector.load %arg26[%c0_137, %c0_138, %c0_139] : memref<2x48x48xbf16, #tpu.memory_space<vmem>>, vector<1x48x48xbf16>
    %209 = vector.shape_cast %208 : vector<1x48x48xbf16> to vector<48x48xbf16>
    %cst_140 = arith.constant dense<0.000000e+00> : vector<10x48xf32>
    %210 = tpu.matmul %112, %209, %cst_140 {dimension_numbers = #tpu.dot_dimension_numbers<[1], [0], [0], [1], [0, 0, 1, 1], [], []>} : vector<10x48xbf16>, vector<48x48xbf16>, vector<10x48xf32> -> vector<10x48xf32>
    %211 = arith.addf %205, %210 : vector<10x48xf32>
    %c0_141 = arith.constant 0 : index
    %c0_142 = arith.constant 0 : index
    %c0_143 = arith.constant 0 : index
    %212 = vector.load %arg29[%c0_141, %c0_142, %c0_143] : memref<2x48x48xbf16, #tpu.memory_space<vmem>>, vector<1x48x48xbf16>
    %213 = vector.shape_cast %212 : vector<1x48x48xbf16> to vector<48x48xbf16>
    %cst_144 = arith.constant dense<0.000000e+00> : vector<10x48xf32>
    %214 = tpu.matmul %207, %213, %cst_144 {dimension_numbers = #tpu.dot_dimension_numbers<[1], [0], [0], [1], [0, 0, 1, 1], [], []>} : vector<10x48xbf16>, vector<48x48xbf16>, vector<10x48xf32> -> vector<10x48xf32>
    %215 = arith.addf %211, %214 : vector<10x48xf32>
    %cst_145 = arith.constant 0.000000e+00 : f32
    %216 = vector.broadcast %cst_145 : f32 to vector<10x48xf32>
    %217 = arith.cmpf oge, %215, %216 : vector<10x48xf32>
    %cst_146 = arith.constant 0.00999999977 : f32
    %218 = vector.broadcast %cst_146 : f32 to vector<10x48xf32>
    %219 = arith.mulf %218, %215 : vector<10x48xf32>
    %220 = arith.select %217, %215, %219 : vector<10x48xi1>, vector<10x48xf32>
    %221 = arith.truncf %220 : vector<10x48xf32> to vector<10x48xbf16>
    %c0_147 = arith.constant 0 : index
    %c0_148 = arith.constant 0 : index
    %222 = vector.load %arg3[%c0_147, %c0_148] : memref<10x10xbf16, #tpu.memory_space<vmem>>, vector<10x10xbf16>
    %c0_149 = arith.constant 0 : index
    %c0_150 = arith.constant 0 : index
    %223 = vector.load %arg5[%c0_149, %c0_150] : memref<2x10xbf16, #tpu.memory_space<vmem>>, vector<2x10xbf16>
    %c0_151 = arith.constant 0 : index
    %c0_152 = arith.constant 0 : index
    %224 = vector.load %arg7[%c0_151, %c0_152] : memref<2x10xf32, #tpu.memory_space<vmem>>, vector<2x10xf32>
    %cst_153 = arith.constant 1.000000e+08 : f32
    %225 = vector.broadcast %cst_153 : f32 to vector<2x10xf32>
    %226 = arith.mulf %224, %225 : vector<2x10xf32>
    %c0_154 = arith.constant 0 : index
    %c0_155 = arith.constant 0 : index
    %227 = vector.load %arg10[%c0_154, %c0_155] : memref<2x10xf32, #tpu.memory_space<vmem>>, vector<2x10xf32>
    %c0_156 = arith.constant 0 : index
    %c0_157 = arith.constant 0 : index
    %228 = vector.load %arg11[%c0_156, %c0_157] : memref<10x10xf32, #tpu.memory_space<vmem>>, vector<10x10xf32>
    %cst_158 = arith.constant dense<0.000000e+00> : vector<10x36xf32>
    %229 = tpu.matmul %222, %7, %cst_158 {dimension_numbers = #tpu.dot_dimension_numbers<[1], [0], [0], [1], [0, 0, 1, 1], [], []>} : vector<10x10xbf16>, vector<10x36xbf16>, vector<10x36xf32> -> vector<10x36xf32>
    %230 = math.absf %229 : vector<10x36xf32>
    %231 = arith.truncf %230 : vector<10x36xf32> to vector<10x36xbf16>
    %cst_159 = arith.constant dense<0.000000e+00> : vector<10x48xf32>
    %232 = tpu.matmul %222, %107, %cst_159 {dimension_numbers = #tpu.dot_dimension_numbers<[1], [0], [0], [1], [0, 0, 1, 1], [], []>} : vector<10x10xbf16>, vector<10x48xbf16>, vector<10x48xf32> -> vector<10x48xf32>
    %233 = math.absf %232 : vector<10x48xf32>
    %234 = arith.truncf %233 : vector<10x48xf32> to vector<10x48xbf16>
    %cst_160 = arith.constant dense<0.000000e+00> : vector<10x48xf32>
    %235 = tpu.matmul %222, %221, %cst_160 {dimension_numbers = #tpu.dot_dimension_numbers<[1], [0], [0], [1], [0, 0, 1, 1], [], []>} : vector<10x10xbf16>, vector<10x48xbf16>, vector<10x48xf32> -> vector<10x48xf32>
    %236 = math.absf %235 : vector<10x48xf32>
    %237 = arith.truncf %236 : vector<10x48xf32> to vector<10x48xbf16>
    %c2 = arith.constant 2 : index
    %c0_161 = arith.constant 0 : index
    %c0_162 = arith.constant 0 : index
    %238 = vector.load %arg16[%c2, %c0_161, %c0_162] : memref<3x1x192xf32, #tpu.memory_space<vmem>>, vector<1x1x192xf32>
    %239 = vector.shape_cast %238 : vector<1x1x192xf32> to vector<1x192xf32>
    %c2_163 = arith.constant 2 : index
    %c0_164 = arith.constant 0 : index
    %c0_165 = arith.constant 0 : index
    %240 = vector.load %arg22[%c2_163, %c0_164, %c0_165] : memref<3x36x192xbf16, #tpu.memory_space<vmem>>, vector<1x36x192xbf16>
    %241 = vector.shape_cast %240 : vector<1x36x192xbf16> to vector<36x192xbf16>
    %cst_166 = arith.constant dense<0.000000e+00> : vector<10x192xf32>
    %242 = tpu.matmul %231, %241, %cst_166 {dimension_numbers = #tpu.dot_dimension_numbers<[1], [0], [0], [1], [0, 0, 1, 1], [], []>} : vector<10x36xbf16>, vector<36x192xbf16>, vector<10x192xf32> -> vector<10x192xf32>
    %243 = vector.broadcast %239 : vector<1x192xf32> to vector<10x192xf32>
    %244 = arith.addf %243, %242 : vector<10x192xf32>
    %c1_167 = arith.constant 1 : index
    %c0_168 = arith.constant 0 : index
    %c0_169 = arith.constant 0 : index
    %245 = vector.load %arg23[%c1_167, %c0_168, %c0_169] : memref<2x48x192xbf16, #tpu.memory_space<vmem>>, vector<1x48x192xbf16>
    %246 = vector.shape_cast %245 : vector<1x48x192xbf16> to vector<48x192xbf16>
    %cst_170 = arith.constant dense<0.000000e+00> : vector<10x192xf32>
    %247 = tpu.matmul %234, %246, %cst_170 {dimension_numbers = #tpu.dot_dimension_numbers<[1], [0], [0], [1], [0, 0, 1, 1], [], []>} : vector<10x48xbf16>, vector<48x192xbf16>, vector<10x192xf32> -> vector<10x192xf32>
    %248 = arith.addf %244, %247 : vector<10x192xf32>
    %c0_171 = arith.constant 0 : index
    %c0_172 = arith.constant 0 : index
    %c0_173 = arith.constant 0 : index
    %249 = vector.load %arg24[%c0_171, %c0_172, %c0_173] : memref<1x48x192xbf16, #tpu.memory_space<vmem>>, vector<1x48x192xbf16>
    %250 = vector.shape_cast %249 : vector<1x48x192xbf16> to vector<48x192xbf16>
    %cst_174 = arith.constant dense<0.000000e+00> : vector<10x192xf32>
    %251 = tpu.matmul %237, %250, %cst_174 {dimension_numbers = #tpu.dot_dimension_numbers<[1], [0], [0], [1], [0, 0, 1, 1], [], []>} : vector<10x48xbf16>, vector<48x192xbf16>, vector<10x192xf32> -> vector<10x192xf32>
    %252 = arith.addf %248, %251 : vector<10x192xf32>
    %cst_175 = arith.constant 0.000000e+00 : f32
    %253 = vector.broadcast %cst_175 : f32 to vector<10x192xf32>
    %254 = arith.cmpf oge, %252, %253 : vector<10x192xf32>
    %cst_176 = arith.constant 0.00999999977 : f32
    %255 = vector.broadcast %cst_176 : f32 to vector<10x192xf32>
    %256 = arith.mulf %255, %252 : vector<10x192xf32>
    %257 = arith.select %254, %252, %256 : vector<10x192xi1>, vector<10x192xf32>
    %258 = arith.truncf %257 : vector<10x192xf32> to vector<10x192xbf16>
    %c2_177 = arith.constant 2 : index
    %c0_178 = arith.constant 0 : index
    %c0_179 = arith.constant 0 : index
    %259 = vector.load %arg12[%c2_177, %c0_178, %c0_179] : memref<3x192x192xbf16, #tpu.memory_space<vmem>>, vector<1x192x192xbf16>
    %260 = vector.shape_cast %259 : vector<1x192x192xbf16> to vector<192x192xbf16>
    %cst_180 = arith.constant dense<0.000000e+00> : vector<10x192xf32>
    %261 = tpu.matmul %258, %260, %cst_180 {dimension_numbers = #tpu.dot_dimension_numbers<[1], [0], [0], [1], [0, 0, 1, 1], [], []>} : vector<10x192xbf16>, vector<192x192xbf16>, vector<10x192xf32> -> vector<10x192xf32>
    %c2_181 = arith.constant 2 : index
    %c0_182 = arith.constant 0 : index
    %c0_183 = arith.constant 0 : index
    %262 = vector.load %arg17[%c2_181, %c0_182, %c0_183] : memref<3x1x192xf32, #tpu.memory_space<vmem>>, vector<1x1x192xf32>
    %263 = vector.shape_cast %262 : vector<1x1x192xf32> to vector<1x192xf32>
    %264 = vector.broadcast %263 : vector<1x192xf32> to vector<10x192xf32>
    %265 = arith.addf %261, %264 : vector<10x192xf32>
    %cst_184 = arith.constant 0.000000e+00 : f32
    %266 = vector.broadcast %cst_184 : f32 to vector<10x192xf32>
    %267 = arith.cmpf oge, %265, %266 : vector<10x192xf32>
    %cst_185 = arith.constant 0.00999999977 : f32
    %268 = vector.broadcast %cst_185 : f32 to vector<10x192xf32>
    %269 = arith.mulf %268, %265 : vector<10x192xf32>
    %270 = arith.select %267, %265, %269 : vector<10x192xi1>, vector<10x192xf32>
    %271 = arith.truncf %270 : vector<10x192xf32> to vector<10x192xbf16>
    %c2_186 = arith.constant 2 : index
    %c0_187 = arith.constant 0 : index
    %c0_188 = arith.constant 0 : index
    %272 = vector.load %arg13[%c2_186, %c0_187, %c0_188] : memref<3x192x96xbf16, #tpu.memory_space<vmem>>, vector<1x192x96xbf16>
    %273 = vector.shape_cast %272 : vector<1x192x96xbf16> to vector<192x96xbf16>
    %cst_189 = arith.constant dense<0.000000e+00> : vector<10x96xf32>
    %274 = tpu.matmul %271, %273, %cst_189 {dimension_numbers = #tpu.dot_dimension_numbers<[1], [0], [0], [1], [0, 0, 1, 1], [], []>} : vector<10x192xbf16>, vector<192x96xbf16>, vector<10x96xf32> -> vector<10x96xf32>
    %c2_190 = arith.constant 2 : index
    %c0_191 = arith.constant 0 : index
    %c0_192 = arith.constant 0 : index
    %275 = vector.load %arg18[%c2_190, %c0_191, %c0_192] : memref<3x1x96xf32, #tpu.memory_space<vmem>>, vector<1x1x96xf32>
    %276 = vector.shape_cast %275 : vector<1x1x96xf32> to vector<1x96xf32>
    %277 = vector.broadcast %276 : vector<1x96xf32> to vector<10x96xf32>
    %278 = arith.addf %274, %277 : vector<10x96xf32>
    %cst_193 = arith.constant 0.000000e+00 : f32
    %279 = vector.broadcast %cst_193 : f32 to vector<10x96xf32>
    %280 = arith.cmpf oge, %278, %279 : vector<10x96xf32>
    %cst_194 = arith.constant 0.00999999977 : f32
    %281 = vector.broadcast %cst_194 : f32 to vector<10x96xf32>
    %282 = arith.mulf %281, %278 : vector<10x96xf32>
    %283 = arith.select %280, %278, %282 : vector<10x96xi1>, vector<10x96xf32>
    %284 = arith.truncf %283 : vector<10x96xf32> to vector<10x96xbf16>
    %c2_195 = arith.constant 2 : index
    %c0_196 = arith.constant 0 : index
    %c0_197 = arith.constant 0 : index
    %285 = vector.load %arg14[%c2_195, %c0_196, %c0_197] : memref<3x96x96xbf16, #tpu.memory_space<vmem>>, vector<1x96x96xbf16>
    %286 = vector.shape_cast %285 : vector<1x96x96xbf16> to vector<96x96xbf16>
    %cst_198 = arith.constant dense<0.000000e+00> : vector<10x96xf32>
    %287 = tpu.matmul %284, %286, %cst_198 {dimension_numbers = #tpu.dot_dimension_numbers<[1], [0], [0], [1], [0, 0, 1, 1], [], []>} : vector<10x96xbf16>, vector<96x96xbf16>, vector<10x96xf32> -> vector<10x96xf32>
    %c2_199 = arith.constant 2 : index
    %c0_200 = arith.constant 0 : index
    %c0_201 = arith.constant 0 : index
    %288 = vector.load %arg19[%c2_199, %c0_200, %c0_201] : memref<3x1x96xf32, #tpu.memory_space<vmem>>, vector<1x1x96xf32>
    %289 = vector.shape_cast %288 : vector<1x1x96xf32> to vector<1x96xf32>
    %290 = vector.broadcast %289 : vector<1x96xf32> to vector<10x96xf32>
    %291 = arith.addf %287, %290 : vector<10x96xf32>
    %cst_202 = arith.constant 0.000000e+00 : f32
    %292 = vector.broadcast %cst_202 : f32 to vector<10x96xf32>
    %293 = arith.cmpf oge, %291, %292 : vector<10x96xf32>
    %cst_203 = arith.constant 0.00999999977 : f32
    %294 = vector.broadcast %cst_203 : f32 to vector<10x96xf32>
    %295 = arith.mulf %294, %291 : vector<10x96xf32>
    %296 = arith.select %293, %291, %295 : vector<10x96xi1>, vector<10x96xf32>
    %c2_204 = arith.constant 2 : index
    %c0_205 = arith.constant 0 : index
    %c0_206 = arith.constant 0 : index
    %297 = vector.load %arg15[%c2_204, %c0_205, %c0_206] : memref<3x1x96xf32, #tpu.memory_space<vmem>>, vector<1x1x96xf32>
    %298 = vector.shape_cast %297 : vector<1x1x96xf32> to vector<1x96xf32>
    %299 = vector.broadcast %298 : vector<1x96xf32> to vector<10x96xf32>
    %300 = arith.mulf %296, %299 : vector<10x96xf32>
    %cst_207 = arith.constant dense<0.000000e+00> : vector<10xf32>
    %301 = vector.multi_reduction <add>, %300, %cst_207 [1] : vector<10x96xf32> to vector<10xf32>
    %302 = vector.shape_cast %301 : vector<10xf32> to vector<10x1xf32>
    %c2_208 = arith.constant 2 : index
    %c0_209 = arith.constant 0 : index
    %c0_210 = arith.constant 0 : index
    %303 = vector.load %arg20[%c2_208, %c0_209, %c0_210] : memref<3x1x1xf32, #tpu.memory_space<vmem>>, vector<1x1x1xf32>
    %304 = vector.shape_cast %303 : vector<1x1x1xf32> to vector<1x1xf32>
    %305 = vector.broadcast %304 : vector<1x1xf32> to vector<10x1xf32>
    %306 = arith.addf %302, %305 : vector<10x1xf32>
    %307 = vector.broadcast %306 : vector<10x1xf32> to vector<10x10xf32>
    %308 = arith.mulf %307, %228 : vector<10x10xf32>
    %cst_211 = arith.constant dense<0.000000e+00> : vector<2x10xf32>
    %309 = tpu.matmul %227, %308, %cst_211 {dimension_numbers = #tpu.dot_dimension_numbers<[1], [0], [0], [1], [0, 0, 1, 1], [], []>} : vector<2x10xf32>, vector<10x10xf32>, vector<2x10xf32> -> vector<2x10xf32>
    %310 = arith.subf %309, %226 : vector<2x10xf32>
    %cst_212 = arith.constant dense<0xFF800000> : vector<2xf32>
    %311 = vector.multi_reduction <maximumf>, %310, %cst_212 [1] : vector<2x10xf32> to vector<2xf32>
    %312 = vector.shape_cast %311 : vector<2xf32> to vector<2x1xf32>
    %313 = vector.broadcast %312 : vector<2x1xf32> to vector<2x10xf32>
    %314 = arith.subf %310, %313 : vector<2x10xf32>
    %315 = math.exp %314 : vector<2x10xf32>
    %cst_213 = arith.constant dense<0.000000e+00> : vector<2xf32>
    %316 = vector.multi_reduction <add>, %315, %cst_213 [1] : vector<2x10xf32> to vector<2xf32>
    %317 = vector.shape_cast %316 : vector<2xf32> to vector<2x1xf32>
    %318 = tpu.reciprocal %317 {approx = true} : vector<2x1xf32> -> vector<2x1xf32>
    %319 = vector.broadcast %318 : vector<2x1xf32> to vector<2x10xf32>
    %320 = arith.mulf %315, %319 : vector<2x10xf32>
    %321 = arith.truncf %320 : vector<2x10xf32> to vector<2x10xbf16>
    %c2_214 = arith.constant 2 : index
    %c0_215 = arith.constant 0 : index
    %c0_216 = arith.constant 0 : index
    %322 = vector.load %arg21[%c2_214, %c0_215, %c0_216] : memref<3x1x48xf32, #tpu.memory_space<vmem>>, vector<1x1x48xf32>
    %323 = vector.shape_cast %322 : vector<1x1x48xf32> to vector<1x48xf32>
    %cst_217 = arith.constant dense<0.000000e+00> : vector<2x36xf32>
    %324 = tpu.matmul %223, %7, %cst_217 {dimension_numbers = #tpu.dot_dimension_numbers<[1], [0], [0], [1], [0, 0, 1, 1], [], []>} : vector<2x10xbf16>, vector<10x36xbf16>, vector<2x36xf32> -> vector<2x36xf32>
    %325 = arith.truncf %324 : vector<2x36xf32> to vector<2x36xbf16>
    %cst_218 = arith.constant dense<0.000000e+00> : vector<2x36xf32>
    %326 = tpu.matmul %321, %7, %cst_218 {dimension_numbers = #tpu.dot_dimension_numbers<[1], [0], [0], [1], [0, 0, 1, 1], [], []>} : vector<2x10xbf16>, vector<10x36xbf16>, vector<2x36xf32> -> vector<2x36xf32>
    %327 = arith.truncf %326 : vector<2x36xf32> to vector<2x36xbf16>
    %c2_219 = arith.constant 2 : index
    %c0_220 = arith.constant 0 : index
    %c0_221 = arith.constant 0 : index
    %328 = vector.load %arg25[%c2_219, %c0_220, %c0_221] : memref<3x36x48xbf16, #tpu.memory_space<vmem>>, vector<1x36x48xbf16>
    %329 = vector.shape_cast %328 : vector<1x36x48xbf16> to vector<36x48xbf16>
    %cst_222 = arith.constant dense<0.000000e+00> : vector<2x48xf32>
    %330 = tpu.matmul %325, %329, %cst_222 {dimension_numbers = #tpu.dot_dimension_numbers<[1], [0], [0], [1], [0, 0, 1, 1], [], []>} : vector<2x36xbf16>, vector<36x48xbf16>, vector<2x48xf32> -> vector<2x48xf32>
    %331 = vector.broadcast %323 : vector<1x48xf32> to vector<2x48xf32>
    %332 = arith.addf %331, %330 : vector<2x48xf32>
    %c2_223 = arith.constant 2 : index
    %c0_224 = arith.constant 0 : index
    %c0_225 = arith.constant 0 : index
    %333 = vector.load %arg28[%c2_223, %c0_224, %c0_225] : memref<3x36x48xbf16, #tpu.memory_space<vmem>>, vector<1x36x48xbf16>
    %334 = vector.shape_cast %333 : vector<1x36x48xbf16> to vector<36x48xbf16>
    %cst_226 = arith.constant dense<0.000000e+00> : vector<2x48xf32>
    %335 = tpu.matmul %327, %334, %cst_226 {dimension_numbers = #tpu.dot_dimension_numbers<[1], [0], [0], [1], [0, 0, 1, 1], [], []>} : vector<2x36xbf16>, vector<36x48xbf16>, vector<2x48xf32> -> vector<2x48xf32>
    %336 = arith.addf %332, %335 : vector<2x48xf32>
    %cst_227 = arith.constant dense<0.000000e+00> : vector<2x48xf32>
    %337 = tpu.matmul %223, %107, %cst_227 {dimension_numbers = #tpu.dot_dimension_numbers<[1], [0], [0], [1], [0, 0, 1, 1], [], []>} : vector<2x10xbf16>, vector<10x48xbf16>, vector<2x48xf32> -> vector<2x48xf32>
    %338 = arith.truncf %337 : vector<2x48xf32> to vector<2x48xbf16>
    %cst_228 = arith.constant dense<0.000000e+00> : vector<2x48xf32>
    %339 = tpu.matmul %321, %107, %cst_228 {dimension_numbers = #tpu.dot_dimension_numbers<[1], [0], [0], [1], [0, 0, 1, 1], [], []>} : vector<2x10xbf16>, vector<10x48xbf16>, vector<2x48xf32> -> vector<2x48xf32>
    %340 = arith.truncf %339 : vector<2x48xf32> to vector<2x48xbf16>
    %c1_229 = arith.constant 1 : index
    %c0_230 = arith.constant 0 : index
    %c0_231 = arith.constant 0 : index
    %341 = vector.load %arg26[%c1_229, %c0_230, %c0_231] : memref<2x48x48xbf16, #tpu.memory_space<vmem>>, vector<1x48x48xbf16>
    %342 = vector.shape_cast %341 : vector<1x48x48xbf16> to vector<48x48xbf16>
    %cst_232 = arith.constant dense<0.000000e+00> : vector<2x48xf32>
    %343 = tpu.matmul %338, %342, %cst_232 {dimension_numbers = #tpu.dot_dimension_numbers<[1], [0], [0], [1], [0, 0, 1, 1], [], []>} : vector<2x48xbf16>, vector<48x48xbf16>, vector<2x48xf32> -> vector<2x48xf32>
    %344 = arith.addf %336, %343 : vector<2x48xf32>
    %c1_233 = arith.constant 1 : index
    %c0_234 = arith.constant 0 : index
    %c0_235 = arith.constant 0 : index
    %345 = vector.load %arg29[%c1_233, %c0_234, %c0_235] : memref<2x48x48xbf16, #tpu.memory_space<vmem>>, vector<1x48x48xbf16>
    %346 = vector.shape_cast %345 : vector<1x48x48xbf16> to vector<48x48xbf16>
    %cst_236 = arith.constant dense<0.000000e+00> : vector<2x48xf32>
    %347 = tpu.matmul %340, %346, %cst_236 {dimension_numbers = #tpu.dot_dimension_numbers<[1], [0], [0], [1], [0, 0, 1, 1], [], []>} : vector<2x48xbf16>, vector<48x48xbf16>, vector<2x48xf32> -> vector<2x48xf32>
    %348 = arith.addf %344, %347 : vector<2x48xf32>
    %cst_237 = arith.constant dense<0.000000e+00> : vector<2x48xf32>
    %349 = tpu.matmul %223, %221, %cst_237 {dimension_numbers = #tpu.dot_dimension_numbers<[1], [0], [0], [1], [0, 0, 1, 1], [], []>} : vector<2x10xbf16>, vector<10x48xbf16>, vector<2x48xf32> -> vector<2x48xf32>
    %350 = arith.truncf %349 : vector<2x48xf32> to vector<2x48xbf16>
    %cst_238 = arith.constant dense<0.000000e+00> : vector<2x48xf32>
    %351 = tpu.matmul %321, %221, %cst_238 {dimension_numbers = #tpu.dot_dimension_numbers<[1], [0], [0], [1], [0, 0, 1, 1], [], []>} : vector<2x10xbf16>, vector<10x48xbf16>, vector<2x48xf32> -> vector<2x48xf32>
    %352 = arith.truncf %351 : vector<2x48xf32> to vector<2x48xbf16>
    %c0_239 = arith.constant 0 : index
    %c0_240 = arith.constant 0 : index
    %c0_241 = arith.constant 0 : index
    %353 = vector.load %arg27[%c0_239, %c0_240, %c0_241] : memref<1x48x48xbf16, #tpu.memory_space<vmem>>, vector<1x48x48xbf16>
    %354 = vector.shape_cast %353 : vector<1x48x48xbf16> to vector<48x48xbf16>
    %cst_242 = arith.constant dense<0.000000e+00> : vector<2x48xf32>
    %355 = tpu.matmul %350, %354, %cst_242 {dimension_numbers = #tpu.dot_dimension_numbers<[1], [0], [0], [1], [0, 0, 1, 1], [], []>} : vector<2x48xbf16>, vector<48x48xbf16>, vector<2x48xf32> -> vector<2x48xf32>
    %356 = arith.addf %348, %355 : vector<2x48xf32>
    %c0_243 = arith.constant 0 : index
    %c0_244 = arith.constant 0 : index
    %c0_245 = arith.constant 0 : index
    %357 = vector.load %arg30[%c0_243, %c0_244, %c0_245] : memref<1x48x48xbf16, #tpu.memory_space<vmem>>, vector<1x48x48xbf16>
    %358 = vector.shape_cast %357 : vector<1x48x48xbf16> to vector<48x48xbf16>
    %cst_246 = arith.constant dense<0.000000e+00> : vector<2x48xf32>
    %359 = tpu.matmul %352, %358, %cst_246 {dimension_numbers = #tpu.dot_dimension_numbers<[1], [0], [0], [1], [0, 0, 1, 1], [], []>} : vector<2x48xbf16>, vector<48x48xbf16>, vector<2x48xf32> -> vector<2x48xf32>
    %360 = arith.addf %356, %359 : vector<2x48xf32>
    %361 = vector.extract_strided_slice %360 {offsets = [0, 0], sizes = [2, 4], strides = [1, 1]} : vector<2x48xf32> to vector<2x4xf32>
    %c0_247 = arith.constant 0 : index
    %c0_248 = arith.constant 0 : index
    %362 = vector.load %arg31[%c0_247, %c0_248] : memref<2x4xf32, #tpu.memory_space<vmem>>, vector<2x4xf32>
    tpu.vector_store %arg31[%c0_247, %c0_248], %361 {strides = array<i32>} : memref<2x4xf32, #tpu.memory_space<vmem>>, vector<2x4xf32>,
    return
  }
  func.func @transform_0(%arg0: i32) -> (i32, i32) {
    %c0_i32 = arith.constant 0 : i32
    %c0_i32_0 = arith.constant 0 : i32
    %c0_i32_1 = arith.constant 0 : i32
    return %c0_i32, %c0_i32_0 : i32, i32
  }
  func.func @transform_1(%arg0: i32) -> (i32, i32) {
    %c0_i32 = arith.constant 0 : i32
    %c0_i32_0 = arith.constant 0 : i32
    %c0_i32_1 = arith.constant 0 : i32
    return %c0_i32, %c0_i32_0 : i32, i32
  }
  func.func @transform_2(%arg0: i32) -> (i32, i32) {
    %c0_i32 = arith.constant 0 : i32
    %c0_i32_0 = arith.constant 0 : i32
    %c0_i32_1 = arith.constant 0 : i32
    return %c0_i32, %c0_i32_0 : i32, i32
  }
  func.func @transform_3(%arg0: i32) -> (i32, i32) {
    %c0_i32 = arith.constant 0 : i32
    %c0_i32_0 = arith.constant 0 : i32
    %c0_i32_1 = arith.constant 0 : i32
    return %c0_i32, %c0_i32_0 : i32, i32
  }
  func.func @transform_4(%arg0: i32) -> (i32, i32) {
    %c0_i32 = arith.constant 0 : i32
    %c0_i32_0 = arith.constant 0 : i32
    %c0_i32_1 = arith.constant 0 : i32
    return %c0_i32, %c0_i32_0 : i32, i32
  }
  func.func @transform_5(%arg0: i32) -> (i32, i32) {
    %c0_i32 = arith.constant 0 : i32
    %c0_i32_0 = arith.constant 0 : i32
    %c0_i32_1 = arith.constant 0 : i32
    return %c0_i32, %c0_i32_0 : i32, i32
  }
  func.func @transform_6(%arg0: i32) -> (i32, i32) {
    %c0_i32 = arith.constant 0 : i32
    %c0_i32_0 = arith.constant 0 : i32
    %c0_i32_1 = arith.constant 0 : i32
    return %c0_i32, %c0_i32_0 : i32, i32
  }
  func.func @transform_7(%arg0: i32) -> (i32, i32) {
    %c0_i32 = arith.constant 0 : i32
    %c0_i32_0 = arith.constant 0 : i32
    %c0_i32_1 = arith.constant 0 : i32
    return %c0_i32, %c0_i32_0 : i32, i32
  }
  func.func @transform_8(%arg0: i32) -> (i32, i32) {
    %c0_i32 = arith.constant 0 : i32
    %c0_i32_0 = arith.constant 0 : i32
    %c0_i32_1 = arith.constant 0 : i32
    return %c0_i32, %c0_i32_0 : i32, i32
  }
  func.func @transform_9(%arg0: i32) -> (i32, i32) {
    %c0_i32 = arith.constant 0 : i32
    %c0_i32_0 = arith.constant 0 : i32
    %c0_i32_1 = arith.constant 0 : i32
    return %c0_i32, %c0_i32_0 : i32, i32
  }
  func.func @transform_10(%arg0: i32) -> (i32, i32) {
    %c0_i32 = arith.constant 0 : i32
    %c0_i32_0 = arith.constant 0 : i32
    %c0_i32_1 = arith.constant 0 : i32
    return %c0_i32, %c0_i32_0 : i32, i32
  }
  func.func @transform_11(%arg0: i32) -> (i32, i32, i32) {
    %c0_i32 = arith.constant 0 : i32
    %c0_i32_0 = arith.constant 0 : i32
    %c0_i32_1 = arith.constant 0 : i32
    %c0_i32_2 = arith.constant 0 : i32
    return %c0_i32, %c0_i32_0, %c0_i32_1 : i32, i32, i32
  }
  func.func @transform_12(%arg0: i32) -> (i32, i32, i32) {
    %c0_i32 = arith.constant 0 : i32
    %c0_i32_0 = arith.constant 0 : i32
    %c0_i32_1 = arith.constant 0 : i32
    %c0_i32_2 = arith.constant 0 : i32
    return %c0_i32, %c0_i32_0, %c0_i32_1 : i32, i32, i32
  }
  func.func @transform_13(%arg0: i32) -> (i32, i32, i32) {
    %c0_i32 = arith.constant 0 : i32
    %c0_i32_0 = arith.constant 0 : i32
    %c0_i32_1 = arith.constant 0 : i32
    %c0_i32_2 = arith.constant 0 : i32
    return %c0_i32, %c0_i32_0, %c0_i32_1 : i32, i32, i32
  }
  func.func @transform_14(%arg0: i32) -> (i32, i32, i32) {
    %c0_i32 = arith.constant 0 : i32
    %c0_i32_0 = arith.constant 0 : i32
    %c0_i32_1 = arith.constant 0 : i32
    %c0_i32_2 = arith.constant 0 : i32
    return %c0_i32, %c0_i32_0, %c0_i32_1 : i32, i32, i32
  }
  func.func @transform_15(%arg0: i32) -> (i32, i32, i32) {
    %c0_i32 = arith.constant 0 : i32
    %c0_i32_0 = arith.constant 0 : i32
    %c0_i32_1 = arith.constant 0 : i32
    %c0_i32_2 = arith.constant 0 : i32
    return %c0_i32, %c0_i32_0, %c0_i32_1 : i32, i32, i32
  }
  func.func @transform_16(%arg0: i32) -> (i32, i32, i32) {
    %c0_i32 = arith.constant 0 : i32
    %c0_i32_0 = arith.constant 0 : i32
    %c0_i32_1 = arith.constant 0 : i32
    %c0_i32_2 = arith.constant 0 : i32
    return %c0_i32, %c0_i32_0, %c0_i32_1 : i32, i32, i32
  }
  func.func @transform_17(%arg0: i32) -> (i32, i32, i32) {
    %c0_i32 = arith.constant 0 : i32
    %c0_i32_0 = arith.constant 0 : i32
    %c0_i32_1 = arith.constant 0 : i32
    %c0_i32_2 = arith.constant 0 : i32
    return %c0_i32, %c0_i32_0, %c0_i32_1 : i32, i32, i32
  }
  func.func @transform_18(%arg0: i32) -> (i32, i32, i32) {
    %c0_i32 = arith.constant 0 : i32
    %c0_i32_0 = arith.constant 0 : i32
    %c0_i32_1 = arith.constant 0 : i32
    %c0_i32_2 = arith.constant 0 : i32
    return %c0_i32, %c0_i32_0, %c0_i32_1 : i32, i32, i32
  }
  func.func @transform_19(%arg0: i32) -> (i32, i32, i32) {
    %c0_i32 = arith.constant 0 : i32
    %c0_i32_0 = arith.constant 0 : i32
    %c0_i32_1 = arith.constant 0 : i32
    %c0_i32_2 = arith.constant 0 : i32
    return %c0_i32, %c0_i32_0, %c0_i32_1 : i32, i32, i32
  }
  func.func @transform_20(%arg0: i32) -> (i32, i32, i32) {
    %c0_i32 = arith.constant 0 : i32
    %c0_i32_0 = arith.constant 0 : i32
    %c0_i32_1 = arith.constant 0 : i32
    %c0_i32_2 = arith.constant 0 : i32
    return %c0_i32, %c0_i32_0, %c0_i32_1 : i32, i32, i32
  }
  func.func @transform_21(%arg0: i32) -> (i32, i32, i32) {
    %c0_i32 = arith.constant 0 : i32
    %c0_i32_0 = arith.constant 0 : i32
    %c0_i32_1 = arith.constant 0 : i32
    %c0_i32_2 = arith.constant 0 : i32
    return %c0_i32, %c0_i32_0, %c0_i32_1 : i32, i32, i32
  }
  func.func @transform_22(%arg0: i32) -> (i32, i32, i32) {
    %c0_i32 = arith.constant 0 : i32
    %c0_i32_0 = arith.constant 0 : i32
    %c0_i32_1 = arith.constant 0 : i32
    %c0_i32_2 = arith.constant 0 : i32
    return %c0_i32, %c0_i32_0, %c0_i32_1 : i32, i32, i32
  }
  func.func @transform_23(%arg0: i32) -> (i32, i32, i32) {
    %c0_i32 = arith.constant 0 : i32
    %c0_i32_0 = arith.constant 0 : i32
    %c0_i32_1 = arith.constant 0 : i32
    %c0_i32_2 = arith.constant 0 : i32
    return %c0_i32, %c0_i32_0, %c0_i32_1 : i32, i32, i32
  }
  func.func @transform_24(%arg0: i32) -> (i32, i32, i32) {
    %c0_i32 = arith.constant 0 : i32
    %c0_i32_0 = arith.constant 0 : i32
    %c0_i32_1 = arith.constant 0 : i32
    %c0_i32_2 = arith.constant 0 : i32
    return %c0_i32, %c0_i32_0, %c0_i32_1 : i32, i32, i32
  }
  func.func @transform_25(%arg0: i32) -> (i32, i32, i32) {
    %c0_i32 = arith.constant 0 : i32
    %c0_i32_0 = arith.constant 0 : i32
    %c0_i32_1 = arith.constant 0 : i32
    %c0_i32_2 = arith.constant 0 : i32
    return %c0_i32, %c0_i32_0, %c0_i32_1 : i32, i32, i32
  }
  func.func @transform_26(%arg0: i32) -> (i32, i32, i32) {
    %c0_i32 = arith.constant 0 : i32
    %c0_i32_0 = arith.constant 0 : i32
    %c0_i32_1 = arith.constant 0 : i32
    %c0_i32_2 = arith.constant 0 : i32
    return %c0_i32, %c0_i32_0, %c0_i32_1 : i32, i32, i32
  }
  func.func @transform_27(%arg0: i32) -> (i32, i32, i32) {
    %c0_i32 = arith.constant 0 : i32
    %c0_i32_0 = arith.constant 0 : i32
    %c0_i32_1 = arith.constant 0 : i32
    %c0_i32_2 = arith.constant 0 : i32
    return %c0_i32, %c0_i32_0, %c0_i32_1 : i32, i32, i32
  }
  func.func @transform_28(%arg0: i32) -> (i32, i32, i32) {
    %c0_i32 = arith.constant 0 : i32
    %c0_i32_0 = arith.constant 0 : i32
    %c0_i32_1 = arith.constant 0 : i32
    %c0_i32_2 = arith.constant 0 : i32
    return %c0_i32, %c0_i32_0, %c0_i32_1 : i32, i32, i32
  }
  func.func @transform_29(%arg0: i32) -> (i32, i32, i32) {
    %c0_i32 = arith.constant 0 : i32
    %c0_i32_0 = arith.constant 0 : i32
    %c0_i32_1 = arith.constant 0 : i32
    %c0_i32_2 = arith.constant 0 : i32
    return %c0_i32, %c0_i32_0, %c0_i32_1 : i32, i32, i32
  }
  func.func @transform_30(%arg0: i32) -> (i32, i32) {
    %c0_i32 = arith.constant 0 : i32
    %c0_i32_0 = arith.constant 0 : i32
    %c0_i32_1 = arith.constant 0 : i32
    return %c0_i32, %c0_i32_0 : i32, i32
  }
}

</mosaic_0001>

<llo_original>
// kernel: tpu_custom_call.1
$region0: #{tpu_custom_call.1}
  #allocation0 [shape = 'u32[]', space=smem, size = 0x4, offset = 0x4, fixed_abs, tag = 'smem constant byte address 0x4 - core index']
  #allocation1 [shape = 'u32[144,128]{1,0:T(1,128)}', space=vmem, size = 0x12000, scoped, tag = 'internal scratch']
  %s0 = inlined_call_operand.smem [shape: u32[31], index: -1, kind: input, shape index: {}]
  %s1 = sld [smem:[%s0]]
  %s2 = scalar_lea.smem %s0, 1
  %s3 = sld [smem:[%s2]]
  %s4 = scalar_lea.smem %s0, 2
  %s5 = sld [smem:[%s4]]
  %s6 = scalar_lea.smem %s0, 3
  %s7 = sld [smem:[%s6]]
  %s8 = scalar_lea.smem %s0, 4
  %s9 = sld [smem:[%s8]]
  %s10 = scalar_lea.smem %s0, 5
  %s11 = sld [smem:[%s10]]
  %s12 = scalar_lea.smem %s0, 6
  %s13 = sld [smem:[%s12]]
  %s14 = scalar_lea.smem %s0, 7
  %s15 = sld [smem:[%s14]]
  %s16 = scalar_lea.smem %s0, 8
  %s17 = sld [smem:[%s16]]
  %s18 = scalar_lea.smem %s0, 9
  %s19 = sld [smem:[%s18]]
  %s20 = scalar_lea.smem %s0, 10
  %s21 = sld [smem:[%s20]]
  %s22 = scalar_lea.smem %s0, 11
  %s23 = sld [smem:[%s22]]
  %s24 = scalar_lea.smem %s0, 12
  %s25 = sld [smem:[%s24]]
  %s26 = scalar_lea.smem %s0, 13
  %s27 = sld [smem:[%s26]]
  %s28 = scalar_lea.smem %s0, 14
  %s29 = sld [smem:[%s28]]
  %s30 = scalar_lea.smem %s0, 15
  %s31 = sld [smem:[%s30]]
  %s32 = scalar_lea.smem %s0, 16
  %s33 = sld [smem:[%s32]]
  %s34 = scalar_lea.smem %s0, 17
  %s35 = sld [smem:[%s34]]
  %s36 = scalar_lea.smem %s0, 18
  %s37 = sld [smem:[%s36]]
  %s38 = scalar_lea.smem %s0, 19
  %s39 = sld [smem:[%s38]]
  %s40 = scalar_lea.smem %s0, 20
  %s41 = sld [smem:[%s40]]
  %s42 = scalar_lea.smem %s0, 21
  %s43 = sld [smem:[%s42]]
  %s44 = scalar_lea.smem %s0, 22
  %s45 = sld [smem:[%s44]]
  %s46 = scalar_lea.smem %s0, 23
  %s47 = sld [smem:[%s46]]
  %s48 = scalar_lea.smem %s0, 24
  %s49 = sld [smem:[%s48]]
  %s50 = scalar_lea.smem %s0, 25
  %s51 = sld [smem:[%s50]]
  %s52 = scalar_lea.smem %s0, 26
  %s53 = sld [smem:[%s52]]
  %s54 = scalar_lea.smem %s0, 27
  %s55 = sld [smem:[%s54]]
  %s56 = scalar_lea.smem %s0, 28
  %s57 = sld [smem:[%s56]]
  %s58 = scalar_lea.smem %s0, 29
  %s59 = sld [smem:[%s58]]
  %s60 = scalar_lea.smem %s0, 30
  %s61 = sld [smem:[%s60]]
  %s62 = sld [smem:[#allocation0]]
  $region226: #{tpu_custom_call.1} parent=0
    _
  %s64 = ssub.s32 1, %s62
  %s65 = scalar_select 0, %s64, %s62
  $region1: #{tpu_custom_call.1} parent=0
    #allocation2 [shape = 'u8[4096]{0}', space=vmem, size = 0x1000, scoped, tag = 'input window, operand 0, single buffered']
    #allocation3 [shape = 's32[1]{0}', space=sflag, size = 0x4, scoped, tag = 'scoped memory for tpu_custom_call.1']
    #allocation4 [shape = 's32[1]{0}', space=sflag, size = 0x4, scoped, tag = 'scoped memory for tpu_custom_call.1']
    #allocation5 [shape = 'u8[4096]{0}', space=vmem, size = 0x1000, scoped, tag = 'input window, operand 2, single buffered']
    #allocation6 [shape = 's32[1]{0}', space=sflag, size = 0x4, scoped, tag = 'scoped memory for tpu_custom_call.1']
    #allocation7 [shape = 'u8[4096]{0}', space=vmem, size = 0x1000, scoped, tag = 'input window, operand 3, single buffered']
    #allocation8 [shape = 'u8[512]{0}', space=vmem, size = 0x400, scoped, tag = 'input window, operand 4, single buffered']
    #allocation9 [shape = 's32[1]{0}', space=sflag, size = 0x4, scoped, tag = 'scoped memory for tpu_custom_call.1']
    #allocation10 [shape = 'u8[8192]{0}', space=vmem, size = 0x2000, scoped, tag = 'input window, operand 5, single buffered']
    #allocation11 [shape = 'u8[1024]{0}', space=vmem, size = 0x400, scoped, tag = 'input window, operand 6, single buffered']
    #allocation12 [shape = 's32[1]{0}', space=sflag, size = 0x4, scoped, tag = 'scoped memory for tpu_custom_call.1']
    #allocation13 [shape = 'u8[8192]{0}', space=vmem, size = 0x2000, scoped, tag = 'input window, operand 7, single buffered']
    #allocation14 [shape = 'u8[1024]{0}', space=vmem, size = 0x400, scoped, tag = 'input window, operand 9, single buffered']
    #allocation15 [shape = 's32[1]{0}', space=sflag, size = 0x4, scoped, tag = 'scoped memory for tpu_custom_call.1']
    #allocation16 [shape = 'u8[8192]{0}', space=vmem, size = 0x2000, scoped, tag = 'input window, operand 10, single buffered']
    #allocation17 [shape = 'u8[294912]{0}', space=vmem, size = 0x48000, scoped, tag = 'input window, operand 11, single buffered']
    #allocation18 [shape = 's32[1]{0}', space=sflag, size = 0x4, scoped, tag = 'scoped memory for tpu_custom_call.1']
    #allocation19 [shape = 'u8[147456]{0}', space=vmem, size = 0x24000, scoped, tag = 'input window, operand 12, single buffered']
    #allocation20 [shape = 'u8[73728]{0}', space=vmem, size = 0x12000, scoped, tag = 'input window, operand 13, single buffered']
    #allocation21 [shape = 's32[1]{0}', space=sflag, size = 0x4, scoped, tag = 'scoped memory for tpu_custom_call.1']
    #allocation22 [shape = 'u8[1536]{0}', space=vmem, size = 0x800, scoped, tag = 'input window, operand 14, single buffered']
    #allocation23 [shape = 'u8[3072]{0}', space=vmem, size = 0xc00, scoped, tag = 'input window, operand 16, single buffered']
    #allocation24 [shape = 's32[1]{0}', space=sflag, size = 0x4, scoped, tag = 'scoped memory for tpu_custom_call.1']
    #allocation25 [shape = 'u8[1536]{0}', space=vmem, size = 0x800, scoped, tag = 'input window, operand 17, single buffered']
    #allocation26 [shape = 'u8[1536]{0}', space=vmem, size = 0x800, scoped, tag = 'input window, operand 18, single buffered']
    #allocation27 [shape = 's32[1]{0}', space=sflag, size = 0x4, scoped, tag = 'scoped memory for tpu_custom_call.1']
    #allocation28 [shape = 'u8[1536]{0}', space=vmem, size = 0x800, scoped, tag = 'input window, operand 20, single buffered']
    #allocation29 [shape = 'u8[49152]{0}', space=vmem, size = 0xc000, scoped, tag = 'input window, operand 22, single buffered']
    #allocation30 [shape = 's32[1]{0}', space=sflag, size = 0x4, scoped, tag = 'scoped memory for tpu_custom_call.1']
    #allocation31 [shape = 'u8[24576]{0}', space=vmem, size = 0x6000, scoped, tag = 'input window, operand 23, single buffered']
    #allocation32 [shape = 'u8[30720]{0}', space=vmem, size = 0x7800, scoped, tag = 'input window, operand 24, single buffered']
    #allocation33 [shape = 's32[1]{0}', space=sflag, size = 0x4, scoped, tag = 'scoped memory for tpu_custom_call.1']
    #allocation34 [shape = 'u8[24576]{0}', space=vmem, size = 0x6000, scoped, tag = 'input window, operand 25, single buffered']
    #allocation35 [shape = 'u8[30720]{0}', space=vmem, size = 0x7800, scoped, tag = 'input window, operand 27, single buffered']
    #allocation36 [shape = 's32[1]{0}', space=sflag, size = 0x4, scoped, tag = 'scoped memory for tpu_custom_call.1']
    #allocation37 [shape = 'u8[24576]{0}', space=vmem, size = 0x6000, scoped, tag = 'input window, operand 28, single buffered']
    #allocation38 [shape = 'u8[12288]{0}', space=vmem, size = 0x3000, scoped, tag = 'input window, operand 29, single buffered']
    #allocation39 [shape = 's32[1]{0}', space=sflag, size = 0x4, scoped, tag = 'scoped memory for tpu_custom_call.1']
    #allocation40 [shape = 'u8[1024]{0}', space=vmem, size = 0x400, scoped, tag = 'output window, operand 0, single buffered']
    %66 = vsyncpa [#allocation3], 0
    %67 = vsyncpa [#allocation6], 0
    %68 = vsyncpa [#allocation9], 0
    %69 = vsyncpa [#allocation12], 0
    %70 = vsyncpa [#allocation15], 0
    %71 = vsyncpa [#allocation18], 0
    %72 = vsyncpa [#allocation21], 0
    %73 = vsyncpa [#allocation24], 0
    %74 = vsyncpa [#allocation27], 0
    %75 = vsyncpa [#allocation30], 0
    %76 = vsyncpa [#allocation33], 0
    %77 = vsyncpa [#allocation36], 0
    %78 = vsyncpa [#allocation39], 0
    %79 = vsyncpa [#allocation4], 0
    // Predicated region
    $region2: #{tpu_custom_call.1} parent=1 // pred_check
      _
    $region3: #{tpu_custom_call.1} parent=1 // pred_check_branch
      %81 = sbr.rel (0) target = $region5
    $region4: #{tpu_custom_call.1} parent=1 // pred_region
      %s83 = ssub.s32 128, 128
      %84 = vsyncadd [#allocation3], %s83
      %s85 = sshll.u32 [#allocation2], 4
      %s86 = int_to_ptr.vmem [resolvable:$true] %s85
      %91 = dma.hbm_to_vmem [thread:$0]  %s1, 128, %s86, [#allocation3], 64, 64, 4
    $region5: #{tpu_custom_call.1} parent=1 // pred_fallthru
      _
    // Predicated region
    $region6: #{tpu_custom_call.1} parent=1 // pred_check
      _
    $region7: #{tpu_custom_call.1} parent=1 // pred_check_branch
      %93 = sbr.rel (0) target = $region9
    $region8: #{tpu_custom_call.1} parent=1 // pred_region
      _
    $region9: #{tpu_custom_call.1} parent=1 // pred_fallthru
      _
    // Predicated region
    $region10: #{tpu_custom_call.1} parent=1 // pred_check
      _
    $region11: #{tpu_custom_call.1} parent=1 // pred_check_branch
      %95 = sbr.rel (0) target = $region13
    $region12: #{tpu_custom_call.1} parent=1 // pred_region
      %s97 = ssub.s32 128, 128
      %98 = vsyncadd [#allocation6], %s97
      %s99 = sshll.u32 [#allocation5], 4
      %s100 = int_to_ptr.vmem [resolvable:$true] %s99
      %105 = dma.hbm_to_vmem [thread:$0]  %s5, 128, %s100, [#allocation6], 64, 64, 4
    $region13: #{tpu_custom_call.1} parent=1 // pred_fallthru
      _
    // Predicated region
    $region14: #{tpu_custom_call.1} parent=1 // pred_check
      _
    $region15: #{tpu_custom_call.1} parent=1 // pred_check_branch
      %107 = sbr.rel (0) target = $region17
    $region16: #{tpu_custom_call.1} parent=1 // pred_region
      %s109 = ssub.s32 128, 128
      %110 = vsyncadd [#allocation6], %s109
      %s111 = sshll.u32 [#allocation7], 4
      %s112 = int_to_ptr.vmem [resolvable:$true] %s111
      %117 = dma.hbm_to_vmem [thread:$0]  %s7, 128, %s112, [#allocation6], 64, 64, 4
    $region17: #{tpu_custom_call.1} parent=1 // pred_fallthru
      _
    // Predicated region
    $region18: #{tpu_custom_call.1} parent=1 // pred_check
      _
    $region19: #{tpu_custom_call.1} parent=1 // pred_check_branch
      %119 = sbr.rel (0) target = $region21
    $region20: #{tpu_custom_call.1} parent=1 // pred_region
      %s121 = ssub.s32 16, 16
      %122 = vsyncadd [#allocation9], %s121
      %s124 = sshll.u32 [#allocation8], 4
      %s125 = int_to_ptr.vmem [resolvable:$true] %s124
      %127 = dma.hbm_to_vmem [thread:$0]  %s9, 16, %s125, [#allocation9]
    $region21: #{tpu_custom_call.1} parent=1 // pred_fallthru
      _
    // Predicated region
    $region22: #{tpu_custom_call.1} parent=1 // pred_check
      _
    $region23: #{tpu_custom_call.1} parent=1 // pred_check_branch
      %129 = sbr.rel (0) target = $region25
    $region24: #{tpu_custom_call.1} parent=1 // pred_region
      %s131 = ssub.s32 256, 256
      %132 = vsyncadd [#allocation9], %s131
      %s133 = sshll.u32 [#allocation10], 4
      %s134 = int_to_ptr.vmem [resolvable:$true] %s133
      %139 = dma.hbm_to_vmem [thread:$0]  %s11, 256, %s134, [#allocation9], 128, 128, 8
    $region25: #{tpu_custom_call.1} parent=1 // pred_fallthru
      _
    // Predicated region
    $region26: #{tpu_custom_call.1} parent=1 // pred_check
      _
    $region27: #{tpu_custom_call.1} parent=1 // pred_check_branch
      %141 = sbr.rel (0) target = $region29
    $region28: #{tpu_custom_call.1} parent=1 // pred_region
      %s143 = ssub.s32 32, 32
      %144 = vsyncadd [#allocation12], %s143
      %s146 = sshll.u32 [#allocation11], 4
      %s147 = int_to_ptr.vmem [resolvable:$true] %s146
      %149 = dma.hbm_to_vmem [thread:$0]  %s13, 32, %s147, [#allocation12]
    $region29: #{tpu_custom_call.1} parent=1 // pred_fallthru
      _
    // Predicated region
    $region30: #{tpu_custom_call.1} parent=1 // pred_check
      _
    $region31: #{tpu_custom_call.1} parent=1 // pred_check_branch
      %151 = sbr.rel (0) target = $region33
    $region32: #{tpu_custom_call.1} parent=1 // pred_region
      %s153 = ssub.s32 256, 256
      %154 = vsyncadd [#allocation12], %s153
      %s155 = sshll.u32 [#allocation13], 4
      %s156 = int_to_ptr.vmem [resolvable:$true] %s155
      %161 = dma.hbm_to_vmem [thread:$0]  %s15, 256, %s156, [#allocation12], 128, 128, 8
    $region33: #{tpu_custom_call.1} parent=1 // pred_fallthru
      _
    // Predicated region
    $region34: #{tpu_custom_call.1} parent=1 // pred_check
      _
    $region35: #{tpu_custom_call.1} parent=1 // pred_check_branch
      %163 = sbr.rel (0) target = $region37
    $region36: #{tpu_custom_call.1} parent=1 // pred_region
      _
    $region37: #{tpu_custom_call.1} parent=1 // pred_fallthru
      _
    // Predicated region
    $region38: #{tpu_custom_call.1} parent=1 // pred_check
      _
    $region39: #{tpu_custom_call.1} parent=1 // pred_check_branch
      %165 = sbr.rel (0) target = $region41
    $region40: #{tpu_custom_call.1} parent=1 // pred_region
      %s167 = ssub.s32 32, 32
      %168 = vsyncadd [#allocation15], %s167
      %s170 = sshll.u32 [#allocation14], 4
      %s171 = int_to_ptr.vmem [resolvable:$true] %s170
      %173 = dma.hbm_to_vmem [thread:$0]  %s19, 32, %s171, [#allocation15]
    $region41: #{tpu_custom_call.1} parent=1 // pred_fallthru
      _
    // Predicated region
    $region42: #{tpu_custom_call.1} parent=1 // pred_check
      _
    $region43: #{tpu_custom_call.1} parent=1 // pred_check_branch
      %175 = sbr.rel (0) target = $region45
    $region44: #{tpu_custom_call.1} parent=1 // pred_region
      %s177 = ssub.s32 256, 256
      %178 = vsyncadd [#allocation15], %s177
      %s179 = sshll.u32 [#allocation16], 4
      %s180 = int_to_ptr.vmem [resolvable:$true] %s179
      %185 = dma.hbm_to_vmem [thread:$0]  %s21, 256, %s180, [#allocation15], 128, 128, 8
    $region45: #{tpu_custom_call.1} parent=1 // pred_fallthru
      _
    // Predicated region
    $region46: #{tpu_custom_call.1} parent=1 // pred_check
      _
    $region47: #{tpu_custom_call.1} parent=1 // pred_check_branch
      %187 = sbr.rel (0) target = $region49
    $region48: #{tpu_custom_call.1} parent=1 // pred_region
      %s189 = ssub.s32 9216, 9216
      %190 = vsyncadd [#allocation18], %s189
      %s191 = sshll.u32 [#allocation17], 4
      %s192 = int_to_ptr.vmem [resolvable:$true] %s191
      %197 = dma.hbm_to_vmem [thread:$0]  %s23, 9216, %s192, [#allocation18], 128, 128, 8
    $region49: #{tpu_custom_call.1} parent=1 // pred_fallthru
      _
    // Predicated region
    $region50: #{tpu_custom_call.1} parent=1 // pred_check
      _
    $region51: #{tpu_custom_call.1} parent=1 // pred_check_branch
      %199 = sbr.rel (0) target = $region53
    $region52: #{tpu_custom_call.1} parent=1 // pred_region
      %s201 = ssub.s32 4608, 4608
      %202 = vsyncadd [#allocation18], %s201
      %s203 = sshll.u32 [#allocation19], 4
      %s204 = int_to_ptr.vmem [resolvable:$true] %s203
      %209 = dma.hbm_to_vmem [thread:$0]  %s25, 4608, %s204, [#allocation18], 64, 64, 4
    $region53: #{tpu_custom_call.1} parent=1 // pred_fallthru
      _
    // Predicated region
    $region54: #{tpu_custom_call.1} parent=1 // pred_check
      _
    $region55: #{tpu_custom_call.1} parent=1 // pred_check_branch
      %211 = sbr.rel (0) target = $region57
    $region56: #{tpu_custom_call.1} parent=1 // pred_region
      %s213 = ssub.s32 2304, 2304
      %214 = vsyncadd [#allocation21], %s213
      %s215 = sshll.u32 [#allocation20], 4
      %s216 = int_to_ptr.vmem [resolvable:$true] %s215
      %221 = dma.hbm_to_vmem [thread:$0]  %s27, 2304, %s216, [#allocation21], 64, 64, 4
    $region57: #{tpu_custom_call.1} parent=1 // pred_fallthru
      _
    // Predicated region
    $region58: #{tpu_custom_call.1} parent=1 // pred_check
      _
    $region59: #{tpu_custom_call.1} parent=1 // pred_check_branch
      %223 = sbr.rel (0) target = $region61
    $region60: #{tpu_custom_call.1} parent=1 // pred_region
      %s225 = ssub.s32 48, 48
      %226 = vsyncadd [#allocation21], %s225
      %s227 = sshll.u32 [#allocation22], 4
      %s228 = int_to_ptr.vmem [resolvable:$true] %s227
      %233 = dma.hbm_to_vmem [thread:$0]  %s29, 48, %s228, [#allocation21], 16, 16, 1
    $region61: #{tpu_custom_call.1} parent=1 // pred_fallthru
      _
    // Predicated region
    $region62: #{tpu_custom_call.1} parent=1 // pred_check
      _
    $region63: #{tpu_custom_call.1} parent=1 // pred_check_branch
      %235 = sbr.rel (0) target = $region65
    $region64: #{tpu_custom_call.1} parent=1 // pred_region
      _
    $region65: #{tpu_custom_call.1} parent=1 // pred_fallthru
      _
    // Predicated region
    $region66: #{tpu_custom_call.1} parent=1 // pred_check
      _
    $region67: #{tpu_custom_call.1} parent=1 // pred_check_branch
      %237 = sbr.rel (0) target = $region69
    $region68: #{tpu_custom_call.1} parent=1 // pred_region
      %s239 = ssub.s32 96, 96
      %240 = vsyncadd [#allocation24], %s239
      %s241 = sshll.u32 [#allocation23], 4
      %s242 = int_to_ptr.vmem [resolvable:$true] %s241
      %247 = dma.hbm_to_vmem [thread:$0]  %s33, 96, %s242, [#allocation24], 32, 32, 2
    $region69: #{tpu_custom_call.1} parent=1 // pred_fallthru
      _
    // Predicated region
    $region70: #{tpu_custom_call.1} parent=1 // pred_check
      _
    $region71: #{tpu_custom_call.1} parent=1 // pred_check_branch
      %249 = sbr.rel (0) target = $region73
    $region72: #{tpu_custom_call.1} parent=1 // pred_region
      %s251 = ssub.s32 48, 48
      %252 = vsyncadd [#allocation24], %s251
      %s253 = sshll.u32 [#allocation25], 4
      %s254 = int_to_ptr.vmem [resolvable:$true] %s253
      %259 = dma.hbm_to_vmem [thread:$0]  %s35, 48, %s254, [#allocation24], 16, 16, 1
    $region73: #{tpu_custom_call.1} parent=1 // pred_fallthru
      _
    // Predicated region
    $region74: #{tpu_custom_call.1} parent=1 // pred_check
      _
    $region75: #{tpu_custom_call.1} parent=1 // pred_check_branch
      %261 = sbr.rel (0) target = $region77
    $region76: #{tpu_custom_call.1} parent=1 // pred_region
      %s263 = ssub.s32 48, 48
      %264 = vsyncadd [#allocation27], %s263
      %s265 = sshll.u32 [#allocation26], 4
      %s266 = int_to_ptr.vmem [resolvable:$true] %s265
      %271 = dma.hbm_to_vmem [thread:$0]  %s37, 48, %s266, [#allocation27], 16, 16, 1
    $region77: #{tpu_custom_call.1} parent=1 // pred_fallthru
      _
    // Predicated region
    $region78: #{tpu_custom_call.1} parent=1 // pred_check
      _
    $region79: #{tpu_custom_call.1} parent=1 // pred_check_branch
      %273 = sbr.rel (0) target = $region81
    $region80: #{tpu_custom_call.1} parent=1 // pred_region
      _
    $region81: #{tpu_custom_call.1} parent=1 // pred_fallthru
      _
    // Predicated region
    $region82: #{tpu_custom_call.1} parent=1 // pred_check
      _
    $region83: #{tpu_custom_call.1} parent=1 // pred_check_branch
      %275 = sbr.rel (0) target = $region85
    $region84: #{tpu_custom_call.1} parent=1 // pred_region
      %s277 = ssub.s32 48, 48
      %278 = vsyncadd [#allocation27], %s277
      %s279 = sshll.u32 [#allocation28], 4
      %s280 = int_to_ptr.vmem [resolvable:$true] %s279
      %285 = dma.hbm_to_vmem [thread:$0]  %s41, 48, %s280, [#allocation27], 16, 16, 1
    $region85: #{tpu_custom_call.1} parent=1 // pred_fallthru
      _
    // Predicated region
    $region86: #{tpu_custom_call.1} parent=1 // pred_check
      _
    $region87: #{tpu_custom_call.1} parent=1 // pred_check_branch
      %287 = sbr.rel (0) target = $region89
    $region88: #{tpu_custom_call.1} parent=1 // pred_region
      _
    $region89: #{tpu_custom_call.1} parent=1 // pred_fallthru
      _
    // Predicated region
    $region90: #{tpu_custom_call.1} parent=1 // pred_check
      _
    $region91: #{tpu_custom_call.1} parent=1 // pred_check_branch
      %289 = sbr.rel (0) target = $region93
    $region92: #{tpu_custom_call.1} parent=1 // pred_region
      %s291 = ssub.s32 1536, 1536
      %292 = vsyncadd [#allocation30], %s291
      %s293 = sshll.u32 [#allocation29], 4
      %s294 = int_to_ptr.vmem [resolvable:$true] %s293
      %299 = dma.hbm_to_vmem [thread:$0]  %s45, 1536, %s294, [#allocation30], 128, 128, 8
    $region93: #{tpu_custom_call.1} parent=1 // pred_fallthru
      _
    // Predicated region
    $region94: #{tpu_custom_call.1} parent=1 // pred_check
      _
    $region95: #{tpu_custom_call.1} parent=1 // pred_check_branch
      %301 = sbr.rel (0) target = $region97
    $region96: #{tpu_custom_call.1} parent=1 // pred_region
      %s303 = ssub.s32 768, 768
      %304 = vsyncadd [#allocation30], %s303
      %s305 = sshll.u32 [#allocation31], 4
      %s306 = int_to_ptr.vmem [resolvable:$true] %s305
      %311 = dma.hbm_to_vmem [thread:$0]  %s47, 768, %s306, [#allocation30], 128, 128, 8
    $region97: #{tpu_custom_call.1} parent=1 // pred_fallthru
      _
    // Predicated region
    $region98: #{tpu_custom_call.1} parent=1 // pred_check
      _
    $region99: #{tpu_custom_call.1} parent=1 // pred_check_branch
      %313 = sbr.rel (0) target = $region101
    $region100: #{tpu_custom_call.1} parent=1 // pred_region
      %s315 = ssub.s32 960, 960
      %316 = vsyncadd [#allocation33], %s315
      %s317 = sshll.u32 [#allocation32], 4
      %s318 = int_to_ptr.vmem [resolvable:$true] %s317
      %323 = dma.hbm_to_vmem [thread:$0]  %s49, 960, %s318, [#allocation33], 64, 64, 4
    $region101: #{tpu_custom_call.1} parent=1 // pred_fallthru
      _
    // Predicated region
    $region102: #{tpu_custom_call.1} parent=1 // pred_check
      _
    $region103: #{tpu_custom_call.1} parent=1 // pred_check_branch
      %325 = sbr.rel (0) target = $region105
    $region104: #{tpu_custom_call.1} parent=1 // pred_region
      %s327 = ssub.s32 768, 768
      %328 = vsyncadd [#allocation33], %s327
      %s329 = sshll.u32 [#allocation34], 4
      %s330 = int_to_ptr.vmem [resolvable:$true] %s329
      %335 = dma.hbm_to_vmem [thread:$0]  %s51, 768, %s330, [#allocation33], 64, 64, 4
    $region105: #{tpu_custom_call.1} parent=1 // pred_fallthru
      _
    // Predicated region
    $region106: #{tpu_custom_call.1} parent=1 // pred_check
      _
    $region107: #{tpu_custom_call.1} parent=1 // pred_check_branch
      %337 = sbr.rel (0) target = $region109
    $region108: #{tpu_custom_call.1} parent=1 // pred_region
      _
    $region109: #{tpu_custom_call.1} parent=1 // pred_fallthru
      _
    // Predicated region
    $region110: #{tpu_custom_call.1} parent=1 // pred_check
      _
    $region111: #{tpu_custom_call.1} parent=1 // pred_check_branch
      %339 = sbr.rel (0) target = $region113
    $region112: #{tpu_custom_call.1} parent=1 // pred_region
      %s341 = ssub.s32 960, 960
      %342 = vsyncadd [#allocation36], %s341
      %s343 = sshll.u32 [#allocation35], 4
      %s344 = int_to_ptr.vmem [resolvable:$true] %s343
      %349 = dma.hbm_to_vmem [thread:$0]  %s55, 960, %s344, [#allocation36], 64, 64, 4
    $region113: #{tpu_custom_call.1} parent=1 // pred_fallthru
      _
    // Predicated region
    $region114: #{tpu_custom_call.1} parent=1 // pred_check
      _
    $region115: #{tpu_custom_call.1} parent=1 // pred_check_branch
      %351 = sbr.rel (0) target = $region117
    $region116: #{tpu_custom_call.1} parent=1 // pred_region
      %s353 = ssub.s32 768, 768
      %354 = vsyncadd [#allocation36], %s353
      %s355 = sshll.u32 [#allocation37], 4
      %s356 = int_to_ptr.vmem [resolvable:$true] %s355
      %361 = dma.hbm_to_vmem [thread:$0]  %s57, 768, %s356, [#allocation36], 64, 64, 4
    $region117: #{tpu_custom_call.1} parent=1 // pred_fallthru
      _
    // Predicated region
    $region118: #{tpu_custom_call.1} parent=1 // pred_check
      _
    $region119: #{tpu_custom_call.1} parent=1 // pred_check_branch
      %363 = sbr.rel (0) target = $region121
    $region120: #{tpu_custom_call.1} parent=1 // pred_region
      %s365 = ssub.s32 384, 384
      %366 = vsyncadd [#allocation39], %s365
      %s367 = sshll.u32 [#allocation38], 4
      %s368 = int_to_ptr.vmem [resolvable:$true] %s367
      %373 = dma.hbm_to_vmem [thread:$0]  %s59, 384, %s368, [#allocation39], 64, 64, 4
    $region121: #{tpu_custom_call.1} parent=1 // pred_fallthru
      _
    // Predicated region
    $region122: #{tpu_custom_call.1} parent=1 // pred_check
      _
    $region123: #{tpu_custom_call.1} parent=1 // pred_check_branch
      %375 = sbr.rel (0) target = $region125
    $region124: #{tpu_custom_call.1} parent=1 // pred_region
      %376 = dma.done [#allocation3], 128
    $region125: #{tpu_custom_call.1} parent=1 // pred_fallthru
      _
    // Predicated region
    $region126: #{tpu_custom_call.1} parent=1 // pred_check
      _
    $region127: #{tpu_custom_call.1} parent=1 // pred_check_branch
      %378 = sbr.rel (0) target = $region129
    $region128: #{tpu_custom_call.1} parent=1 // pred_region
      %379 = dma.done [#allocation6], 128
    $region129: #{tpu_custom_call.1} parent=1 // pred_fallthru
      _
    // Predicated region
    $region130: #{tpu_custom_call.1} parent=1 // pred_check
      _
    $region131: #{tpu_custom_call.1} parent=1 // pred_check_branch
      %381 = sbr.rel (0) target = $region133
    $region132: #{tpu_custom_call.1} parent=1 // pred_region
      %382 = dma.done [#allocation6], 128
    $region133: #{tpu_custom_call.1} parent=1 // pred_fallthru
      _
    // Predicated region
    $region134: #{tpu_custom_call.1} parent=1 // pred_check
      _
    $region135: #{tpu_custom_call.1} parent=1 // pred_check_branch
      %384 = sbr.rel (0) target = $region137
    $region136: #{tpu_custom_call.1} parent=1 // pred_region
      %385 = dma.done [#allocation9], 16
    $region137: #{tpu_custom_call.1} parent=1 // pred_fallthru
      _
    // Predicated region
    $region138: #{tpu_custom_call.1} parent=1 // pred_check
      _
    $region139: #{tpu_custom_call.1} parent=1 // pred_check_branch
      %387 = sbr.rel (0) target = $region141
    $region140: #{tpu_custom_call.1} parent=1 // pred_region
      %388 = dma.done [#allocation9], 256
    $region141: #{tpu_custom_call.1} parent=1 // pred_fallthru
      _
    // Predicated region
    $region142: #{tpu_custom_call.1} parent=1 // pred_check
      _
    $region143: #{tpu_custom_call.1} parent=1 // pred_check_branch
      %390 = sbr.rel (0) target = $region145
    $region144: #{tpu_custom_call.1} parent=1 // pred_region
      %391 = dma.done [#allocation12], 32
    $region145: #{tpu_custom_call.1} parent=1 // pred_fallthru
      _
    // Predicated region
    $region146: #{tpu_custom_call.1} parent=1 // pred_check
      _
    $region147: #{tpu_custom_call.1} parent=1 // pred_check_branch
      %393 = sbr.rel (0) target = $region149
    $region148: #{tpu_custom_call.1} parent=1 // pred_region
      %394 = dma.done [#allocation12], 256
    $region149: #{tpu_custom_call.1} parent=1 // pred_fallthru
      _
    // Predicated region
    $region150: #{tpu_custom_call.1} parent=1 // pred_check
      _
    $region151: #{tpu_custom_call.1} parent=1 // pred_check_branch
      %396 = sbr.rel (0) target = $region153
    $region152: #{tpu_custom_call.1} parent=1 // pred_region
      %397 = dma.done [#allocation15], 32
    $region153: #{tpu_custom_call.1} parent=1 // pred_fallthru
      _
    // Predicated region
    $region154: #{tpu_custom_call.1} parent=1 // pred_check
      _
    $region155: #{tpu_custom_call.1} parent=1 // pred_check_branch
      %399 = sbr.rel (0) target = $region157
    $region156: #{tpu_custom_call.1} parent=1 // pred_region
      %400 = dma.done [#allocation15], 256
    $region157: #{tpu_custom_call.1} parent=1 // pred_fallthru
      _
    // Predicated region
    $region158: #{tpu_custom_call.1} parent=1 // pred_check
      _
    $region159: #{tpu_custom_call.1} parent=1 // pred_check_branch
      %402 = sbr.rel (0) target = $region161
    $region160: #{tpu_custom_call.1} parent=1 // pred_region
      %403 = dma.done [#allocation18], 9216
    $region161: #{tpu_custom_call.1} parent=1 // pred_fallthru
      _
    // Predicated region
    $region162: #{tpu_custom_call.1} parent=1 // pred_check
      _
    $region163: #{tpu_custom_call.1} parent=1 // pred_check_branch
      %405 = sbr.rel (0) target = $region165
    $region164: #{tpu_custom_call.1} parent=1 // pred_region
      %406 = dma.done [#allocation18], 4608
    $region165: #{tpu_custom_call.1} parent=1 // pred_fallthru
      _
    // Predicated region
    $region166: #{tpu_custom_call.1} parent=1 // pred_check
      _
    $region167: #{tpu_custom_call.1} parent=1 // pred_check_branch
      %408 = sbr.rel (0) target = $region169
    $region168: #{tpu_custom_call.1} parent=1 // pred_region
      %409 = dma.done [#allocation21], 2304
    $region169: #{tpu_custom_call.1} parent=1 // pred_fallthru
      _
    // Predicated region
    $region170: #{tpu_custom_call.1} parent=1 // pred_check
      _
    $region171: #{tpu_custom_call.1} parent=1 // pred_check_branch
      %411 = sbr.rel (0) target = $region173
    $region172: #{tpu_custom_call.1} parent=1 // pred_region
      %412 = dma.done [#allocation21], 48
    $region173: #{tpu_custom_call.1} parent=1 // pred_fallthru
      _
    // Predicated region
    $region174: #{tpu_custom_call.1} parent=1 // pred_check
      _
    $region175: #{tpu_custom_call.1} parent=1 // pred_check_branch
      %414 = sbr.rel (0) target = $region177
    $region176: #{tpu_custom_call.1} parent=1 // pred_region
      %415 = dma.done [#allocation24], 96
    $region177: #{tpu_custom_call.1} parent=1 // pred_fallthru
      _
    // Predicated region
    $region178: #{tpu_custom_call.1} parent=1 // pred_check
      _
    $region179: #{tpu_custom_call.1} parent=1 // pred_check_branch
      %417 = sbr.rel (0) target = $region181
    $region180: #{tpu_custom_call.1} parent=1 // pred_region
      %418 = dma.done [#allocation24], 48
    $region181: #{tpu_custom_call.1} parent=1 // pred_fallthru
      _
    // Predicated region
    $region182: #{tpu_custom_call.1} parent=1 // pred_check
      _
    $region183: #{tpu_custom_call.1} parent=1 // pred_check_branch
      %420 = sbr.rel (0) target = $region185
    $region184: #{tpu_custom_call.1} parent=1 // pred_region
      %421 = dma.done [#allocation27], 48
    $region185: #{tpu_custom_call.1} parent=1 // pred_fallthru
      _
    // Predicated region
    $region186: #{tpu_custom_call.1} parent=1 // pred_check
      _
    $region187: #{tpu_custom_call.1} parent=1 // pred_check_branch
      %423 = sbr.rel (0) target = $region189
    $region188: #{tpu_custom_call.1} parent=1 // pred_region
      %424 = dma.done [#allocation27], 48
    $region189: #{tpu_custom_call.1} parent=1 // pred_fallthru
      _
    // Predicated region
    $region190: #{tpu_custom_call.1} parent=1 // pred_check
      _
    $region191: #{tpu_custom_call.1} parent=1 // pred_check_branch
      %426 = sbr.rel (0) target = $region193
    $region192: #{tpu_custom_call.1} parent=1 // pred_region
      %427 = dma.done [#allocation30], 1536
    $region193: #{tpu_custom_call.1} parent=1 // pred_fallthru
      _
    // Predicated region
    $region194: #{tpu_custom_call.1} parent=1 // pred_check
      _
    $region195: #{tpu_custom_call.1} parent=1 // pred_check_branch
      %429 = sbr.rel (0) target = $region197
    $region196: #{tpu_custom_call.1} parent=1 // pred_region
      %430 = dma.done [#allocation30], 768
    $region197: #{tpu_custom_call.1} parent=1 // pred_fallthru
      _
    // Predicated region
    $region198: #{tpu_custom_call.1} parent=1 // pred_check
      _
    $region199: #{tpu_custom_call.1} parent=1 // pred_check_branch
      %432 = sbr.rel (0) target = $region201
    $region200: #{tpu_custom_call.1} parent=1 // pred_region
      %433 = dma.done [#allocation33], 960
    $region201: #{tpu_custom_call.1} parent=1 // pred_fallthru
      _
    // Predicated region
    $region202: #{tpu_custom_call.1} parent=1 // pred_check
      _
    $region203: #{tpu_custom_call.1} parent=1 // pred_check_branch
      %435 = sbr.rel (0) target = $region205
    $region204: #{tpu_custom_call.1} parent=1 // pred_region
      %436 = dma.done [#allocation33], 768
    $region205: #{tpu_custom_call.1} parent=1 // pred_fallthru
      _
    // Predicated region
    $region206: #{tpu_custom_call.1} parent=1 // pred_check
      _
    $region207: #{tpu_custom_call.1} parent=1 // pred_check_branch
      %438 = sbr.rel (0) target = $region209
    $region208: #{tpu_custom_call.1} parent=1 // pred_region
      %439 = dma.done [#allocation36], 960
    $region209: #{tpu_custom_call.1} parent=1 // pred_fallthru
      _
    // Predicated region
    $region210: #{tpu_custom_call.1} parent=1 // pred_check
      _
    $region211: #{tpu_custom_call.1} parent=1 // pred_check_branch
      %441 = sbr.rel (0) target = $region213
    $region212: #{tpu_custom_call.1} parent=1 // pred_region
      %442 = dma.done [#allocation36], 768
    $region213: #{tpu_custom_call.1} parent=1 // pred_fallthru
      _
    // Predicated region
    $region214: #{tpu_custom_call.1} parent=1 // pred_check
      _
    $region215: #{tpu_custom_call.1} parent=1 // pred_check_branch
      %444 = sbr.rel (0) target = $region217
    $region216: #{tpu_custom_call.1} parent=1 // pred_region
      %445 = dma.done [#allocation39], 384
    $region217: #{tpu_custom_call.1} parent=1 // pred_fallthru
      _
    %v447 = vld [vmem:[%s3] sm:$0xf]
    %v448 = vld [vmem:[%s3 + $0x4] sm:$0xf]
    %v449 = vld [vmem:[%s3 + $0x8] sm:$0xf]
    %v450 = vld [vmem:[%s3 + $0xc] sm:$0xf]
    %v451 = vld [vmem:[%s3 + $0x10] sm:$0xf]
    %v452 = vld [vmem:[%s3 + $0x14] sm:$0xf]
    %v453 = vld [vmem:[%s3 + $0x18] sm:$0x1]
    %v454 = vld [vmem:[#allocation7] sm:$0xf]
    %v455 = vld [vmem:[#allocation7 + $0x4] sm:$0x1]
    %v456 = vld [vmem:[#allocation10] sm:$0xff]
    %v457 = vld [vmem:[#allocation10 + $0x8] sm:$0x3]
    %v458 = vmul.f32 %v456, 1e+08
    %v459 = vmul.f32 %v457, 1e+08
    %v460 = vld [vmem:[#allocation13] sm:$0xff]
    %v461 = vld [vmem:[#allocation13 + $0x8] sm:$0x3]
    %v462 = vld [vmem:[%s17] sm:$0xff]
    %v463 = vld [vmem:[%s17 + $0x8] sm:$0xff]
    %v464 = vld [vmem:[%s17 + $0x10] sm:$0xff]
    %v465 = vld [vmem:[%s17 + $0x18] sm:$0xff]
    %v466 = vld [vmem:[%s17 + $0x20] sm:$0xff]
    %v467 = vld [vmem:[%s17 + $0x28] sm:$0xff]
    %v468 = vld [vmem:[%s17 + $0x30] sm:$0x3]
    %v469 = vld [vmem:[#allocation2] sm:$0xf]
    %v470 = vld [vmem:[#allocation2 + $0x4] sm:$0x1]
    %v478 = vunpack.c.l.b16 %v447
    %v479 = vunpack.c.l.b16 %v448
    %v480 = vunpack.c.l.b16 %v449
    %v481 = vunpack.c.l.b16 %v450
    %v482 = vunpack.c.l.b16 %v451
    %v483 = vunpack.c.l.b16 %v452
    %v484 = vunpack.c.l.b16 %v453
    %v485 = vpack.c.b16 %v479, %v478
    %v486 = vpack.c.b16 %v481, %v480
    %v487 = vpack.c.b16 %v483, %v482
    %v488 = vpack.c.b16 %v484, %v484
    %v491 = vunpack.c.l.b16 %v469
    %v492 = vunpack.c.l.b16 %v470
    %v493 = vpack.c.b16 %v492, %v491
    %vm494 = vcmask 80896
    %v496 = vsel %vm494, %v485, 0
    %v499 = vsel %vm494, %v486, 0
    %v502 = vsel %vm494, %v487, 0
    %v505 = vsel %vm494, %v488, 0
    %vm507 = vcmask 1044480
    %v509 = vsel %vm507, %v493, 0
    %511 = vmatprep.subr.bf16.mxu0 0
    %512 = vmatpush1.bf16.msra.mxu0 0
    %513 = vmatprep.subr.bf16.mxu0 0
    %514 = vmatpush1.bf16.msra.mxu0 0
    %515 = vmatprep.subr.bf16.mxu0 0
    %516 = vmatpush1.bf16.msra.mxu0 0
    %517 = vmatprep.subr.bf16.mxu0 0
    %518 = vmatpush1.bf16.msra.mxu0 0
    %519 = vmatprep.subr.bf16.mxu0 0
    %520 = vmatpush1.bf16.msra.mxu0 0
    %521 = vmatprep.subr.bf16.mxu0 0
    %522 = vmatpush1.bf16.msra.mxu0 0
    %523 = vmatprep.subr.bf16.mxu0 0
    %524 = vmatpush1.bf16.msra.mxu0 0
    %525 = vmatprep.subr.bf16.mxu0 0
    %526 = vmatpush1.bf16.msra.mxu0 %v509
    %527 = vmatprep.subr.bf16.mxu0 0
    %528 = vmatpush2.bf16.msra.mxu0 0
    %529 = vmatprep.subr.bf16.mxu0 0
    %530 = vmatpush2.bf16.msra.mxu0 0
    %531 = vmatprep.subr.bf16.mxu0 0
    %532 = vmatpush2.bf16.msra.mxu0 0
    %533 = vmatprep.subr.bf16.mxu0 0
    %534 = vmatpush2.bf16.msra.mxu0 0
    %535 = vmatprep.subr.bf16.mxu0 0
    %536 = vmatpush2.bf16.msra.mxu0 0
    %537 = vmatprep.subr.bf16.mxu0 0
    %538 = vmatpush2.bf16.msra.mxu0 0
    %539 = vmatprep.subr.bf16.mxu0 0
    %540 = vmatpush2.bf16.msra.mxu0 0
    %541 = vmatprep.subr.bf16.mxu0 0
    %542 = vmatpush2.bf16.msra.mxu0 0
    %543 = vmatprep.mubr.bf16.mxu0 0
    %544 = vmatmul.mubr.bf16.gmra.mxu0 %v496
    %v545 = vpop.f32.mrf.mxu0
    %v546 = vadd.f32 0.0, %v545
    %v547 = vpop.f32.mrf.mxu0
    %v548 = vpop.f32.mrf.mxu0
    %v549 = vadd.f32 0.0, %v548
    %v550 = vpop.f32.mrf.mxu0
    %551 = vmatprep.mubr.bf16.mxu0 0
    %552 = vmatmul.mubr.bf16.gmra.mxu0 %v499
    %v553 = vpop.f32.mrf.mxu0
    %v554 = vadd.f32 0.0, %v553
    %v555 = vpop.f32.mrf.mxu0
    %v556 = vpop.f32.mrf.mxu0
    %v557 = vadd.f32 0.0, %v556
    %v558 = vpop.f32.mrf.mxu0
    %559 = vmatprep.mubr.bf16.mxu0 0
    %560 = vmatmul.mubr.bf16.gmra.mxu0 %v502
    %v561 = vpop.f32.mrf.mxu0
    %v562 = vadd.f32 0.0, %v561
    %v563 = vpop.f32.mrf.mxu0
    %v564 = vpop.f32.mrf.mxu0
    %v565 = vadd.f32 0.0, %v564
    %v566 = vpop.f32.mrf.mxu0
    %567 = vmatprep.mubr.bf16.mxu0 0
    %568 = vmatmul.mubr.bf16.gmra.mxu0 %v505
    %v569 = vpop.f32.mrf.mxu0
    %v570 = vadd.f32 0.0, %v569
    %v571 = vpop.f32.mrf.mxu0
    %v572 = vpop.f32.mrf.mxu0
    %v573 = vpop.f32.mrf.mxu0
    %574 = vdwg.mxu0
    %v575 = vand.u32 2147483647, %v546
    %v576 = vand.u32 2147483647, %v549
    %v577 = vand.u32 2147483647, %v554
    %v578 = vand.u32 2147483647, %v557
    %v579 = vand.u32 2147483647, %v562
    %v580 = vand.u32 2147483647, %v565
    %v581 = vand.u32 2147483647, %v570
    %v582 = vpack.c.bf16 %v576, %v575
    %v583 = vpack.c.bf16 %v578, %v577
    %v584 = vpack.c.bf16 %v580, %v579
    %v585 = vpack.c.bf16 %v581, %v581
    %v588 = vunpack.c.l.b16 %v454
    %v589 = vunpack.c.l.b16 %v455
    %v590 = vpack.c.b16 %v589, %v588
    %v592 = vsel %vm494, %v590, 0
    %594 = vmatprep.subr.bf16.mxu0 0
    %595 = vmatpush1.bf16.msra.mxu0 0
    %596 = vmatprep.subr.bf16.mxu0 0
    %597 = vmatpush1.bf16.msra.mxu0 0
    %598 = vmatprep.subr.bf16.mxu0 0
    %599 = vmatpush1.bf16.msra.mxu0 0
    %600 = vmatprep.subr.bf16.mxu0 0
    %601 = vmatpush1.bf16.msra.mxu0 0
    %602 = vmatprep.subr.bf16.mxu0 0
    %603 = vmatpush1.bf16.msra.mxu0 0
    %604 = vmatprep.subr.bf16.mxu0 0
    %605 = vmatpush1.bf16.msra.mxu0 0
    %606 = vmatprep.subr.bf16.mxu0 0
    %607 = vmatpush1.bf16.msra.mxu0 0
    %608 = vmatprep.subr.bf16.mxu0 0
    %609 = vmatpush1.bf16.msra.mxu0 %v509
    %610 = vmatprep.subr.bf16.mxu0 0
    %611 = vmatpush2.bf16.msra.mxu0 0
    %612 = vmatprep.subr.bf16.mxu0 0
    %613 = vmatpush2.bf16.msra.mxu0 0
    %614 = vmatprep.subr.bf16.mxu0 0
    %615 = vmatpush2.bf16.msra.mxu0 0
    %616 = vmatprep.subr.bf16.mxu0 0
    %617 = vmatpush2.bf16.msra.mxu0 0
    %618 = vmatprep.subr.bf16.mxu0 0
    %619 = vmatpush2.bf16.msra.mxu0 0
    %620 = vmatprep.subr.bf16.mxu0 0
    %621 = vmatpush2.bf16.msra.mxu0 0
    %622 = vmatprep.subr.bf16.mxu0 0
    %623 = vmatpush2.bf16.msra.mxu0 0
    %624 = vmatprep.subr.bf16.mxu0 0
    %625 = vmatpush2.bf16.msra.mxu0 0
    %626 = vmatprep.mubr.bf16.mxu0 0
    %627 = vmatmul.mubr.bf16.gmra.mxu0 %v592
    %v628 = vpop.f32.mrf.mxu0
    %v629 = vadd.f32 0.0, %v628
    %v630 = vpop.f32.mrf.mxu0
    %v631 = vpop.f32.mrf.mxu0
    %v632 = vadd.f32 0.0, %v631
    %v633 = vpop.f32.mrf.mxu0
    %634 = vdwg.mxu0
    %v635 = vpack.c.bf16 %v632, %v629
    %v636 = vld [vmem:[%s31] sm:$0x3]
    %v637 = vld [vmem:[%s43] sm:$0xff]
    %v638 = vld [vmem:[%s43 + $0x8] sm:$0xff]
    %v639 = vld [vmem:[%s43 + $0x10] sm:$0xff]
    %v640 = vld [vmem:[%s43 + $0x18] sm:$0xff]
    %v641 = vld [vmem:[%s43 + $0x20] sm:$0x33]
    %v647 = vunpack.c.l.b16 %v637
    %v648 = vunpack.c.h.b16 %v637
    %v649 = vunpack.c.l.b16 %v638
    %v650 = vunpack.c.h.b16 %v638
    %v651 = vunpack.c.l.b16 %v639
    %v652 = vunpack.c.h.b16 %v639
    %v653 = vunpack.c.l.b16 %v640
    %v654 = vunpack.c.h.b16 %v640
    %v655 = vunpack.c.l.b16 %v641
    %v656 = vunpack.c.h.b16 %v641
    %v657 = vpack.c.b16 %v649, %v647
    %v658 = vpack.c.b16 %v650, %v648
    %v659 = vpack.c.b16 %v653, %v651
    %v660 = vpack.c.b16 %v654, %v652
    %v661 = vpack.c.b16 %v655, %v655
    %v662 = vpack.c.b16 %v656, %v656
    %vm667 = vcmask 293888
    %v669 = vsel %vm667, %v582, 0
    %v672 = vsel %vm667, %v583, 0
    %v675 = vsel %vm667, %v584, 0
    %v678 = vsel %vm667, %v585, 0
    %vm680 = vcmask 1041408
    %v682 = vsel %vm680, %v661, 0
    %v685 = vsel %vm680, %v662, 0
    %687 = vmatprep.subr.bf16.mxu0 0
    %688 = vmatpush1.bf16.msra.mxu0 0
    %689 = vmatprep.subr.bf16.mxu0 0
    %690 = vmatpush1.bf16.msra.mxu0 0
    %691 = vmatprep.subr.bf16.mxu0 0
    %692 = vmatpush1.bf16.msra.mxu0 0
    %693 = vmatprep.subr.bf16.mxu0 0
    %694 = vmatpush1.bf16.msra.mxu0 0
    %695 = vmatprep.subr.bf16.mxu0 0
    %696 = vmatpush1.bf16.msra.mxu0 0
    %697 = vmatprep.subr.bf16.mxu0 %v685
    %698 = vmatpush1.bf16.msra.mxu0 %v682
    %699 = vmatprep.subr.bf16.mxu0 %v660
    %700 = vmatpush1.bf16.msra.mxu0 %v659
    %701 = vmatprep.subr.bf16.mxu0 %v658
    %702 = vmatpush1.bf16.msra.mxu0 %v657
    %703 = vmatprep.subr.bf16.mxu0 0
    %704 = vmatpush2.bf16.msra.mxu0 0
    %705 = vmatprep.subr.bf16.mxu0 0
    %706 = vmatpush2.bf16.msra.mxu0 0
    %707 = vmatprep.subr.bf16.mxu0 0
    %708 = vmatpush2.bf16.msra.mxu0 0
    %709 = vmatprep.subr.bf16.mxu0 0
    %710 = vmatpush2.bf16.msra.mxu0 0
    %711 = vmatprep.subr.bf16.mxu0 0
    %712 = vmatpush2.bf16.msra.mxu0 0
    %713 = vmatprep.subr.bf16.mxu0 0
    %714 = vmatpush2.bf16.msra.mxu0 0
    %715 = vmatprep.subr.bf16.mxu0 0
    %716 = vmatpush2.bf16.msra.mxu0 0
    %717 = vmatprep.subr.bf16.mxu0 0
    %718 = vmatpush2.bf16.msra.mxu0 0
    %719 = vmatprep.mubr.bf16.mxu0 0
    %720 = vmatmul.mubr.bf16.gmra.mxu0 %v669
    %v721 = vpop.f32.mrf.mxu0
    %v722 = vadd.f32 0.0, %v721
    %v723 = vpop.f32.mrf.mxu0
    %v724 = vadd.f32 0.0, %v723
    %v725 = vpop.f32.mrf.mxu0
    %v726 = vadd.f32 0.0, %v725
    %v727 = vpop.f32.mrf.mxu0
    %v728 = vadd.f32 0.0, %v727
    %729 = vmatprep.mubr.bf16.mxu0 0
    %730 = vmatmul.mubr.bf16.gmra.mxu0 %v672
    %v731 = vpop.f32.mrf.mxu0
    %v732 = vadd.f32 0.0, %v731
    %v733 = vpop.f32.mrf.mxu0
    %v734 = vadd.f32 0.0, %v733
    %v735 = vpop.f32.mrf.mxu0
    %v736 = vadd.f32 0.0, %v735
    %v737 = vpop.f32.mrf.mxu0
    %v738 = vadd.f32 0.0, %v737
    %739 = vmatprep.mubr.bf16.mxu0 0
    %740 = vmatmul.mubr.bf16.gmra.mxu0 %v675
    %v741 = vpop.f32.mrf.mxu0
    %v742 = vadd.f32 0.0, %v741
    %v743 = vpop.f32.mrf.mxu0
    %v744 = vadd.f32 0.0, %v743
    %v745 = vpop.f32.mrf.mxu0
    %v746 = vadd.f32 0.0, %v745
    %v747 = vpop.f32.mrf.mxu0
    %v748 = vadd.f32 0.0, %v747
    %749 = vmatprep.mubr.bf16.mxu0 0
    %750 = vmatmul.mubr.bf16.gmra.mxu0 %v678
    %v751 = vpop.f32.mrf.mxu0
    %v752 = vadd.f32 0.0, %v751
    %v753 = vpop.f32.mrf.mxu0
    %v754 = vadd.f32 0.0, %v753
    %v755 = vpop.f32.mrf.mxu0
    %v756 = vpop.f32.mrf.mxu0
    %757 = vdwg.mxu0
    %v759 = vlaneseq
    %v760 = vshrl.u32 %v759, 7
    %v761 = vsub.s32 0, %v760
    %v762 = vrot.slane %v636, %v761
    %v763 = vlaneseq
    %v764 = vshrl.u32 %v763, 7
    %v765 = vsub.s32 1, %v764
    %v766 = vrot.slane %v636, %v765
    %v769 = vadd.f32 %v762, %v722
    %v770 = vadd.f32 %v766, %v724
    %v771 = vadd.f32 %v762, %v726
    %v772 = vadd.f32 %v766, %v728
    %v773 = vadd.f32 %v762, %v732
    %v774 = vadd.f32 %v766, %v734
    %v775 = vadd.f32 %v762, %v736
    %v776 = vadd.f32 %v766, %v738
    %v777 = vadd.f32 %v762, %v742
    %v778 = vadd.f32 %v766, %v744
    %v779 = vadd.f32 %v762, %v746
    %v780 = vadd.f32 %v766, %v748
    %v781 = vadd.f32 %v762, %v752
    %v782 = vadd.f32 %v766, %v754
    %vm783 = vcmp.ge.f32.partialorder %v769, 0.0
    %vm784 = vcmp.ge.f32.partialorder %v770, 0.0
    %vm785 = vcmp.ge.f32.partialorder %v771, 0.0
    %vm786 = vcmp.ge.f32.partialorder %v772, 0.0
    %vm787 = vcmp.ge.f32.partialorder %v773, 0.0
    %vm788 = vcmp.ge.f32.partialorder %v774, 0.0
    %vm789 = vcmp.ge.f32.partialorder %v775, 0.0
    %vm790 = vcmp.ge.f32.partialorder %v776, 0.0
    %vm791 = vcmp.ge.f32.partialorder %v777, 0.0
    %vm792 = vcmp.ge.f32.partialorder %v778, 0.0
    %vm793 = vcmp.ge.f32.partialorder %v779, 0.0
    %vm794 = vcmp.ge.f32.partialorder %v780, 0.0
    %vm795 = vcmp.ge.f32.partialorder %v781, 0.0
    %vm796 = vcmp.ge.f32.partialorder %v782, 0.0
    %v797 = vmul.f32 %v769, 0.01
    %v798 = vmul.f32 %v770, 0.01
    %v799 = vmul.f32 %v771, 0.01
    %v800 = vmul.f32 %v772, 0.01
    %v801 = vmul.f32 %v773, 0.01
    %v802 = vmul.f32 %v774, 0.01
    %v803 = vmul.f32 %v775, 0.01
    %v804 = vmul.f32 %v776, 0.01
    %v805 = vmul.f32 %v777, 0.01
    %v806 = vmul.f32 %v778, 0.01
    %v807 = vmul.f32 %v779, 0.01
    %v808 = vmul.f32 %v780, 0.01
    %v809 = vmul.f32 %v781, 0.01
    %v810 = vmul.f32 %v782, 0.01
    %v811 = vsel %vm783, %v769, %v797
    %v812 = vsel %vm784, %v770, %v798
    %v813 = vsel %vm785, %v771, %v799
    %v814 = vsel %vm786, %v772, %v800
    %v815 = vsel %vm787, %v773, %v801
    %v816 = vsel %vm788, %v774, %v802
    %v817 = vsel %vm789, %v775, %v803
    %v818 = vsel %vm790, %v776, %v804
    %v819 = vsel %vm791, %v777, %v805
    %v820 = vsel %vm792, %v778, %v806
    %v821 = vsel %vm793, %v779, %v807
    %v822 = vsel %vm794, %v780, %v808
    %v823 = vsel %vm795, %v781, %v809
    %v824 = vsel %vm796, %v782, %v810
    %v825 = vpack.c.bf16 %v813, %v811
    %v826 = vpack.c.bf16 %v814, %v812
    %v827 = vpack.c.bf16 %v817, %v815
    %v828 = vpack.c.bf16 %v818, %v816
    %v829 = vpack.c.bf16 %v821, %v819
    %v830 = vpack.c.bf16 %v822, %v820
    %v831 = vpack.c.bf16 %v823, %v823
    %v832 = vpack.c.bf16 %v824, %v824
    %v833 = vld [vmem:[#allocation17] sm:$0xff]
    %v834 = vld [vmem:[#allocation17 + $0x8] sm:$0xff]
    %v835 = vld [vmem:[#allocation17 + $0x10] sm:$0xff]
    %v836 = vld [vmem:[#allocation17 + $0x18] sm:$0xff]
    %v837 = vld [vmem:[#allocation17 + $0x20] sm:$0xff]
    %v838 = vld [vmem:[#allocation17 + $0x28] sm:$0xff]
    %v839 = vld [vmem:[#allocation17 + $0x30] sm:$0xff]
    %v840 = vld [vmem:[#allocation17 + $0x38] sm:$0xff]
    %v841 = vld [vmem:[#allocation17 + $0x40] sm:$0xff]
    %v842 = vld [vmem:[#allocation17 + $0x48] sm:$0xff]
    %v843 = vld [vmem:[#allocation17 + $0x50] sm:$0xff]
    %v844 = vld [vmem:[#allocation17 + $0x58] sm:$0xff]
    %v845 = vld [vmem:[#allocation17 + $0x60] sm:$0xff]
    %v846 = vld [vmem:[#allocation17 + $0x68] sm:$0xff]
    %v847 = vld [vmem:[#allocation17 + $0x70] sm:$0xff]
    %v848 = vld [vmem:[#allocation17 + $0x78] sm:$0xff]
    %v849 = vld [vmem:[#allocation17 + $0x80] sm:$0xff]
    %v850 = vld [vmem:[#allocation17 + $0x88] sm:$0xff]
    %v851 = vld [vmem:[#allocation17 + $0x90] sm:$0xff]
    %v852 = vld [vmem:[#allocation17 + $0x98] sm:$0xff]
    %v853 = vld [vmem:[#allocation17 + $0xa0] sm:$0xff]
    %v854 = vld [vmem:[#allocation17 + $0xa8] sm:$0xff]
    %v855 = vld [vmem:[#allocation17 + $0xb0] sm:$0xff]
    %v856 = vld [vmem:[#allocation17 + $0xb8] sm:$0xff]
    %v857 = vld [vmem:[#allocation23] sm:$0x3]
    %v859 = vlaneseq
    %v860 = vshrl.u32 %v859, 7
    %v861 = vsub.s32 0, %v860
    %v862 = vrot.slane %v857, %v861
    %v863 = vlaneseq
    %v864 = vshrl.u32 %v863, 7
    %v865 = vsub.s32 1, %v864
    %v866 = vrot.slane %v857, %v865
    %v893 = vunpack.c.l.b16 %v833
    %v894 = vunpack.c.h.b16 %v833
    %v895 = vunpack.c.l.b16 %v834
    %v896 = vunpack.c.h.b16 %v834
    %v897 = vunpack.c.l.b16 %v835
    %v898 = vunpack.c.h.b16 %v835
    %v899 = vunpack.c.l.b16 %v836
    %v900 = vunpack.c.h.b16 %v836
    %v901 = vunpack.c.l.b16 %v837
    %v902 = vunpack.c.h.b16 %v837
    %v903 = vunpack.c.l.b16 %v838
    %v904 = vunpack.c.h.b16 %v838
    %v905 = vunpack.c.l.b16 %v839
    %v906 = vunpack.c.h.b16 %v839
    %v907 = vunpack.c.l.b16 %v840
    %v908 = vunpack.c.h.b16 %v840
    %v909 = vunpack.c.l.b16 %v841
    %v910 = vunpack.c.h.b16 %v841
    %v911 = vunpack.c.l.b16 %v842
    %v912 = vunpack.c.h.b16 %v842
    %v913 = vunpack.c.l.b16 %v843
    %v914 = vunpack.c.h.b16 %v843
    %v915 = vunpack.c.l.b16 %v844
    %v916 = vunpack.c.h.b16 %v844
    %v917 = vunpack.c.l.b16 %v845
    %v918 = vunpack.c.h.b16 %v845
    %v919 = vunpack.c.l.b16 %v846
    %v920 = vunpack.c.h.b16 %v846
    %v921 = vunpack.c.l.b16 %v847
    %v922 = vunpack.c.h.b16 %v847
    %v923 = vunpack.c.l.b16 %v848
    %v924 = vunpack.c.h.b16 %v848
    %v925 = vunpack.c.l.b16 %v849
    %v926 = vunpack.c.h.b16 %v849
    %v927 = vunpack.c.l.b16 %v850
    %v928 = vunpack.c.h.b16 %v850
    %v929 = vunpack.c.l.b16 %v851
    %v930 = vunpack.c.h.b16 %v851
    %v931 = vunpack.c.l.b16 %v852
    %v932 = vunpack.c.h.b16 %v852
    %v933 = vunpack.c.l.b16 %v853
    %v934 = vunpack.c.h.b16 %v853
    %v935 = vunpack.c.l.b16 %v854
    %v936 = vunpack.c.h.b16 %v854
    %v937 = vunpack.c.l.b16 %v855
    %v938 = vunpack.c.h.b16 %v855
    %v939 = vunpack.c.l.b16 %v856
    %v940 = vunpack.c.h.b16 %v856
    %v941 = vpack.c.b16 %v895, %v893
    %v942 = vpack.c.b16 %v896, %v894
    %v943 = vpack.c.b16 %v899, %v897
    %v944 = vpack.c.b16 %v900, %v898
    %v945 = vpack.c.b16 %v903, %v901
    %v946 = vpack.c.b16 %v904, %v902
    %v947 = vpack.c.b16 %v907, %v905
    %v948 = vpack.c.b16 %v908, %v906
    %v949 = vpack.c.b16 %v911, %v909
    %v950 = vpack.c.b16 %v912, %v910
    %v951 = vpack.c.b16 %v915, %v913
    %v952 = vpack.c.b16 %v916, %v914
    %v953 = vpack.c.b16 %v919, %v917
    %v954 = vpack.c.b16 %v920, %v918
    %v955 = vpack.c.b16 %v923, %v921
    %v956 = vpack.c.b16 %v924, %v922
    %v957 = vpack.c.b16 %v927, %v925
    %v958 = vpack.c.b16 %v928, %v926
    %v959 = vpack.c.b16 %v931, %v929
    %v960 = vpack.c.b16 %v932, %v930
    %v961 = vpack.c.b16 %v935, %v933
    %v962 = vpack.c.b16 %v936, %v934
    %v963 = vpack.c.b16 %v939, %v937
    %v964 = vpack.c.b16 %v940, %v938
    %vm989 = vcmask 523264
    %v991 = vsel %vm989, %v826, 0
    %v994 = vsel %vm989, %v828, 0
    %v997 = vsel %vm989, %v830, 0
    %v1000 = vsel %vm989, %v832, 0
    %1002 = vmatprep.subr.bf16.mxu0 %v956
    %1003 = vmatpush1.bf16.msra.mxu0 %v955
    %1004 = vmatprep.subr.bf16.mxu0 %v954
    %1005 = vmatpush1.bf16.msra.mxu0 %v953
    %1006 = vmatprep.subr.bf16.mxu0 %v952
    %1007 = vmatpush1.bf16.msra.mxu0 %v951
    %1008 = vmatprep.subr.bf16.mxu0 %v950
    %1009 = vmatpush1.bf16.msra.mxu0 %v949
    %1010 = vmatprep.subr.bf16.mxu0 %v948
    %1011 = vmatpush1.bf16.msra.mxu0 %v947
    %1012 = vmatprep.subr.bf16.mxu0 %v946
    %1013 = vmatpush1.bf16.msra.mxu0 %v945
    %1014 = vmatprep.subr.bf16.mxu0 %v944
    %1015 = vmatpush1.bf16.msra.mxu0 %v943
    %1016 = vmatprep.subr.bf16.mxu0 %v942
    %1017 = vmatpush1.bf16.msra.mxu0 %v941
    %1018 = vmatprep.subr.bf16.mxu0 0
    %1019 = vmatpush2.bf16.msra.mxu0 0
    %1020 = vmatprep.subr.bf16.mxu0 0
    %1021 = vmatpush2.bf16.msra.mxu0 0
    %1022 = vmatprep.subr.bf16.mxu0 0
    %1023 = vmatpush2.bf16.msra.mxu0 0
    %1024 = vmatprep.subr.bf16.mxu0 0
    %1025 = vmatpush2.bf16.msra.mxu0 0
    %1026 = vmatprep.subr.bf16.mxu0 %v964
    %1027 = vmatpush2.bf16.msra.mxu0 %v963
    %1028 = vmatprep.subr.bf16.mxu0 %v962
    %1029 = vmatpush2.bf16.msra.mxu0 %v961
    %1030 = vmatprep.subr.bf16.mxu0 %v960
    %1031 = vmatpush2.bf16.msra.mxu0 %v959
    %1032 = vmatprep.subr.bf16.mxu0 %v958
    %1033 = vmatpush2.bf16.msra.mxu0 %v957
    %1034 = vmatprep.mubr.bf16.mxu0 %v991
    %1035 = vmatmul.mubr.bf16.gmra.mxu0 %v825
    %v1036 = vpop.f32.mrf.mxu0
    %v1037 = vadd.f32 %v862, %v1036
    %v1038 = vpop.f32.mrf.mxu0
    %v1039 = vadd.f32 %v866, %v1038
    %v1040 = vpop.f32.mrf.mxu0
    %v1041 = vadd.f32 %v862, %v1040
    %v1042 = vpop.f32.mrf.mxu0
    %v1043 = vadd.f32 %v866, %v1042
    %1044 = vmatprep.mubr.bf16.mxu0 %v994
    %1045 = vmatmul.mubr.bf16.gmra.mxu0 %v827
    %v1046 = vpop.f32.mrf.mxu0
    %v1047 = vadd.f32 %v862, %v1046
    %v1048 = vpop.f32.mrf.mxu0
    %v1049 = vadd.f32 %v866, %v1048
    %v1050 = vpop.f32.mrf.mxu0
    %v1051 = vadd.f32 %v862, %v1050
    %v1052 = vpop.f32.mrf.mxu0
    %v1053 = vadd.f32 %v866, %v1052
    %1054 = vmatprep.mubr.bf16.mxu0 %v997
    %1055 = vmatmul.mubr.bf16.gmra.mxu0 %v829
    %v1056 = vpop.f32.mrf.mxu0
    %v1057 = vadd.f32 %v862, %v1056
    %v1058 = vpop.f32.mrf.mxu0
    %v1059 = vadd.f32 %v866, %v1058
    %v1060 = vpop.f32.mrf.mxu0
    %v1061 = vadd.f32 %v862, %v1060
    %v1062 = vpop.f32.mrf.mxu0
    %v1063 = vadd.f32 %v866, %v1062
    %1064 = vmatprep.mubr.bf16.mxu0 %v1000
    %1065 = vmatmul.mubr.bf16.gmra.mxu0 %v831
    %v1066 = vpop.f32.mrf.mxu0
    %v1067 = vadd.f32 %v862, %v1066
    %v1068 = vpop.f32.mrf.mxu0
    %v1069 = vadd.f32 %v866, %v1068
    %v1070 = vpop.f32.mrf.mxu0
    %v1071 = vpop.f32.mrf.mxu0
    %1072 = vdwg.mxu0
    %vm1073 = vcmp.ge.f32.partialorder %v1037, 0.0
    %vm1074 = vcmp.ge.f32.partialorder %v1039, 0.0
    %vm1075 = vcmp.ge.f32.partialorder %v1041, 0.0
    %vm1076 = vcmp.ge.f32.partialorder %v1043, 0.0
    %vm1077 = vcmp.ge.f32.partialorder %v1047, 0.0
    %vm1078 = vcmp.ge.f32.partialorder %v1049, 0.0
    %vm1079 = vcmp.ge.f32.partialorder %v1051, 0.0
    %vm1080 = vcmp.ge.f32.partialorder %v1053, 0.0
    %vm1081 = vcmp.ge.f32.partialorder %v1057, 0.0
    %vm1082 = vcmp.ge.f32.partialorder %v1059, 0.0
    %vm1083 = vcmp.ge.f32.partialorder %v1061, 0.0
    %vm1084 = vcmp.ge.f32.partialorder %v1063, 0.0
    %vm1085 = vcmp.ge.f32.partialorder %v1067, 0.0
    %vm1086 = vcmp.ge.f32.partialorder %v1069, 0.0
    %v1087 = vmul.f32 %v1037, 0.01
    %v1088 = vmul.f32 %v1039, 0.01
    %v1089 = vmul.f32 %v1041, 0.01
    %v1090 = vmul.f32 %v1043, 0.01
    %v1091 = vmul.f32 %v1047, 0.01
    %v1092 = vmul.f32 %v1049, 0.01
    %v1093 = vmul.f32 %v1051, 0.01
    %v1094 = vmul.f32 %v1053, 0.01
    %v1095 = vmul.f32 %v1057, 0.01
    %v1096 = vmul.f32 %v1059, 0.01
    %v1097 = vmul.f32 %v1061, 0.01
    %v1098 = vmul.f32 %v1063, 0.01
    %v1099 = vmul.f32 %v1067, 0.01
    %v1100 = vmul.f32 %v1069, 0.01
    %v1101 = vsel %vm1073, %v1037, %v1087
    %v1102 = vsel %vm1074, %v1039, %v1088
    %v1103 = vsel %vm1075, %v1041, %v1089
    %v1104 = vsel %vm1076, %v1043, %v1090
    %v1105 = vsel %vm1077, %v1047, %v1091
    %v1106 = vsel %vm1078, %v1049, %v1092
    %v1107 = vsel %vm1079, %v1051, %v1093
    %v1108 = vsel %vm1080, %v1053, %v1094
    %v1109 = vsel %vm1081, %v1057, %v1095
    %v1110 = vsel %vm1082, %v1059, %v1096
    %v1111 = vsel %vm1083, %v1061, %v1097
    %v1112 = vsel %vm1084, %v1063, %v1098
    %v1113 = vsel %vm1085, %v1067, %v1099
    %v1114 = vsel %vm1086, %v1069, %v1100
    %v1115 = vpack.c.bf16 %v1103, %v1101
    %v1116 = vpack.c.bf16 %v1104, %v1102
    %v1117 = vpack.c.bf16 %v1107, %v1105
    %v1118 = vpack.c.bf16 %v1108, %v1106
    %v1119 = vpack.c.bf16 %v1111, %v1109
    %v1120 = vpack.c.bf16 %v1112, %v1110
    %v1121 = vpack.c.bf16 %v1113, %v1113
    %v1122 = vpack.c.bf16 %v1114, %v1114
    %v1123 = vld [vmem:[#allocation19] sm:$0xf]
    %v1124 = vld [vmem:[#allocation19 + $0x4] sm:$0xf]
    %v1125 = vld [vmem:[#allocation19 + $0x8] sm:$0xf]
    %v1126 = vld [vmem:[#allocation19 + $0xc] sm:$0xf]
    %v1127 = vld [vmem:[#allocation19 + $0x10] sm:$0xf]
    %v1128 = vld [vmem:[#allocation19 + $0x14] sm:$0xf]
    %v1129 = vld [vmem:[#allocation19 + $0x18] sm:$0xf]
    %v1130 = vld [vmem:[#allocation19 + $0x1c] sm:$0xf]
    %v1131 = vld [vmem:[#allocation19 + $0x20] sm:$0xf]
    %v1132 = vld [vmem:[#allocation19 + $0x24] sm:$0xf]
    %v1133 = vld [vmem:[#allocation19 + $0x28] sm:$0xf]
    %v1134 = vld [vmem:[#allocation19 + $0x2c] sm:$0xf]
    %v1135 = vld [vmem:[#allocation19 + $0x30] sm:$0xf]
    %v1136 = vld [vmem:[#allocation19 + $0x34] sm:$0xf]
    %v1137 = vld [vmem:[#allocation19 + $0x38] sm:$0xf]
    %v1138 = vld [vmem:[#allocation19 + $0x3c] sm:$0xf]
    %v1139 = vld [vmem:[#allocation19 + $0x40] sm:$0xf]
    %v1140 = vld [vmem:[#allocation19 + $0x44] sm:$0xf]
    %v1141 = vld [vmem:[#allocation19 + $0x48] sm:$0xf]
    %v1142 = vld [vmem:[#allocation19 + $0x4c] sm:$0xf]
    %v1143 = vld [vmem:[#allocation19 + $0x50] sm:$0xf]
    %v1144 = vld [vmem:[#allocation19 + $0x54] sm:$0xf]
    %v1145 = vld [vmem:[#allocation19 + $0x58] sm:$0xf]
    %v1146 = vld [vmem:[#allocation19 + $0x5c] sm:$0xf]
    %v1147 = vld [vmem:[#allocation25] sm:$0x1]
    %v1149 = vlaneseq
    %v1150 = vshrl.u32 %v1149, 7
    %v1151 = vsub.s32 0, %v1150
    %v1152 = vrot.slane %v1147, %v1151
    %v1178 = vunpack.c.l.b16 %v1123
    %v1179 = vunpack.c.l.b16 %v1124
    %v1180 = vunpack.c.l.b16 %v1125
    %v1181 = vunpack.c.l.b16 %v1126
    %v1182 = vunpack.c.l.b16 %v1127
    %v1183 = vunpack.c.l.b16 %v1128
    %v1184 = vunpack.c.l.b16 %v1129
    %v1185 = vunpack.c.l.b16 %v1130
    %v1186 = vunpack.c.l.b16 %v1131
    %v1187 = vunpack.c.l.b16 %v1132
    %v1188 = vunpack.c.l.b16 %v1133
    %v1189 = vunpack.c.l.b16 %v1134
    %v1190 = vunpack.c.l.b16 %v1135
    %v1191 = vunpack.c.l.b16 %v1136
    %v1192 = vunpack.c.l.b16 %v1137
    %v1193 = vunpack.c.l.b16 %v1138
    %v1194 = vunpack.c.l.b16 %v1139
    %v1195 = vunpack.c.l.b16 %v1140
    %v1196 = vunpack.c.l.b16 %v1141
    %v1197 = vunpack.c.l.b16 %v1142
    %v1198 = vunpack.c.l.b16 %v1143
    %v1199 = vunpack.c.l.b16 %v1144
    %v1200 = vunpack.c.l.b16 %v1145
    %v1201 = vunpack.c.l.b16 %v1146
    %v1202 = vpack.c.b16 %v1179, %v1178
    %v1203 = vpack.c.b16 %v1181, %v1180
    %v1204 = vpack.c.b16 %v1183, %v1182
    %v1205 = vpack.c.b16 %v1185, %v1184
    %v1206 = vpack.c.b16 %v1187, %v1186
    %v1207 = vpack.c.b16 %v1189, %v1188
    %v1208 = vpack.c.b16 %v1191, %v1190
    %v1209 = vpack.c.b16 %v1193, %v1192
    %v1210 = vpack.c.b16 %v1195, %v1194
    %v1211 = vpack.c.b16 %v1197, %v1196
    %v1212 = vpack.c.b16 %v1199, %v1198
    %v1213 = vpack.c.b16 %v1201, %v1200
    %v1227 = vsel %vm989, %v1116, 0
    %v1230 = vsel %vm989, %v1118, 0
    %v1233 = vsel %vm989, %v1120, 0
    %v1236 = vsel %vm989, %v1122, 0
    %1238 = vmatprep.subr.bf16.mxu0 0
    %1239 = vmatpush1.bf16.msra.mxu0 %v1209
    %1240 = vmatprep.subr.bf16.mxu0 0
    %1241 = vmatpush1.bf16.msra.mxu0 %v1208
    %1242 = vmatprep.subr.bf16.mxu0 0
    %1243 = vmatpush1.bf16.msra.mxu0 %v1207
    %1244 = vmatprep.subr.bf16.mxu0 0
    %1245 = vmatpush1.bf16.msra.mxu0 %v1206
    %1246 = vmatprep.subr.bf16.mxu0 0
    %1247 = vmatpush1.bf16.msra.mxu0 %v1205
    %1248 = vmatprep.subr.bf16.mxu0 0
    %1249 = vmatpush1.bf16.msra.mxu0 %v1204
    %1250 = vmatprep.subr.bf16.mxu0 0
    %1251 = vmatpush1.bf16.msra.mxu0 %v1203
    %1252 = vmatprep.subr.bf16.mxu0 0
    %1253 = vmatpush1.bf16.msra.mxu0 %v1202
    %1254 = vmatprep.subr.bf16.mxu0 0
    %1255 = vmatpush2.bf16.msra.mxu0 0
    %1256 = vmatprep.subr.bf16.mxu0 0
    %1257 = vmatpush2.bf16.msra.mxu0 0
    %1258 = vmatprep.subr.bf16.mxu0 0
    %1259 = vmatpush2.bf16.msra.mxu0 0
    %1260 = vmatprep.subr.bf16.mxu0 0
    %1261 = vmatpush2.bf16.msra.mxu0 0
    %1262 = vmatprep.subr.bf16.mxu0 0
    %1263 = vmatpush2.bf16.msra.mxu0 %v1213
    %1264 = vmatprep.subr.bf16.mxu0 0
    %1265 = vmatpush2.bf16.msra.mxu0 %v1212
    %1266 = vmatprep.subr.bf16.mxu0 0
    %1267 = vmatpush2.bf16.msra.mxu0 %v1211
    %1268 = vmatprep.subr.bf16.mxu0 0
    %1269 = vmatpush2.bf16.msra.mxu0 %v1210
    %1270 = vmatprep.mubr.bf16.mxu0 %v1227
    %1271 = vmatmul.mubr.bf16.gmra.mxu0 %v1115
    %v1272 = vpop.f32.mrf.mxu0
    %v1273 = vadd.f32 %v1152, %v1272
    %v1274 = vpop.f32.mrf.mxu0
    %v1275 = vpop.f32.mrf.mxu0
    %v1276 = vadd.f32 %v1152, %v1275
    %v1277 = vpop.f32.mrf.mxu0
    %1278 = vmatprep.mubr.bf16.mxu0 %v1230
    %1279 = vmatmul.mubr.bf16.gmra.mxu0 %v1117
    %v1280 = vpop.f32.mrf.mxu0
    %v1281 = vadd.f32 %v1152, %v1280
    %v1282 = vpop.f32.mrf.mxu0
    %v1283 = vpop.f32.mrf.mxu0
    %v1284 = vadd.f32 %v1152, %v1283
    %v1285 = vpop.f32.mrf.mxu0
    %1286 = vmatprep.mubr.bf16.mxu0 %v1233
    %1287 = vmatmul.mubr.bf16.gmra.mxu0 %v1119
    %v1288 = vpop.f32.mrf.mxu0
    %v1289 = vadd.f32 %v1152, %v1288
    %v1290 = vpop.f32.mrf.mxu0
    %v1291 = vpop.f32.mrf.mxu0
    %v1292 = vadd.f32 %v1152, %v1291
    %v1293 = vpop.f32.mrf.mxu0
    %1294 = vmatprep.mubr.bf16.mxu0 %v1236
    %1295 = vmatmul.mubr.bf16.gmra.mxu0 %v1121
    %v1296 = vpop.f32.mrf.mxu0
    %v1297 = vadd.f32 %v1152, %v1296
    %v1298 = vpop.f32.mrf.mxu0
    %v1299 = vpop.f32.mrf.mxu0
    %v1300 = vpop.f32.mrf.mxu0
    %1301 = vdwg.mxu0
    %vm1302 = vcmp.ge.f32.partialorder %v1273, 0.0
    %vm1303 = vcmp.ge.f32.partialorder %v1276, 0.0
    %vm1304 = vcmp.ge.f32.partialorder %v1281, 0.0
    %vm1305 = vcmp.ge.f32.partialorder %v1284, 0.0
    %vm1306 = vcmp.ge.f32.partialorder %v1289, 0.0
    %vm1307 = vcmp.ge.f32.partialorder %v1292, 0.0
    %vm1308 = vcmp.ge.f32.partialorder %v1297, 0.0
    %v1309 = vmul.f32 %v1273, 0.01
    %v1310 = vmul.f32 %v1276, 0.01
    %v1311 = vmul.f32 %v1281, 0.01
    %v1312 = vmul.f32 %v1284, 0.01
    %v1313 = vmul.f32 %v1289, 0.01
    %v1314 = vmul.f32 %v1292, 0.01
    %v1315 = vmul.f32 %v1297, 0.01
    %v1316 = vsel %vm1302, %v1273, %v1309
    %v1317 = vsel %vm1303, %v1276, %v1310
    %v1318 = vsel %vm1304, %v1281, %v1311
    %v1319 = vsel %vm1305, %v1284, %v1312
    %v1320 = vsel %vm1306, %v1289, %v1313
    %v1321 = vsel %vm1307, %v1292, %v1314
    %v1322 = vsel %vm1308, %v1297, %v1315
    %v1323 = vpack.c.bf16 %v1317, %v1316
    %v1324 = vpack.c.bf16 %v1319, %v1318
    %v1325 = vpack.c.bf16 %v1321, %v1320
    %v1326 = vpack.c.bf16 %v1322, %v1322
    %v1327 = vld [vmem:[#allocation20] sm:$0xf]
    %v1328 = vld [vmem:[#allocation20 + $0x4] sm:$0xf]
    %v1329 = vld [vmem:[#allocation20 + $0x8] sm:$0xf]
    %v1330 = vld [vmem:[#allocation20 + $0xc] sm:$0xf]
    %v1331 = vld [vmem:[#allocation20 + $0x10] sm:$0xf]
    %v1332 = vld [vmem:[#allocation20 + $0x14] sm:$0xf]
    %v1333 = vld [vmem:[#allocation20 + $0x18] sm:$0xf]
    %v1334 = vld [vmem:[#allocation20 + $0x1c] sm:$0xf]
    %v1335 = vld [vmem:[#allocation20 + $0x20] sm:$0xf]
    %v1336 = vld [vmem:[#allocation20 + $0x24] sm:$0xf]
    %v1337 = vld [vmem:[#allocation20 + $0x28] sm:$0xf]
    %v1338 = vld [vmem:[#allocation20 + $0x2c] sm:$0xf]
    %v1339 = vld [vmem:[#allocation26] sm:$0x1]
    %v1341 = vlaneseq
    %v1342 = vshrl.u32 %v1341, 7
    %v1343 = vsub.s32 0, %v1342
    %v1344 = vrot.slane %v1339, %v1343
    %v1358 = vunpack.c.l.b16 %v1327
    %v1359 = vunpack.c.l.b16 %v1328
    %v1360 = vunpack.c.l.b16 %v1329
    %v1361 = vunpack.c.l.b16 %v1330
    %v1362 = vunpack.c.l.b16 %v1331
    %v1363 = vunpack.c.l.b16 %v1332
    %v1364 = vunpack.c.l.b16 %v1333
    %v1365 = vunpack.c.l.b16 %v1334
    %v1366 = vunpack.c.l.b16 %v1335
    %v1367 = vunpack.c.l.b16 %v1336
    %v1368 = vunpack.c.l.b16 %v1337
    %v1369 = vunpack.c.l.b16 %v1338
    %v1370 = vpack.c.b16 %v1359, %v1358
    %v1371 = vpack.c.b16 %v1361, %v1360
    %v1372 = vpack.c.b16 %v1363, %v1362
    %v1373 = vpack.c.b16 %v1365, %v1364
    %v1374 = vpack.c.b16 %v1367, %v1366
    %v1375 = vpack.c.b16 %v1369, %v1368
    %vm1382 = vcmask 785408
    %v1384 = vsel %vm1382, %v1323, 0
    %v1387 = vsel %vm1382, %v1324, 0
    %v1390 = vsel %vm1382, %v1325, 0
    %v1393 = vsel %vm1382, %v1326, 0
    %1395 = vmatprep.subr.bf16.mxu0 0
    %1396 = vmatpush1.bf16.msra.mxu0 0
    %1397 = vmatprep.subr.bf16.mxu0 0
    %1398 = vmatpush1.bf16.msra.mxu0 0
    %1399 = vmatprep.subr.bf16.mxu0 0
    %1400 = vmatpush1.bf16.msra.mxu0 %v1375
    %1401 = vmatprep.subr.bf16.mxu0 0
    %1402 = vmatpush1.bf16.msra.mxu0 %v1374
    %1403 = vmatprep.subr.bf16.mxu0 0
    %1404 = vmatpush1.bf16.msra.mxu0 %v1373
    %1405 = vmatprep.subr.bf16.mxu0 0
    %1406 = vmatpush1.bf16.msra.mxu0 %v1372
    %1407 = vmatprep.subr.bf16.mxu0 0
    %1408 = vmatpush1.bf16.msra.mxu0 %v1371
    %1409 = vmatprep.subr.bf16.mxu0 0
    %1410 = vmatpush1.bf16.msra.mxu0 %v1370
    %1411 = vmatprep.subr.bf16.mxu0 0
    %1412 = vmatpush2.bf16.msra.mxu0 0
    %1413 = vmatprep.subr.bf16.mxu0 0
    %1414 = vmatpush2.bf16.msra.mxu0 0
    %1415 = vmatprep.subr.bf16.mxu0 0
    %1416 = vmatpush2.bf16.msra.mxu0 0
    %1417 = vmatprep.subr.bf16.mxu0 0
    %1418 = vmatpush2.bf16.msra.mxu0 0
    %1419 = vmatprep.subr.bf16.mxu0 0
    %1420 = vmatpush2.bf16.msra.mxu0 0
    %1421 = vmatprep.subr.bf16.mxu0 0
    %1422 = vmatpush2.bf16.msra.mxu0 0
    %1423 = vmatprep.subr.bf16.mxu0 0
    %1424 = vmatpush2.bf16.msra.mxu0 0
    %1425 = vmatprep.subr.bf16.mxu0 0
    %1426 = vmatpush2.bf16.msra.mxu0 0
    %1427 = vmatprep.mubr.bf16.mxu0 0
    %1428 = vmatmul.mubr.bf16.gmra.mxu0 %v1384
    %v1429 = vpop.f32.mrf.mxu0
    %v1430 = vadd.f32 %v1344, %v1429
    %v1431 = vpop.f32.mrf.mxu0
    %v1432 = vpop.f32.mrf.mxu0
    %v1433 = vadd.f32 %v1344, %v1432
    %v1434 = vpop.f32.mrf.mxu0
    %1435 = vmatprep.mubr.bf16.mxu0 0
    %1436 = vmatmul.mubr.bf16.gmra.mxu0 %v1387
    %v1437 = vpop.f32.mrf.mxu0
    %v1438 = vadd.f32 %v1344, %v1437
    %v1439 = vpop.f32.mrf.mxu0
    %v1440 = vpop.f32.mrf.mxu0
    %v1441 = vadd.f32 %v1344, %v1440
    %v1442 = vpop.f32.mrf.mxu0
    %1443 = vmatprep.mubr.bf16.mxu0 0
    %1444 = vmatmul.mubr.bf16.gmra.mxu0 %v1390
    %v1445 = vpop.f32.mrf.mxu0
    %v1446 = vadd.f32 %v1344, %v1445
    %v1447 = vpop.f32.mrf.mxu0
    %v1448 = vpop.f32.mrf.mxu0
    %v1449 = vadd.f32 %v1344, %v1448
    %v1450 = vpop.f32.mrf.mxu0
    %1451 = vmatprep.mubr.bf16.mxu0 0
    %1452 = vmatmul.mubr.bf16.gmra.mxu0 %v1393
    %v1453 = vpop.f32.mrf.mxu0
    %v1454 = vadd.f32 %v1344, %v1453
    %v1455 = vpop.f32.mrf.mxu0
    %v1456 = vpop.f32.mrf.mxu0
    %v1457 = vpop.f32.mrf.mxu0
    %1458 = vdwg.mxu0
    %vm1459 = vcmp.ge.f32.partialorder %v1430, 0.0
    %vm1460 = vcmp.ge.f32.partialorder %v1433, 0.0
    %vm1461 = vcmp.ge.f32.partialorder %v1438, 0.0
    %vm1462 = vcmp.ge.f32.partialorder %v1441, 0.0
    %vm1463 = vcmp.ge.f32.partialorder %v1446, 0.0
    %vm1464 = vcmp.ge.f32.partialorder %v1449, 0.0
    %vm1465 = vcmp.ge.f32.partialorder %v1454, 0.0
    %v1466 = vmul.f32 %v1430, 0.01
    %v1467 = vmul.f32 %v1433, 0.01
    %v1468 = vmul.f32 %v1438, 0.01
    %v1469 = vmul.f32 %v1441, 0.01
    %v1470 = vmul.f32 %v1446, 0.01
    %v1471 = vmul.f32 %v1449, 0.01
    %v1472 = vmul.f32 %v1454, 0.01
    %v1473 = vsel %vm1459, %v1430, %v1466
    %v1474 = vsel %vm1460, %v1433, %v1467
    %v1475 = vsel %vm1461, %v1438, %v1468
    %v1476 = vsel %vm1462, %v1441, %v1469
    %v1477 = vsel %vm1463, %v1446, %v1470
    %v1478 = vsel %vm1464, %v1449, %v1471
    %v1479 = vsel %vm1465, %v1454, %v1472
    %v1480 = vld [vmem:[#allocation22] sm:$0x1]
    %v1482 = vlaneseq
    %v1483 = vshrl.u32 %v1482, 7
    %v1484 = vsub.s32 0, %v1483
    %v1485 = vrot.slane %v1480, %v1484
    %v1487 = vmul.f32 %v1473, %v1485
    %v1488 = vmul.f32 %v1474, %v1485
    %v1489 = vmul.f32 %v1475, %v1485
    %v1490 = vmul.f32 %v1476, %v1485
    %v1491 = vmul.f32 %v1477, %v1485
    %v1492 = vmul.f32 %v1478, %v1485
    %v1493 = vmul.f32 %v1479, %v1485
    %v1494 = vsel %vm1382, %v1487, 0.0
    %1495 = vadd.xlane.f32.xlu0 %v1494
    %v1496 = vpop.xlane.xlu0 %1495
    %v1497 = vsel %vm1382, %v1488, 0.0
    %1498 = vadd.xlane.f32.xlu0 %v1497
    %v1499 = vpop.xlane.xlu0 %1498
    %v1500 = vsel %vm1382, %v1489, 0.0
    %1501 = vadd.xlane.f32.xlu0 %v1500
    %v1502 = vpop.xlane.xlu0 %1501
    %v1503 = vsel %vm1382, %v1490, 0.0
    %1504 = vadd.xlane.f32.xlu0 %v1503
    %v1505 = vpop.xlane.xlu0 %1504
    %v1506 = vsel %vm1382, %v1491, 0.0
    %1507 = vadd.xlane.f32.xlu0 %v1506
    %v1508 = vpop.xlane.xlu0 %1507
    %v1509 = vsel %vm1382, %v1492, 0.0
    %1510 = vadd.xlane.f32.xlu0 %v1509
    %v1511 = vpop.xlane.xlu0 %1510
    %vm1512 = vcmask 779264
    %v1513 = vsel %vm1512, %v1493, 0.0
    %1514 = vadd.xlane.f32.xlu0 %v1513
    %v1515 = vpop.xlane.xlu0 %1514
    %v1516 = vld [vmem:[%s39] sm:$0x1]
    %v1518 = vlaneseq
    %v1519 = vshrl.u32 %v1518, 7
    %v1520 = vsub.s32 0, %v1519
    %v1521 = vrot.slane %v1516, %v1520
    %v1523 = vadd.f32 %v1496, %v1521
    %v1524 = vadd.f32 %v1499, %v1521
    %v1525 = vadd.f32 %v1502, %v1521
    %v1526 = vadd.f32 %v1505, %v1521
    %v1527 = vadd.f32 %v1508, %v1521
    %v1528 = vadd.f32 %v1511, %v1521
    %v1529 = vadd.f32 %v1515, %v1521
    %1531 = vset.pattern.permute.xlu0 0
    %1532 = vperm.xlu0 %1531, %v1523
    %v1533 = vpop.permute.xlu0 %1532
    %1536 = vset.pattern.permute.xlu0 0
    %1537 = vperm.xlu0 %1536, %v1524
    %v1538 = vpop.permute.xlu0 %1537
    %1541 = vset.pattern.permute.xlu0 0
    %1542 = vperm.xlu0 %1541, %v1525
    %v1543 = vpop.permute.xlu0 %1542
    %1546 = vset.pattern.permute.xlu0 0
    %1547 = vperm.xlu0 %1546, %v1526
    %v1548 = vpop.permute.xlu0 %1547
    %1551 = vset.pattern.permute.xlu0 0
    %1552 = vperm.xlu0 %1551, %v1527
    %v1553 = vpop.permute.xlu0 %1552
    %1556 = vset.pattern.permute.xlu0 0
    %1557 = vperm.xlu0 %1556, %v1528
    %v1558 = vpop.permute.xlu0 %1557
    %1561 = vset.pattern.permute.xlu0 0
    %1562 = vperm.xlu0 %1561, %v1529
    %v1563 = vpop.permute.xlu0 %1562
    %v1565 = vmul.f32 %v1533, %v462
    %v1566 = vmul.f32 %v1538, %v463
    %v1567 = vmul.f32 %v1543, %v464
    %v1568 = vmul.f32 %v1548, %v465
    %v1569 = vmul.f32 %v1553, %v466
    %v1570 = vmul.f32 %v1558, %v467
    %v1571 = vmul.f32 %v1563, %v468
    %vm1572 = vcmask 408576
    %v1574 = vsel %vm1572, %v460, 0
    %v1577 = vsel %vm1572, %v461, 0
    %v1580 = vsel %vm680, %v1571, 0
    %1582 = vmatprep.subr.mxu0 0.0
    %1583 = vmatpush1.msra.mxu0 0.0
    %1584 = vmatprep.subr.mxu0 0.0
    %1585 = vmatpush1.msra.mxu0 0.0
    %1586 = vmatprep.subr.mxu0 0.0
    %1587 = vmatpush1.msra.mxu0 0.0
    %1588 = vmatprep.subr.mxu0 0.0
    %1589 = vmatpush1.msra.mxu0 0.0
    %1590 = vmatprep.subr.mxu0 0.0
    %1591 = vmatpush1.msra.mxu0 0.0
    %1592 = vmatprep.subr.mxu0 0.0
    %1593 = vmatpush1.msra.mxu0 0.0
    %1594 = vmatprep.subr.mxu0 0.0
    %1595 = vmatpush1.msra.mxu0 0.0
    %1596 = vmatprep.subr.mxu0 0.0
    %1597 = vmatpush1.msra.mxu0 0.0
    %1598 = vmatprep.subr.mxu0 0.0
    %1599 = vmatpush1.msra.mxu0 0.0
    %1600 = vmatprep.subr.mxu0 0.0
    %1601 = vmatpush1.msra.mxu0 %v1580
    %1602 = vmatprep.subr.mxu0 0.0
    %1603 = vmatpush1.msra.mxu0 %v1570
    %1604 = vmatprep.subr.mxu0 0.0
    %1605 = vmatpush1.msra.mxu0 %v1569
    %1606 = vmatprep.subr.mxu0 0.0
    %1607 = vmatpush1.msra.mxu0 %v1568
    %1608 = vmatprep.subr.mxu0 0.0
    %1609 = vmatpush1.msra.mxu0 %v1567
    %1610 = vmatprep.subr.mxu0 0.0
    %1611 = vmatpush1.msra.mxu0 %v1566
    %1612 = vmatprep.subr.mxu0 0.0
    %1613 = vmatpush1.msra.mxu0 %v1565
    %1614 = vmatprep.subr.mxu0 0.0
    %1615 = vmatpush2.msra.mxu0 0.0
    %1616 = vmatprep.subr.mxu0 0.0
    %1617 = vmatpush2.msra.mxu0 0.0
    %1618 = vmatprep.subr.mxu0 0.0
    %1619 = vmatpush2.msra.mxu0 0.0
    %1620 = vmatprep.subr.mxu0 0.0
    %1621 = vmatpush2.msra.mxu0 0.0
    %1622 = vmatprep.subr.mxu0 0.0
    %1623 = vmatpush2.msra.mxu0 0.0
    %1624 = vmatprep.subr.mxu0 0.0
    %1625 = vmatpush2.msra.mxu0 0.0
    %1626 = vmatprep.subr.mxu0 0.0
    %1627 = vmatpush2.msra.mxu0 0.0
    %1628 = vmatprep.subr.mxu0 0.0
    %1629 = vmatpush2.msra.mxu0 0.0
    %1630 = vmatprep.subr.mxu0 0.0
    %1631 = vmatpush2.msra.mxu0 0.0
    %1632 = vmatprep.subr.mxu0 0.0
    %1633 = vmatpush2.msra.mxu0 0.0
    %1634 = vmatprep.subr.mxu0 0.0
    %1635 = vmatpush2.msra.mxu0 0.0
    %1636 = vmatprep.subr.mxu0 0.0
    %1637 = vmatpush2.msra.mxu0 0.0
    %1638 = vmatprep.subr.mxu0 0.0
    %1639 = vmatpush2.msra.mxu0 0.0
    %1640 = vmatprep.subr.mxu0 0.0
    %1641 = vmatpush2.msra.mxu0 0.0
    %1642 = vmatprep.subr.mxu0 0.0
    %1643 = vmatpush2.msra.mxu0 0.0
    %1644 = vmatprep.subr.mxu0 0.0
    %1645 = vmatpush2.msra.mxu0 0.0
    %1646 = vmatprep.mubr.f32.mxu0 0.0
    %1647 = vmatmul.mubr.f32.gmra.mxu0 %v1574
    %v1648 = vpop.f32.mrf.mxu0
    %v1649 = vadd.f32 0.0, %v1648
    %v1650 = vpop.f32.mrf.mxu0
    %1651 = vmatprep.mubr.f32.mxu0 0.0
    %1652 = vmatmul.mubr.f32.gmra.mxu0 %v1577
    %v1653 = vpop.f32.mrf.mxu0
    %v1654 = vadd.f32 0.0, %v1653
    %v1655 = vpop.f32.mrf.mxu0
    %1656 = vdwg.mxu0
    %v1657 = vsub.f32 %v1649, %v458
    %v1658 = vsub.f32 %v1654, %v459
    %v1659 = vsel %vm494, %v1657, -inf
    %1660 = vmax.xlane.f32.xlu0 %v1659
    %v1661 = vpop.xlane.xlu0 %1660
    %vm1662 = vcmask 74752
    %v1663 = vsel %vm1662, %v1658, -inf
    %1664 = vmax.xlane.f32.xlu0 %v1663
    %v1665 = vpop.xlane.xlu0 %1664
    %v1666 = vsub.f32 %v1657, %v1661
    %v1667 = vsub.f32 %v1658, %v1665
    %v1668 = vmul.f32 %v1666, 1.442695
    %v1669 = vpow.pop %v1668
    %v1670 = vmul.f32 %v1667, 1.442695
    %v1671 = vpow.pop %v1670
    %v1672 = vsel %vm494, %v1669, 0.0
    %1673 = vadd.xlane.f32.xlu0 %v1672
    %v1674 = vpop.xlane.xlu0 %1673
    %v1675 = vsel %vm1662, %v1671, 0.0
    %1676 = vadd.xlane.f32.xlu0 %v1675
    %v1677 = vpop.xlane.xlu0 %1676
    %v1678 = vrcp.pop %v1674
    %v1679 = vrcp.pop %v1677
    %v1680 = vmul.f32 %v1669, %v1678
    %v1681 = vmul.f32 %v1671, %v1679
    %v1682 = vpack.c.bf16 %v1681, %v1680
    %v1683 = vld [vmem:[#allocation28] sm:$0x1]
    %v1685 = vsel %vm494, %v1682, 0
    %1687 = vmatprep.subr.bf16.mxu0 0
    %1688 = vmatpush1.bf16.msra.mxu0 0
    %1689 = vmatprep.subr.bf16.mxu0 0
    %1690 = vmatpush1.bf16.msra.mxu0 0
    %1691 = vmatprep.subr.bf16.mxu0 0
    %1692 = vmatpush1.bf16.msra.mxu0 0
    %1693 = vmatprep.subr.bf16.mxu0 0
    %1694 = vmatpush1.bf16.msra.mxu0 0
    %1695 = vmatprep.subr.bf16.mxu0 0
    %1696 = vmatpush1.bf16.msra.mxu0 0
    %1697 = vmatprep.subr.bf16.mxu0 0
    %1698 = vmatpush1.bf16.msra.mxu0 0
    %1699 = vmatprep.subr.bf16.mxu0 0
    %1700 = vmatpush1.bf16.msra.mxu0 0
    %1701 = vmatprep.subr.bf16.mxu0 0
    %1702 = vmatpush1.bf16.msra.mxu0 %v509
    %1703 = vmatprep.subr.bf16.mxu0 0
    %1704 = vmatpush2.bf16.msra.mxu0 0
    %1705 = vmatprep.subr.bf16.mxu0 0
    %1706 = vmatpush2.bf16.msra.mxu0 0
    %1707 = vmatprep.subr.bf16.mxu0 0
    %1708 = vmatpush2.bf16.msra.mxu0 0
    %1709 = vmatprep.subr.bf16.mxu0 0
    %1710 = vmatpush2.bf16.msra.mxu0 0
    %1711 = vmatprep.subr.bf16.mxu0 0
    %1712 = vmatpush2.bf16.msra.mxu0 0
    %1713 = vmatprep.subr.bf16.mxu0 0
    %1714 = vmatpush2.bf16.msra.mxu0 0
    %1715 = vmatprep.subr.bf16.mxu0 0
    %1716 = vmatpush2.bf16.msra.mxu0 0
    %1717 = vmatprep.subr.bf16.mxu0 0
    %1718 = vmatpush2.bf16.msra.mxu0 0
    %1719 = vmatprep.mubr.bf16.mxu0 0
    %1720 = vmatmul.mubr.bf16.gmra.mxu0 %v1685
    %v1721 = vpop.f32.mrf.mxu0
    %v1722 = vadd.f32 0.0, %v1721
    %v1723 = vpop.f32.mrf.mxu0
    %v1724 = vpop.f32.mrf.mxu0
    %v1725 = vadd.f32 0.0, %v1724
    %v1726 = vpop.f32.mrf.mxu0
    %1727 = vdwg.mxu0
    %v1728 = vpack.c.bf16 %v1725, %v1722
    %v1729 = vld [vmem:[#allocation32] sm:$0xf]
    %v1730 = vld [vmem:[#allocation32 + $0x4] sm:$0xf]
    %v1731 = vld [vmem:[#allocation32 + $0x8] sm:$0xf]
    %v1732 = vld [vmem:[#allocation32 + $0xc] sm:$0xf]
    %v1733 = vld [vmem:[#allocation32 + $0x10] sm:$0x3]
    %v1739 = vunpack.c.l.b16 %v1729
    %v1740 = vunpack.c.l.b16 %v1730
    %v1741 = vunpack.c.l.b16 %v1731
    %v1742 = vunpack.c.l.b16 %v1732
    %v1743 = vunpack.c.l.b16 %v1733
    %v1744 = vpack.c.b16 %v1740, %v1739
    %v1745 = vpack.c.b16 %v1742, %v1741
    %v1746 = vpack.c.b16 %v1743, %v1743
    %v1750 = vsel %vm667, %v635, 0
    %v1753 = vsel %vm680, %v1746, 0
    %1755 = vmatprep.subr.bf16.mxu0 0
    %1756 = vmatpush1.bf16.msra.mxu0 0
    %1757 = vmatprep.subr.bf16.mxu0 0
    %1758 = vmatpush1.bf16.msra.mxu0 0
    %1759 = vmatprep.subr.bf16.mxu0 0
    %1760 = vmatpush1.bf16.msra.mxu0 0
    %1761 = vmatprep.subr.bf16.mxu0 0
    %1762 = vmatpush1.bf16.msra.mxu0 0
    %1763 = vmatprep.subr.bf16.mxu0 0
    %1764 = vmatpush1.bf16.msra.mxu0 0
    %1765 = vmatprep.subr.bf16.mxu0 0
    %1766 = vmatpush1.bf16.msra.mxu0 %v1753
    %1767 = vmatprep.subr.bf16.mxu0 0
    %1768 = vmatpush1.bf16.msra.mxu0 %v1745
    %1769 = vmatprep.subr.bf16.mxu0 0
    %1770 = vmatpush1.bf16.msra.mxu0 %v1744
    %1771 = vmatprep.subr.bf16.mxu0 0
    %1772 = vmatpush2.bf16.msra.mxu0 0
    %1773 = vmatprep.subr.bf16.mxu0 0
    %1774 = vmatpush2.bf16.msra.mxu0 0
    %1775 = vmatprep.subr.bf16.mxu0 0
    %1776 = vmatpush2.bf16.msra.mxu0 0
    %1777 = vmatprep.subr.bf16.mxu0 0
    %1778 = vmatpush2.bf16.msra.mxu0 0
    %1779 = vmatprep.subr.bf16.mxu0 0
    %1780 = vmatpush2.bf16.msra.mxu0 0
    %1781 = vmatprep.subr.bf16.mxu0 0
    %1782 = vmatpush2.bf16.msra.mxu0 0
    %1783 = vmatprep.subr.bf16.mxu0 0
    %1784 = vmatpush2.bf16.msra.mxu0 0
    %1785 = vmatprep.subr.bf16.mxu0 0
    %1786 = vmatpush2.bf16.msra.mxu0 0
    %1787 = vmatprep.mubr.bf16.mxu0 0
    %1788 = vmatmul.mubr.bf16.gmra.mxu0 %v1750
    %v1789 = vpop.f32.mrf.mxu0
    %v1790 = vadd.f32 0.0, %v1789
    %v1791 = vpop.f32.mrf.mxu0
    %v1792 = vpop.f32.mrf.mxu0
    %v1793 = vadd.f32 0.0, %v1792
    %v1794 = vpop.f32.mrf.mxu0
    %1795 = vdwg.mxu0
    %v1797 = vlaneseq
    %v1798 = vshrl.u32 %v1797, 7
    %v1799 = vsub.s32 0, %v1798
    %v1800 = vrot.slane %v1683, %v1799
    %v1802 = vadd.f32 %v1800, %v1790
    %v1803 = vadd.f32 %v1800, %v1793
    %v1804 = vld [vmem:[#allocation35] sm:$0xf]
    %v1805 = vld [vmem:[#allocation35 + $0x4] sm:$0xf]
    %v1806 = vld [vmem:[#allocation35 + $0x8] sm:$0xf]
    %v1807 = vld [vmem:[#allocation35 + $0xc] sm:$0xf]
    %v1808 = vld [vmem:[#allocation35 + $0x10] sm:$0x3]
    %v1814 = vunpack.c.l.b16 %v1804
    %v1815 = vunpack.c.l.b16 %v1805
    %v1816 = vunpack.c.l.b16 %v1806
    %v1817 = vunpack.c.l.b16 %v1807
    %v1818 = vunpack.c.l.b16 %v1808
    %v1819 = vpack.c.b16 %v1815, %v1814
    %v1820 = vpack.c.b16 %v1817, %v1816
    %v1821 = vpack.c.b16 %v1818, %v1818
    %v1825 = vsel %vm667, %v1728, 0
    %v1828 = vsel %vm680, %v1821, 0
    %1830 = vmatprep.subr.bf16.mxu0 0
    %1831 = vmatpush1.bf16.msra.mxu0 0
    %1832 = vmatprep.subr.bf16.mxu0 0
    %1833 = vmatpush1.bf16.msra.mxu0 0
    %1834 = vmatprep.subr.bf16.mxu0 0
    %1835 = vmatpush1.bf16.msra.mxu0 0
    %1836 = vmatprep.subr.bf16.mxu0 0
    %1837 = vmatpush1.bf16.msra.mxu0 0
    %1838 = vmatprep.subr.bf16.mxu0 0
    %1839 = vmatpush1.bf16.msra.mxu0 0
    %1840 = vmatprep.subr.bf16.mxu0 0
    %1841 = vmatpush1.bf16.msra.mxu0 %v1828
    %1842 = vmatprep.subr.bf16.mxu0 0
    %1843 = vmatpush1.bf16.msra.mxu0 %v1820
    %1844 = vmatprep.subr.bf16.mxu0 0
    %1845 = vmatpush1.bf16.msra.mxu0 %v1819
    %1846 = vmatprep.subr.bf16.mxu0 0
    %1847 = vmatpush2.bf16.msra.mxu0 0
    %1848 = vmatprep.subr.bf16.mxu0 0
    %1849 = vmatpush2.bf16.msra.mxu0 0
    %1850 = vmatprep.subr.bf16.mxu0 0
    %1851 = vmatpush2.bf16.msra.mxu0 0
    %1852 = vmatprep.subr.bf16.mxu0 0
    %1853 = vmatpush2.bf16.msra.mxu0 0
    %1854 = vmatprep.subr.bf16.mxu0 0
    %1855 = vmatpush2.bf16.msra.mxu0 0
    %1856 = vmatprep.subr.bf16.mxu0 0
    %1857 = vmatpush2.bf16.msra.mxu0 0
    %1858 = vmatprep.subr.bf16.mxu0 0
    %1859 = vmatpush2.bf16.msra.mxu0 0
    %1860 = vmatprep.subr.bf16.mxu0 0
    %1861 = vmatpush2.bf16.msra.mxu0 0
    %1862 = vmatprep.mubr.bf16.mxu0 0
    %1863 = vmatmul.mubr.bf16.gmra.mxu0 %v1825
    %v1864 = vpop.f32.mrf.mxu0
    %v1865 = vadd.f32 0.0, %v1864
    %v1866 = vpop.f32.mrf.mxu0
    %v1867 = vpop.f32.mrf.mxu0
    %v1868 = vadd.f32 0.0, %v1867
    %v1869 = vpop.f32.mrf.mxu0
    %1870 = vdwg.mxu0
    %v1871 = vadd.f32 %v1802, %v1865
    %v1872 = vadd.f32 %v1803, %v1868
    %vm1873 = vcmp.ge.f32.partialorder %v1871, 0.0
    %vm1874 = vcmp.ge.f32.partialorder %v1872, 0.0
    %v1875 = vmul.f32 %v1871, 0.01
    %v1876 = vmul.f32 %v1872, 0.01
    %v1877 = vsel %vm1873, %v1871, %v1875
    %v1878 = vsel %vm1874, %v1872, %v1876
    %v1879 = vpack.c.bf16 %v1878, %v1877
    %v1881 = vsel %vm507, %v1879, 0
    %1883 = vmatprep.subr.bf16.mxu0 0
    %1884 = vmatpush1.bf16.msra.mxu0 0
    %1885 = vmatprep.subr.bf16.mxu0 0
    %1886 = vmatpush1.bf16.msra.mxu0 0
    %1887 = vmatprep.subr.bf16.mxu0 0
    %1888 = vmatpush1.bf16.msra.mxu0 0
    %1889 = vmatprep.subr.bf16.mxu0 0
    %1890 = vmatpush1.bf16.msra.mxu0 0
    %1891 = vmatprep.subr.bf16.mxu0 0
    %1892 = vmatpush1.bf16.msra.mxu0 0
    %1893 = vmatprep.subr.bf16.mxu0 0
    %1894 = vmatpush1.bf16.msra.mxu0 0
    %1895 = vmatprep.subr.bf16.mxu0 0
    %1896 = vmatpush1.bf16.msra.mxu0 0
    %1897 = vmatprep.subr.bf16.mxu0 0
    %1898 = vmatpush1.bf16.msra.mxu0 %v1881
    %1899 = vmatprep.subr.bf16.mxu0 0
    %1900 = vmatpush2.bf16.msra.mxu0 0
    %1901 = vmatprep.subr.bf16.mxu0 0
    %1902 = vmatpush2.bf16.msra.mxu0 0
    %1903 = vmatprep.subr.bf16.mxu0 0
    %1904 = vmatpush2.bf16.msra.mxu0 0
    %1905 = vmatprep.subr.bf16.mxu0 0
    %1906 = vmatpush2.bf16.msra.mxu0 0
    %1907 = vmatprep.subr.bf16.mxu0 0
    %1908 = vmatpush2.bf16.msra.mxu0 0
    %1909 = vmatprep.subr.bf16.mxu0 0
    %1910 = vmatpush2.bf16.msra.mxu0 0
    %1911 = vmatprep.subr.bf16.mxu0 0
    %1912 = vmatpush2.bf16.msra.mxu0 0
    %1913 = vmatprep.subr.bf16.mxu0 0
    %1914 = vmatpush2.bf16.msra.mxu0 0
    %1915 = vmatprep.mubr.bf16.mxu0 0
    %1916 = vmatmul.mubr.bf16.gmra.mxu0 %v496
    %v1917 = vpop.f32.mrf.mxu0
    %v1918 = vadd.f32 0.0, %v1917
    %v1919 = vpop.f32.mrf.mxu0
    %v1920 = vpop.f32.mrf.mxu0
    %v1921 = vadd.f32 0.0, %v1920
    %v1922 = vpop.f32.mrf.mxu0
    %1923 = vmatprep.mubr.bf16.mxu0 0
    %1924 = vmatmul.mubr.bf16.gmra.mxu0 %v499
    %v1925 = vpop.f32.mrf.mxu0
    %v1926 = vadd.f32 0.0, %v1925
    %v1927 = vpop.f32.mrf.mxu0
    %v1928 = vpop.f32.mrf.mxu0
    %v1929 = vadd.f32 0.0, %v1928
    %v1930 = vpop.f32.mrf.mxu0
    %1931 = vmatprep.mubr.bf16.mxu0 0
    %1932 = vmatmul.mubr.bf16.gmra.mxu0 %v502
    %v1933 = vpop.f32.mrf.mxu0
    %v1934 = vadd.f32 0.0, %v1933
    %v1935 = vpop.f32.mrf.mxu0
    %v1936 = vpop.f32.mrf.mxu0
    %v1937 = vadd.f32 0.0, %v1936
    %v1938 = vpop.f32.mrf.mxu0
    %1939 = vmatprep.mubr.bf16.mxu0 0
    %1940 = vmatmul.mubr.bf16.gmra.mxu0 %v505
    %v1941 = vpop.f32.mrf.mxu0
    %v1942 = vadd.f32 0.0, %v1941
    %v1943 = vpop.f32.mrf.mxu0
    %v1944 = vpop.f32.mrf.mxu0
    %v1945 = vpop.f32.mrf.mxu0
    %1946 = vdwg.mxu0
    %v1947 = vand.u32 2147483647, %v1918
    %v1948 = vand.u32 2147483647, %v1921
    %v1949 = vand.u32 2147483647, %v1926
    %v1950 = vand.u32 2147483647, %v1929
    %v1951 = vand.u32 2147483647, %v1934
    %v1952 = vand.u32 2147483647, %v1937
    %v1953 = vand.u32 2147483647, %v1942
    %v1954 = vpack.c.bf16 %v1948, %v1947
    %v1955 = vpack.c.bf16 %v1950, %v1949
    %v1956 = vpack.c.bf16 %v1952, %v1951
    %v1957 = vpack.c.bf16 %v1953, %v1953
    %1958 = vmatprep.subr.bf16.mxu0 0
    %1959 = vmatpush1.bf16.msra.mxu0 0
    %1960 = vmatprep.subr.bf16.mxu0 0
    %1961 = vmatpush1.bf16.msra.mxu0 0
    %1962 = vmatprep.subr.bf16.mxu0 0
    %1963 = vmatpush1.bf16.msra.mxu0 0
    %1964 = vmatprep.subr.bf16.mxu0 0
    %1965 = vmatpush1.bf16.msra.mxu0 0
    %1966 = vmatprep.subr.bf16.mxu0 0
    %1967 = vmatpush1.bf16.msra.mxu0 0
    %1968 = vmatprep.subr.bf16.mxu0 0
    %1969 = vmatpush1.bf16.msra.mxu0 0
    %1970 = vmatprep.subr.bf16.mxu0 0
    %1971 = vmatpush1.bf16.msra.mxu0 0
    %1972 = vmatprep.subr.bf16.mxu0 0
    %1973 = vmatpush1.bf16.msra.mxu0 %v1881
    %1974 = vmatprep.subr.bf16.mxu0 0
    %1975 = vmatpush2.bf16.msra.mxu0 0
    %1976 = vmatprep.subr.bf16.mxu0 0
    %1977 = vmatpush2.bf16.msra.mxu0 0
    %1978 = vmatprep.subr.bf16.mxu0 0
    %1979 = vmatpush2.bf16.msra.mxu0 0
    %1980 = vmatprep.subr.bf16.mxu0 0
    %1981 = vmatpush2.bf16.msra.mxu0 0
    %1982 = vmatprep.subr.bf16.mxu0 0
    %1983 = vmatpush2.bf16.msra.mxu0 0
    %1984 = vmatprep.subr.bf16.mxu0 0
    %1985 = vmatpush2.bf16.msra.mxu0 0
    %1986 = vmatprep.subr.bf16.mxu0 0
    %1987 = vmatpush2.bf16.msra.mxu0 0
    %1988 = vmatprep.subr.bf16.mxu0 0
    %1989 = vmatpush2.bf16.msra.mxu0 0
    %1990 = vmatprep.mubr.bf16.mxu0 0
    %1991 = vmatmul.mubr.bf16.gmra.mxu0 %v592
    %v1992 = vpop.f32.mrf.mxu0
    %v1993 = vadd.f32 0.0, %v1992
    %v1994 = vpop.f32.mrf.mxu0
    %v1995 = vpop.f32.mrf.mxu0
    %v1996 = vadd.f32 0.0, %v1995
    %v1997 = vpop.f32.mrf.mxu0
    %1998 = vdwg.mxu0
    %v1999 = vpack.c.bf16 %v1996, %v1993
    %s2000 = scalar_lea.vmem %s31, 2
    %v2001 = vld [vmem:[%s2000] sm:$0x3]
    %s2002 = scalar_lea.vmem %s43, 40
    %v2003 = vld [vmem:[%s2002] sm:$0xff]
    %v2004 = vld [vmem:[%s2002 + $0x8] sm:$0xff]
    %v2005 = vld [vmem:[%s2002 + $0x10] sm:$0xff]
    %v2006 = vld [vmem:[%s2002 + $0x18] sm:$0xff]
    %v2007 = vld [vmem:[%s2002 + $0x20] sm:$0x33]
    %v2013 = vunpack.c.l.b16 %v2003
    %v2014 = vunpack.c.h.b16 %v2003
    %v2015 = vunpack.c.l.b16 %v2004
    %v2016 = vunpack.c.h.b16 %v2004
    %v2017 = vunpack.c.l.b16 %v2005
    %v2018 = vunpack.c.h.b16 %v2005
    %v2019 = vunpack.c.l.b16 %v2006
    %v2020 = vunpack.c.h.b16 %v2006
    %v2021 = vunpack.c.l.b16 %v2007
    %v2022 = vunpack.c.h.b16 %v2007
    %v2023 = vpack.c.b16 %v2015, %v2013
    %v2024 = vpack.c.b16 %v2016, %v2014
    %v2025 = vpack.c.b16 %v2019, %v2017
    %v2026 = vpack.c.b16 %v2020, %v2018
    %v2027 = vpack.c.b16 %v2021, %v2021
    %v2028 = vpack.c.b16 %v2022, %v2022
    %v2034 = vsel %vm680, %v2027, 0
    %v2037 = vsel %vm680, %v2028, 0
    %2039 = vmatprep.subr.bf16.mxu0 0
    %2040 = vmatpush1.bf16.msra.mxu0 0
    %2041 = vmatprep.subr.bf16.mxu0 0
    %2042 = vmatpush1.bf16.msra.mxu0 0
    %2043 = vmatprep.subr.bf16.mxu0 0
    %2044 = vmatpush1.bf16.msra.mxu0 0
    %2045 = vmatprep.subr.bf16.mxu0 0
    %2046 = vmatpush1.bf16.msra.mxu0 0
    %2047 = vmatprep.subr.bf16.mxu0 0
    %2048 = vmatpush1.bf16.msra.mxu0 0
    %2049 = vmatprep.subr.bf16.mxu0 %v2037
    %2050 = vmatpush1.bf16.msra.mxu0 %v2034
    %2051 = vmatprep.subr.bf16.mxu0 %v2026
    %2052 = vmatpush1.bf16.msra.mxu0 %v2025
    %2053 = vmatprep.subr.bf16.mxu0 %v2024
    %2054 = vmatpush1.bf16.msra.mxu0 %v2023
    %2055 = vmatprep.subr.bf16.mxu0 0
    %2056 = vmatpush2.bf16.msra.mxu0 0
    %2057 = vmatprep.subr.bf16.mxu0 0
    %2058 = vmatpush2.bf16.msra.mxu0 0
    %2059 = vmatprep.subr.bf16.mxu0 0
    %2060 = vmatpush2.bf16.msra.mxu0 0
    %2061 = vmatprep.subr.bf16.mxu0 0
    %2062 = vmatpush2.bf16.msra.mxu0 0
    %2063 = vmatprep.subr.bf16.mxu0 0
    %2064 = vmatpush2.bf16.msra.mxu0 0
    %2065 = vmatprep.subr.bf16.mxu0 0
    %2066 = vmatpush2.bf16.msra.mxu0 0
    %2067 = vmatprep.subr.bf16.mxu0 0
    %2068 = vmatpush2.bf16.msra.mxu0 0
    %2069 = vmatprep.subr.bf16.mxu0 0
    %2070 = vmatpush2.bf16.msra.mxu0 0
    %2071 = vmatprep.mubr.bf16.mxu0 0
    %2072 = vmatmul.mubr.bf16.gmra.mxu0 %v669
    %v2073 = vpop.f32.mrf.mxu0
    %v2074 = vadd.f32 0.0, %v2073
    %v2075 = vpop.f32.mrf.mxu0
    %v2076 = vadd.f32 0.0, %v2075
    %v2077 = vpop.f32.mrf.mxu0
    %v2078 = vadd.f32 0.0, %v2077
    %v2079 = vpop.f32.mrf.mxu0
    %v2080 = vadd.f32 0.0, %v2079
    %2081 = vmatprep.mubr.bf16.mxu0 0
    %2082 = vmatmul.mubr.bf16.gmra.mxu0 %v672
    %v2083 = vpop.f32.mrf.mxu0
    %v2084 = vadd.f32 0.0, %v2083
    %v2085 = vpop.f32.mrf.mxu0
    %v2086 = vadd.f32 0.0, %v2085
    %v2087 = vpop.f32.mrf.mxu0
    %v2088 = vadd.f32 0.0, %v2087
    %v2089 = vpop.f32.mrf.mxu0
    %v2090 = vadd.f32 0.0, %v2089
    %2091 = vmatprep.mubr.bf16.mxu0 0
    %2092 = vmatmul.mubr.bf16.gmra.mxu0 %v675
    %v2093 = vpop.f32.mrf.mxu0
    %v2094 = vadd.f32 0.0, %v2093
    %v2095 = vpop.f32.mrf.mxu0
    %v2096 = vadd.f32 0.0, %v2095
    %v2097 = vpop.f32.mrf.mxu0
    %v2098 = vadd.f32 0.0, %v2097
    %v2099 = vpop.f32.mrf.mxu0
    %v2100 = vadd.f32 0.0, %v2099
    %2101 = vmatprep.mubr.bf16.mxu0 0
    %2102 = vmatmul.mubr.bf16.gmra.mxu0 %v678
    %v2103 = vpop.f32.mrf.mxu0
    %v2104 = vadd.f32 0.0, %v2103
    %v2105 = vpop.f32.mrf.mxu0
    %v2106 = vadd.f32 0.0, %v2105
    %v2107 = vpop.f32.mrf.mxu0
    %v2108 = vpop.f32.mrf.mxu0
    %2109 = vdwg.mxu0
    %v2111 = vlaneseq
    %v2112 = vshrl.u32 %v2111, 7
    %v2113 = vsub.s32 0, %v2112
    %v2114 = vrot.slane %v2001, %v2113
    %v2115 = vlaneseq
    %v2116 = vshrl.u32 %v2115, 7
    %v2117 = vsub.s32 1, %v2116
    %v2118 = vrot.slane %v2001, %v2117
    %v2121 = vadd.f32 %v2114, %v2074
    %v2122 = vadd.f32 %v2118, %v2076
    %v2123 = vadd.f32 %v2114, %v2078
    %v2124 = vadd.f32 %v2118, %v2080
    %v2125 = vadd.f32 %v2114, %v2084
    %v2126 = vadd.f32 %v2118, %v2086
    %v2127 = vadd.f32 %v2114, %v2088
    %v2128 = vadd.f32 %v2118, %v2090
    %v2129 = vadd.f32 %v2114, %v2094
    %v2130 = vadd.f32 %v2118, %v2096
    %v2131 = vadd.f32 %v2114, %v2098
    %v2132 = vadd.f32 %v2118, %v2100
    %v2133 = vadd.f32 %v2114, %v2104
    %v2134 = vadd.f32 %v2118, %v2106
    %v2135 = vld [vmem:[#allocation29] sm:$0xff]
    %v2136 = vld [vmem:[#allocation29 + $0x8] sm:$0xff]
    %v2137 = vld [vmem:[#allocation29 + $0x10] sm:$0xff]
    %v2138 = vld [vmem:[#allocation29 + $0x18] sm:$0xff]
    %v2139 = vld [vmem:[#allocation29 + $0x20] sm:$0xff]
    %v2140 = vld [vmem:[#allocation29 + $0x28] sm:$0xff]
    %v2147 = vunpack.c.l.b16 %v2135
    %v2148 = vunpack.c.h.b16 %v2135
    %v2149 = vunpack.c.l.b16 %v2136
    %v2150 = vunpack.c.h.b16 %v2136
    %v2151 = vunpack.c.l.b16 %v2137
    %v2152 = vunpack.c.h.b16 %v2137
    %v2153 = vunpack.c.l.b16 %v2138
    %v2154 = vunpack.c.h.b16 %v2138
    %v2155 = vunpack.c.l.b16 %v2139
    %v2156 = vunpack.c.h.b16 %v2139
    %v2157 = vunpack.c.l.b16 %v2140
    %v2158 = vunpack.c.h.b16 %v2140
    %v2159 = vpack.c.b16 %v2149, %v2147
    %v2160 = vpack.c.b16 %v2150, %v2148
    %v2161 = vpack.c.b16 %v2153, %v2151
    %v2162 = vpack.c.b16 %v2154, %v2152
    %v2163 = vpack.c.b16 %v2157, %v2155
    %v2164 = vpack.c.b16 %v2158, %v2156
    %vm2171 = vcmask 392192
    %v2173 = vsel %vm2171, %v1954, 0
    %v2176 = vsel %vm2171, %v1955, 0
    %v2179 = vsel %vm2171, %v1956, 0
    %v2182 = vsel %vm2171, %v1957, 0
    %2184 = vmatprep.subr.bf16.mxu0 0
    %2185 = vmatpush1.bf16.msra.mxu0 0
    %2186 = vmatprep.subr.bf16.mxu0 0
    %2187 = vmatpush1.bf16.msra.mxu0 0
    %2188 = vmatprep.subr.bf16.mxu0 0
    %2189 = vmatpush1.bf16.msra.mxu0 0
    %2190 = vmatprep.subr.bf16.mxu0 0
    %2191 = vmatpush1.bf16.msra.mxu0 0
    %2192 = vmatprep.subr.bf16.mxu0 0
    %2193 = vmatpush1.bf16.msra.mxu0 0
    %2194 = vmatprep.subr.bf16.mxu0 %v2164
    %2195 = vmatpush1.bf16.msra.mxu0 %v2163
    %2196 = vmatprep.subr.bf16.mxu0 %v2162
    %2197 = vmatpush1.bf16.msra.mxu0 %v2161
    %2198 = vmatprep.subr.bf16.mxu0 %v2160
    %2199 = vmatpush1.bf16.msra.mxu0 %v2159
    %2200 = vmatprep.subr.bf16.mxu0 0
    %2201 = vmatpush2.bf16.msra.mxu0 0
    %2202 = vmatprep.subr.bf16.mxu0 0
    %2203 = vmatpush2.bf16.msra.mxu0 0
    %2204 = vmatprep.subr.bf16.mxu0 0
    %2205 = vmatpush2.bf16.msra.mxu0 0
    %2206 = vmatprep.subr.bf16.mxu0 0
    %2207 = vmatpush2.bf16.msra.mxu0 0
    %2208 = vmatprep.subr.bf16.mxu0 0
    %2209 = vmatpush2.bf16.msra.mxu0 0
    %2210 = vmatprep.subr.bf16.mxu0 0
    %2211 = vmatpush2.bf16.msra.mxu0 0
    %2212 = vmatprep.subr.bf16.mxu0 0
    %2213 = vmatpush2.bf16.msra.mxu0 0
    %2214 = vmatprep.subr.bf16.mxu0 0
    %2215 = vmatpush2.bf16.msra.mxu0 0
    %2216 = vmatprep.mubr.bf16.mxu0 0
    %2217 = vmatmul.mubr.bf16.gmra.mxu0 %v2173
    %v2218 = vpop.f32.mrf.mxu0
    %v2219 = vadd.f32 0.0, %v2218
    %v2220 = vpop.f32.mrf.mxu0
    %v2221 = vadd.f32 0.0, %v2220
    %v2222 = vpop.f32.mrf.mxu0
    %v2223 = vadd.f32 0.0, %v2222
    %v2224 = vpop.f32.mrf.mxu0
    %v2225 = vadd.f32 0.0, %v2224
    %2226 = vmatprep.mubr.bf16.mxu0 0
    %2227 = vmatmul.mubr.bf16.gmra.mxu0 %v2176
    %v2228 = vpop.f32.mrf.mxu0
    %v2229 = vadd.f32 0.0, %v2228
    %v2230 = vpop.f32.mrf.mxu0
    %v2231 = vadd.f32 0.0, %v2230
    %v2232 = vpop.f32.mrf.mxu0
    %v2233 = vadd.f32 0.0, %v2232
    %v2234 = vpop.f32.mrf.mxu0
    %v2235 = vadd.f32 0.0, %v2234
    %2236 = vmatprep.mubr.bf16.mxu0 0
    %2237 = vmatmul.mubr.bf16.gmra.mxu0 %v2179
    %v2238 = vpop.f32.mrf.mxu0
    %v2239 = vadd.f32 0.0, %v2238
    %v2240 = vpop.f32.mrf.mxu0
    %v2241 = vadd.f32 0.0, %v2240
    %v2242 = vpop.f32.mrf.mxu0
    %v2243 = vadd.f32 0.0, %v2242
    %v2244 = vpop.f32.mrf.mxu0
    %v2245 = vadd.f32 0.0, %v2244
    %2246 = vmatprep.mubr.bf16.mxu0 0
    %2247 = vmatmul.mubr.bf16.gmra.mxu0 %v2182
    %v2248 = vpop.f32.mrf.mxu0
    %v2249 = vadd.f32 0.0, %v2248
    %v2250 = vpop.f32.mrf.mxu0
    %v2251 = vadd.f32 0.0, %v2250
    %v2252 = vpop.f32.mrf.mxu0
    %v2253 = vpop.f32.mrf.mxu0
    %2254 = vdwg.mxu0
    %v2255 = vadd.f32 %v2121, %v2219
    %v2256 = vadd.f32 %v2122, %v2221
    %v2257 = vadd.f32 %v2123, %v2223
    %v2258 = vadd.f32 %v2124, %v2225
    %v2259 = vadd.f32 %v2125, %v2229
    %v2260 = vadd.f32 %v2126, %v2231
    %v2261 = vadd.f32 %v2127, %v2233
    %v2262 = vadd.f32 %v2128, %v2235
    %v2263 = vadd.f32 %v2129, %v2239
    %v2264 = vadd.f32 %v2130, %v2241
    %v2265 = vadd.f32 %v2131, %v2243
    %v2266 = vadd.f32 %v2132, %v2245
    %v2267 = vadd.f32 %v2133, %v2249
    %v2268 = vadd.f32 %v2134, %v2251
    %vm2269 = vcmp.ge.f32.partialorder %v2255, 0.0
    %vm2270 = vcmp.ge.f32.partialorder %v2256, 0.0
    %vm2271 = vcmp.ge.f32.partialorder %v2257, 0.0
    %vm2272 = vcmp.ge.f32.partialorder %v2258, 0.0
    %vm2273 = vcmp.ge.f32.partialorder %v2259, 0.0
    %vm2274 = vcmp.ge.f32.partialorder %v2260, 0.0
    %vm2275 = vcmp.ge.f32.partialorder %v2261, 0.0
    %vm2276 = vcmp.ge.f32.partialorder %v2262, 0.0
    %vm2277 = vcmp.ge.f32.partialorder %v2263, 0.0
    %vm2278 = vcmp.ge.f32.partialorder %v2264, 0.0
    %vm2279 = vcmp.ge.f32.partialorder %v2265, 0.0
    %vm2280 = vcmp.ge.f32.partialorder %v2266, 0.0
    %vm2281 = vcmp.ge.f32.partialorder %v2267, 0.0
    %vm2282 = vcmp.ge.f32.partialorder %v2268, 0.0
    %v2283 = vmul.f32 %v2255, 0.01
    %v2284 = vmul.f32 %v2256, 0.01
    %v2285 = vmul.f32 %v2257, 0.01
    %v2286 = vmul.f32 %v2258, 0.01
    %v2287 = vmul.f32 %v2259, 0.01
    %v2288 = vmul.f32 %v2260, 0.01
    %v2289 = vmul.f32 %v2261, 0.01
    %v2290 = vmul.f32 %v2262, 0.01
    %v2291 = vmul.f32 %v2263, 0.01
    %v2292 = vmul.f32 %v2264, 0.01
    %v2293 = vmul.f32 %v2265, 0.01
    %v2294 = vmul.f32 %v2266, 0.01
    %v2295 = vmul.f32 %v2267, 0.01
    %v2296 = vmul.f32 %v2268, 0.01
    %v2297 = vsel %vm2269, %v2255, %v2283
    %v2298 = vsel %vm2270, %v2256, %v2284
    %v2299 = vsel %vm2271, %v2257, %v2285
    %v2300 = vsel %vm2272, %v2258, %v2286
    %v2301 = vsel %vm2273, %v2259, %v2287
    %v2302 = vsel %vm2274, %v2260, %v2288
    %v2303 = vsel %vm2275, %v2261, %v2289
    %v2304 = vsel %vm2276, %v2262, %v2290
    %v2305 = vsel %vm2277, %v2263, %v2291
    %v2306 = vsel %vm2278, %v2264, %v2292
    %v2307 = vsel %vm2279, %v2265, %v2293
    %v2308 = vsel %vm2280, %v2266, %v2294
    %v2309 = vsel %vm2281, %v2267, %v2295
    %v2310 = vsel %vm2282, %v2268, %v2296
    %v2311 = vpack.c.bf16 %v2299, %v2297
    %v2312 = vpack.c.bf16 %v2300, %v2298
    %v2313 = vpack.c.bf16 %v2303, %v2301
    %v2314 = vpack.c.bf16 %v2304, %v2302
    %v2315 = vpack.c.bf16 %v2307, %v2305
    %v2316 = vpack.c.bf16 %v2308, %v2306
    %v2317 = vpack.c.bf16 %v2309, %v2309
    %v2318 = vpack.c.bf16 %v2310, %v2310
    %s2319 = scalar_lea.vmem [#allocation17], 192
    %v2320 = vld [vmem:[%s2319] sm:$0xff]
    %v2321 = vld [vmem:[%s2319 + $0x8] sm:$0xff]
    %v2322 = vld [vmem:[%s2319 + $0x10] sm:$0xff]
    %v2323 = vld [vmem:[%s2319 + $0x18] sm:$0xff]
    %v2324 = vld [vmem:[%s2319 + $0x20] sm:$0xff]
    %v2325 = vld [vmem:[%s2319 + $0x28] sm:$0xff]
    %v2326 = vld [vmem:[%s2319 + $0x30] sm:$0xff]
    %v2327 = vld [vmem:[%s2319 + $0x38] sm:$0xff]
    %v2328 = vld [vmem:[%s2319 + $0x40] sm:$0xff]
    %v2329 = vld [vmem:[%s2319 + $0x48] sm:$0xff]
    %v2330 = vld [vmem:[%s2319 + $0x50] sm:$0xff]
    %v2331 = vld [vmem:[%s2319 + $0x58] sm:$0xff]
    %v2332 = vld [vmem:[%s2319 + $0x60] sm:$0xff]
    %v2333 = vld [vmem:[%s2319 + $0x68] sm:$0xff]
    %v2334 = vld [vmem:[%s2319 + $0x70] sm:$0xff]
    %v2335 = vld [vmem:[%s2319 + $0x78] sm:$0xff]
    %v2336 = vld [vmem:[%s2319 + $0x80] sm:$0xff]
    %v2337 = vld [vmem:[%s2319 + $0x88] sm:$0xff]
    %v2338 = vld [vmem:[%s2319 + $0x90] sm:$0xff]
    %v2339 = vld [vmem:[%s2319 + $0x98] sm:$0xff]
    %v2340 = vld [vmem:[%s2319 + $0xa0] sm:$0xff]
    %v2341 = vld [vmem:[%s2319 + $0xa8] sm:$0xff]
    %v2342 = vld [vmem:[%s2319 + $0xb0] sm:$0xff]
    %v2343 = vld [vmem:[%s2319 + $0xb8] sm:$0xff]
    %s2344 = scalar_lea.vmem [#allocation23], 2
    %v2345 = vld [vmem:[%s2344] sm:$0x3]
    %v2347 = vlaneseq
    %v2348 = vshrl.u32 %v2347, 7
    %v2349 = vsub.s32 0, %v2348
    %v2350 = vrot.slane %v2345, %v2349
    %v2351 = vlaneseq
    %v2352 = vshrl.u32 %v2351, 7
    %v2353 = vsub.s32 1, %v2352
    %v2354 = vrot.slane %v2345, %v2353
    %v2381 = vunpack.c.l.b16 %v2320
    %v2382 = vunpack.c.h.b16 %v2320
    %v2383 = vunpack.c.l.b16 %v2321
    %v2384 = vunpack.c.h.b16 %v2321
    %v2385 = vunpack.c.l.b16 %v2322
    %v2386 = vunpack.c.h.b16 %v2322
    %v2387 = vunpack.c.l.b16 %v2323
    %v2388 = vunpack.c.h.b16 %v2323
    %v2389 = vunpack.c.l.b16 %v2324
    %v2390 = vunpack.c.h.b16 %v2324
    %v2391 = vunpack.c.l.b16 %v2325
    %v2392 = vunpack.c.h.b16 %v2325
    %v2393 = vunpack.c.l.b16 %v2326
    %v2394 = vunpack.c.h.b16 %v2326
    %v2395 = vunpack.c.l.b16 %v2327
    %v2396 = vunpack.c.h.b16 %v2327
    %v2397 = vunpack.c.l.b16 %v2328
    %v2398 = vunpack.c.h.b16 %v2328
    %v2399 = vunpack.c.l.b16 %v2329
    %v2400 = vunpack.c.h.b16 %v2329
    %v2401 = vunpack.c.l.b16 %v2330
    %v2402 = vunpack.c.h.b16 %v2330
    %v2403 = vunpack.c.l.b16 %v2331
    %v2404 = vunpack.c.h.b16 %v2331
    %v2405 = vunpack.c.l.b16 %v2332
    %v2406 = vunpack.c.h.b16 %v2332
    %v2407 = vunpack.c.l.b16 %v2333
    %v2408 = vunpack.c.h.b16 %v2333
    %v2409 = vunpack.c.l.b16 %v2334
    %v2410 = vunpack.c.h.b16 %v2334
    %v2411 = vunpack.c.l.b16 %v2335
    %v2412 = vunpack.c.h.b16 %v2335
    %v2413 = vunpack.c.l.b16 %v2336
    %v2414 = vunpack.c.h.b16 %v2336
    %v2415 = vunpack.c.l.b16 %v2337
    %v2416 = vunpack.c.h.b16 %v2337
    %v2417 = vunpack.c.l.b16 %v2338
    %v2418 = vunpack.c.h.b16 %v2338
    %v2419 = vunpack.c.l.b16 %v2339
    %v2420 = vunpack.c.h.b16 %v2339
    %v2421 = vunpack.c.l.b16 %v2340
    %v2422 = vunpack.c.h.b16 %v2340
    %v2423 = vunpack.c.l.b16 %v2341
    %v2424 = vunpack.c.h.b16 %v2341
    %v2425 = vunpack.c.l.b16 %v2342
    %v2426 = vunpack.c.h.b16 %v2342
    %v2427 = vunpack.c.l.b16 %v2343
    %v2428 = vunpack.c.h.b16 %v2343
    %v2429 = vpack.c.b16 %v2383, %v2381
    %v2430 = vpack.c.b16 %v2384, %v2382
    %v2431 = vpack.c.b16 %v2387, %v2385
    %v2432 = vpack.c.b16 %v2388, %v2386
    %v2433 = vpack.c.b16 %v2391, %v2389
    %v2434 = vpack.c.b16 %v2392, %v2390
    %v2435 = vpack.c.b16 %v2395, %v2393
    %v2436 = vpack.c.b16 %v2396, %v2394
    %v2437 = vpack.c.b16 %v2399, %v2397
    %v2438 = vpack.c.b16 %v2400, %v2398
    %v2439 = vpack.c.b16 %v2403, %v2401
    %v2440 = vpack.c.b16 %v2404, %v2402
    %v2441 = vpack.c.b16 %v2407, %v2405
    %v2442 = vpack.c.b16 %v2408, %v2406
    %v2443 = vpack.c.b16 %v2411, %v2409
    %v2444 = vpack.c.b16 %v2412, %v2410
    %v2445 = vpack.c.b16 %v2415, %v2413
    %v2446 = vpack.c.b16 %v2416, %v2414
    %v2447 = vpack.c.b16 %v2419, %v2417
    %v2448 = vpack.c.b16 %v2420, %v2418
    %v2449 = vpack.c.b16 %v2423, %v2421
    %v2450 = vpack.c.b16 %v2424, %v2422
    %v2451 = vpack.c.b16 %v2427, %v2425
    %v2452 = vpack.c.b16 %v2428, %v2426
    %v2478 = vsel %vm989, %v2312, 0
    %v2481 = vsel %vm989, %v2314, 0
    %v2484 = vsel %vm989, %v2316, 0
    %v2487 = vsel %vm989, %v2318, 0
    %2489 = vmatprep.subr.bf16.mxu0 %v2444
    %2490 = vmatpush1.bf16.msra.mxu0 %v2443
    %2491 = vmatprep.subr.bf16.mxu0 %v2442
    %2492 = vmatpush1.bf16.msra.mxu0 %v2441
    %2493 = vmatprep.subr.bf16.mxu0 %v2440
    %2494 = vmatpush1.bf16.msra.mxu0 %v2439
    %2495 = vmatprep.subr.bf16.mxu0 %v2438
    %2496 = vmatpush1.bf16.msra.mxu0 %v2437
    %2497 = vmatprep.subr.bf16.mxu0 %v2436
    %2498 = vmatpush1.bf16.msra.mxu0 %v2435
    %2499 = vmatprep.subr.bf16.mxu0 %v2434
    %2500 = vmatpush1.bf16.msra.mxu0 %v2433
    %2501 = vmatprep.subr.bf16.mxu0 %v2432
    %2502 = vmatpush1.bf16.msra.mxu0 %v2431
    %2503 = vmatprep.subr.bf16.mxu0 %v2430
    %2504 = vmatpush1.bf16.msra.mxu0 %v2429
    %2505 = vmatprep.subr.bf16.mxu0 0
    %2506 = vmatpush2.bf16.msra.mxu0 0
    %2507 = vmatprep.subr.bf16.mxu0 0
    %2508 = vmatpush2.bf16.msra.mxu0 0
    %2509 = vmatprep.subr.bf16.mxu0 0
    %2510 = vmatpush2.bf16.msra.mxu0 0
    %2511 = vmatprep.subr.bf16.mxu0 0
    %2512 = vmatpush2.bf16.msra.mxu0 0
    %2513 = vmatprep.subr.bf16.mxu0 %v2452
    %2514 = vmatpush2.bf16.msra.mxu0 %v2451
    %2515 = vmatprep.subr.bf16.mxu0 %v2450
    %2516 = vmatpush2.bf16.msra.mxu0 %v2449
    %2517 = vmatprep.subr.bf16.mxu0 %v2448
    %2518 = vmatpush2.bf16.msra.mxu0 %v2447
    %2519 = vmatprep.subr.bf16.mxu0 %v2446
    %2520 = vmatpush2.bf16.msra.mxu0 %v2445
    %2521 = vmatprep.mubr.bf16.mxu0 %v2478
    %2522 = vmatmul.mubr.bf16.gmra.mxu0 %v2311
    %v2523 = vpop.f32.mrf.mxu0
    %v2524 = vadd.f32 %v2350, %v2523
    %v2525 = vpop.f32.mrf.mxu0
    %v2526 = vadd.f32 %v2354, %v2525
    %v2527 = vpop.f32.mrf.mxu0
    %v2528 = vadd.f32 %v2350, %v2527
    %v2529 = vpop.f32.mrf.mxu0
    %v2530 = vadd.f32 %v2354, %v2529
    %2531 = vmatprep.mubr.bf16.mxu0 %v2481
    %2532 = vmatmul.mubr.bf16.gmra.mxu0 %v2313
    %v2533 = vpop.f32.mrf.mxu0
    %v2534 = vadd.f32 %v2350, %v2533
    %v2535 = vpop.f32.mrf.mxu0
    %v2536 = vadd.f32 %v2354, %v2535
    %v2537 = vpop.f32.mrf.mxu0
    %v2538 = vadd.f32 %v2350, %v2537
    %v2539 = vpop.f32.mrf.mxu0
    %v2540 = vadd.f32 %v2354, %v2539
    %2541 = vmatprep.mubr.bf16.mxu0 %v2484
    %2542 = vmatmul.mubr.bf16.gmra.mxu0 %v2315
    %v2543 = vpop.f32.mrf.mxu0
    %v2544 = vadd.f32 %v2350, %v2543
    %v2545 = vpop.f32.mrf.mxu0
    %v2546 = vadd.f32 %v2354, %v2545
    %v2547 = vpop.f32.mrf.mxu0
    %v2548 = vadd.f32 %v2350, %v2547
    %v2549 = vpop.f32.mrf.mxu0
    %v2550 = vadd.f32 %v2354, %v2549
    %2551 = vmatprep.mubr.bf16.mxu0 %v2487
    %2552 = vmatmul.mubr.bf16.gmra.mxu0 %v2317
    %v2553 = vpop.f32.mrf.mxu0
    %v2554 = vadd.f32 %v2350, %v2553
    %v2555 = vpop.f32.mrf.mxu0
    %v2556 = vadd.f32 %v2354, %v2555
    %v2557 = vpop.f32.mrf.mxu0
    %v2558 = vpop.f32.mrf.mxu0
    %2559 = vdwg.mxu0
    %vm2560 = vcmp.ge.f32.partialorder %v2524, 0.0
    %vm2561 = vcmp.ge.f32.partialorder %v2526, 0.0
    %vm2562 = vcmp.ge.f32.partialorder %v2528, 0.0
    %vm2563 = vcmp.ge.f32.partialorder %v2530, 0.0
    %vm2564 = vcmp.ge.f32.partialorder %v2534, 0.0
    %vm2565 = vcmp.ge.f32.partialorder %v2536, 0.0
    %vm2566 = vcmp.ge.f32.partialorder %v2538, 0.0
    %vm2567 = vcmp.ge.f32.partialorder %v2540, 0.0
    %vm2568 = vcmp.ge.f32.partialorder %v2544, 0.0
    %vm2569 = vcmp.ge.f32.partialorder %v2546, 0.0
    %vm2570 = vcmp.ge.f32.partialorder %v2548, 0.0
    %vm2571 = vcmp.ge.f32.partialorder %v2550, 0.0
    %vm2572 = vcmp.ge.f32.partialorder %v2554, 0.0
    %vm2573 = vcmp.ge.f32.partialorder %v2556, 0.0
    %v2574 = vmul.f32 %v2524, 0.01
    %v2575 = vmul.f32 %v2526, 0.01
    %v2576 = vmul.f32 %v2528, 0.01
    %v2577 = vmul.f32 %v2530, 0.01
    %v2578 = vmul.f32 %v2534, 0.01
    %v2579 = vmul.f32 %v2536, 0.01
    %v2580 = vmul.f32 %v2538, 0.01
    %v2581 = vmul.f32 %v2540, 0.01
    %v2582 = vmul.f32 %v2544, 0.01
    %v2583 = vmul.f32 %v2546, 0.01
    %v2584 = vmul.f32 %v2548, 0.01
    %v2585 = vmul.f32 %v2550, 0.01
    %v2586 = vmul.f32 %v2554, 0.01
    %v2587 = vmul.f32 %v2556, 0.01
    %v2588 = vsel %vm2560, %v2524, %v2574
    %v2589 = vsel %vm2561, %v2526, %v2575
    %v2590 = vsel %vm2562, %v2528, %v2576
    %v2591 = vsel %vm2563, %v2530, %v2577
    %v2592 = vsel %vm2564, %v2534, %v2578
    %v2593 = vsel %vm2565, %v2536, %v2579
    %v2594 = vsel %vm2566, %v2538, %v2580
    %v2595 = vsel %vm2567, %v2540, %v2581
    %v2596 = vsel %vm2568, %v2544, %v2582
    %v2597 = vsel %vm2569, %v2546, %v2583
    %v2598 = vsel %vm2570, %v2548, %v2584
    %v2599 = vsel %vm2571, %v2550, %v2585
    %v2600 = vsel %vm2572, %v2554, %v2586
    %v2601 = vsel %vm2573, %v2556, %v2587
    %v2602 = vpack.c.bf16 %v2590, %v2588
    %v2603 = vpack.c.bf16 %v2591, %v2589
    %v2604 = vpack.c.bf16 %v2594, %v2592
    %v2605 = vpack.c.bf16 %v2595, %v2593
    %v2606 = vpack.c.bf16 %v2598, %v2596
    %v2607 = vpack.c.bf16 %v2599, %v2597
    %v2608 = vpack.c.bf16 %v2600, %v2600
    %v2609 = vpack.c.bf16 %v2601, %v2601
    %s2610 = scalar_lea.vmem [#allocation19], 96
    %v2611 = vld [vmem:[%s2610] sm:$0xf]
    %v2612 = vld [vmem:[%s2610 + $0x4] sm:$0xf]
    %v2613 = vld [vmem:[%s2610 + $0x8] sm:$0xf]
    %v2614 = vld [vmem:[%s2610 + $0xc] sm:$0xf]
    %v2615 = vld [vmem:[%s2610 + $0x10] sm:$0xf]
    %v2616 = vld [vmem:[%s2610 + $0x14] sm:$0xf]
    %v2617 = vld [vmem:[%s2610 + $0x18] sm:$0xf]
    %v2618 = vld [vmem:[%s2610 + $0x1c] sm:$0xf]
    %v2619 = vld [vmem:[%s2610 + $0x20] sm:$0xf]
    %v2620 = vld [vmem:[%s2610 + $0x24] sm:$0xf]
    %v2621 = vld [vmem:[%s2610 + $0x28] sm:$0xf]
    %v2622 = vld [vmem:[%s2610 + $0x2c] sm:$0xf]
    %v2623 = vld [vmem:[%s2610 + $0x30] sm:$0xf]
    %v2624 = vld [vmem:[%s2610 + $0x34] sm:$0xf]
    %v2625 = vld [vmem:[%s2610 + $0x38] sm:$0xf]
    %v2626 = vld [vmem:[%s2610 + $0x3c] sm:$0xf]
    %v2627 = vld [vmem:[%s2610 + $0x40] sm:$0xf]
    %v2628 = vld [vmem:[%s2610 + $0x44] sm:$0xf]
    %v2629 = vld [vmem:[%s2610 + $0x48] sm:$0xf]
    %v2630 = vld [vmem:[%s2610 + $0x4c] sm:$0xf]
    %v2631 = vld [vmem:[%s2610 + $0x50] sm:$0xf]
    %v2632 = vld [vmem:[%s2610 + $0x54] sm:$0xf]
    %v2633 = vld [vmem:[%s2610 + $0x58] sm:$0xf]
    %v2634 = vld [vmem:[%s2610 + $0x5c] sm:$0xf]
    %s2635 = scalar_lea.vmem [#allocation25], 1
    %v2636 = vld [vmem:[%s2635] sm:$0x1]
    %v2638 = vlaneseq
    %v2639 = vshrl.u32 %v2638, 7
    %v2640 = vsub.s32 0, %v2639
    %v2641 = vrot.slane %v2636, %v2640
    %v2667 = vunpack.c.l.b16 %v2611
    %v2668 = vunpack.c.l.b16 %v2612
    %v2669 = vunpack.c.l.b16 %v2613
    %v2670 = vunpack.c.l.b16 %v2614
    %v2671 = vunpack.c.l.b16 %v2615
    %v2672 = vunpack.c.l.b16 %v2616
    %v2673 = vunpack.c.l.b16 %v2617
    %v2674 = vunpack.c.l.b16 %v2618
    %v2675 = vunpack.c.l.b16 %v2619
    %v2676 = vunpack.c.l.b16 %v2620
    %v2677 = vunpack.c.l.b16 %v2621
    %v2678 = vunpack.c.l.b16 %v2622
    %v2679 = vunpack.c.l.b16 %v2623
    %v2680 = vunpack.c.l.b16 %v2624
    %v2681 = vunpack.c.l.b16 %v2625
    %v2682 = vunpack.c.l.b16 %v2626
    %v2683 = vunpack.c.l.b16 %v2627
    %v2684 = vunpack.c.l.b16 %v2628
    %v2685 = vunpack.c.l.b16 %v2629
    %v2686 = vunpack.c.l.b16 %v2630
    %v2687 = vunpack.c.l.b16 %v2631
    %v2688 = vunpack.c.l.b16 %v2632
    %v2689 = vunpack.c.l.b16 %v2633
    %v2690 = vunpack.c.l.b16 %v2634
    %v2691 = vpack.c.b16 %v2668, %v2667
    %v2692 = vpack.c.b16 %v2670, %v2669
    %v2693 = vpack.c.b16 %v2672, %v2671
    %v2694 = vpack.c.b16 %v2674, %v2673
    %v2695 = vpack.c.b16 %v2676, %v2675
    %v2696 = vpack.c.b16 %v2678, %v2677
    %v2697 = vpack.c.b16 %v2680, %v2679
    %v2698 = vpack.c.b16 %v2682, %v2681
    %v2699 = vpack.c.b16 %v2684, %v2683
    %v2700 = vpack.c.b16 %v2686, %v2685
    %v2701 = vpack.c.b16 %v2688, %v2687
    %v2702 = vpack.c.b16 %v2690, %v2689
    %v2716 = vsel %vm989, %v2603, 0
    %v2719 = vsel %vm989, %v2605, 0
    %v2722 = vsel %vm989, %v2607, 0
    %v2725 = vsel %vm989, %v2609, 0
    %2727 = vmatprep.subr.bf16.mxu0 0
    %2728 = vmatpush1.bf16.msra.mxu0 %v2698
    %2729 = vmatprep.subr.bf16.mxu0 0
    %2730 = vmatpush1.bf16.msra.mxu0 %v2697
    %2731 = vmatprep.subr.bf16.mxu0 0
    %2732 = vmatpush1.bf16.msra.mxu0 %v2696
    %2733 = vmatprep.subr.bf16.mxu0 0
    %2734 = vmatpush1.bf16.msra.mxu0 %v2695
    %2735 = vmatprep.subr.bf16.mxu0 0
    %2736 = vmatpush1.bf16.msra.mxu0 %v2694
    %2737 = vmatprep.subr.bf16.mxu0 0
    %2738 = vmatpush1.bf16.msra.mxu0 %v2693
    %2739 = vmatprep.subr.bf16.mxu0 0
    %2740 = vmatpush1.bf16.msra.mxu0 %v2692
    %2741 = vmatprep.subr.bf16.mxu0 0
    %2742 = vmatpush1.bf16.msra.mxu0 %v2691
    %2743 = vmatprep.subr.bf16.mxu0 0
    %2744 = vmatpush2.bf16.msra.mxu0 0
    %2745 = vmatprep.subr.bf16.mxu0 0
    %2746 = vmatpush2.bf16.msra.mxu0 0
    %2747 = vmatprep.subr.bf16.mxu0 0
    %2748 = vmatpush2.bf16.msra.mxu0 0
    %2749 = vmatprep.subr.bf16.mxu0 0
    %2750 = vmatpush2.bf16.msra.mxu0 0
    %2751 = vmatprep.subr.bf16.mxu0 0
    %2752 = vmatpush2.bf16.msra.mxu0 %v2702
    %2753 = vmatprep.subr.bf16.mxu0 0
    %2754 = vmatpush2.bf16.msra.mxu0 %v2701
    %2755 = vmatprep.subr.bf16.mxu0 0
    %2756 = vmatpush2.bf16.msra.mxu0 %v2700
    %2757 = vmatprep.subr.bf16.mxu0 0
    %2758 = vmatpush2.bf16.msra.mxu0 %v2699
    %2759 = vmatprep.mubr.bf16.mxu0 %v2716
    %2760 = vmatmul.mubr.bf16.gmra.mxu0 %v2602
    %v2761 = vpop.f32.mrf.mxu0
    %v2762 = vadd.f32 %v2641, %v2761
    %v2763 = vpop.f32.mrf.mxu0
    %v2764 = vpop.f32.mrf.mxu0
    %v2765 = vadd.f32 %v2641, %v2764
    %v2766 = vpop.f32.mrf.mxu0
    %2767 = vmatprep.mubr.bf16.mxu0 %v2719
    %2768 = vmatmul.mubr.bf16.gmra.mxu0 %v2604
    %v2769 = vpop.f32.mrf.mxu0
    %v2770 = vadd.f32 %v2641, %v2769
    %v2771 = vpop.f32.mrf.mxu0
    %v2772 = vpop.f32.mrf.mxu0
    %v2773 = vadd.f32 %v2641, %v2772
    %v2774 = vpop.f32.mrf.mxu0
    %2775 = vmatprep.mubr.bf16.mxu0 %v2722
    %2776 = vmatmul.mubr.bf16.gmra.mxu0 %v2606
    %v2777 = vpop.f32.mrf.mxu0
    %v2778 = vadd.f32 %v2641, %v2777
    %v2779 = vpop.f32.mrf.mxu0
    %v2780 = vpop.f32.mrf.mxu0
    %v2781 = vadd.f32 %v2641, %v2780
    %v2782 = vpop.f32.mrf.mxu0
    %2783 = vmatprep.mubr.bf16.mxu0 %v2725
    %2784 = vmatmul.mubr.bf16.gmra.mxu0 %v2608
    %v2785 = vpop.f32.mrf.mxu0
    %v2786 = vadd.f32 %v2641, %v2785
    %v2787 = vpop.f32.mrf.mxu0
    %v2788 = vpop.f32.mrf.mxu0
    %v2789 = vpop.f32.mrf.mxu0
    %2790 = vdwg.mxu0
    %vm2791 = vcmp.ge.f32.partialorder %v2762, 0.0
    %vm2792 = vcmp.ge.f32.partialorder %v2765, 0.0
    %vm2793 = vcmp.ge.f32.partialorder %v2770, 0.0
    %vm2794 = vcmp.ge.f32.partialorder %v2773, 0.0
    %vm2795 = vcmp.ge.f32.partialorder %v2778, 0.0
    %vm2796 = vcmp.ge.f32.partialorder %v2781, 0.0
    %vm2797 = vcmp.ge.f32.partialorder %v2786, 0.0
    %v2798 = vmul.f32 %v2762, 0.01
    %v2799 = vmul.f32 %v2765, 0.01
    %v2800 = vmul.f32 %v2770, 0.01
    %v2801 = vmul.f32 %v2773, 0.01
    %v2802 = vmul.f32 %v2778, 0.01
    %v2803 = vmul.f32 %v2781, 0.01
    %v2804 = vmul.f32 %v2786, 0.01
    %v2805 = vsel %vm2791, %v2762, %v2798
    %v2806 = vsel %vm2792, %v2765, %v2799
    %v2807 = vsel %vm2793, %v2770, %v2800
    %v2808 = vsel %vm2794, %v2773, %v2801
    %v2809 = vsel %vm2795, %v2778, %v2802
    %v2810 = vsel %vm2796, %v2781, %v2803
    %v2811 = vsel %vm2797, %v2786, %v2804
    %v2812 = vpack.c.bf16 %v2806, %v2805
    %v2813 = vpack.c.bf16 %v2808, %v2807
    %v2814 = vpack.c.bf16 %v2810, %v2809
    %v2815 = vpack.c.bf16 %v2811, %v2811
    %s2816 = scalar_lea.vmem [#allocation20], 48
    %v2817 = vld [vmem:[%s2816] sm:$0xf]
    %v2818 = vld [vmem:[%s2816 + $0x4] sm:$0xf]
    %v2819 = vld [vmem:[%s2816 + $0x8] sm:$0xf]
    %v2820 = vld [vmem:[%s2816 + $0xc] sm:$0xf]
    %v2821 = vld [vmem:[%s2816 + $0x10] sm:$0xf]
    %v2822 = vld [vmem:[%s2816 + $0x14] sm:$0xf]
    %v2823 = vld [vmem:[%s2816 + $0x18] sm:$0xf]
    %v2824 = vld [vmem:[%s2816 + $0x1c] sm:$0xf]
    %v2825 = vld [vmem:[%s2816 + $0x20] sm:$0xf]
    %v2826 = vld [vmem:[%s2816 + $0x24] sm:$0xf]
    %v2827 = vld [vmem:[%s2816 + $0x28] sm:$0xf]
    %v2828 = vld [vmem:[%s2816 + $0x2c] sm:$0xf]
    %s2829 = scalar_lea.vmem [#allocation26], 1
    %v2830 = vld [vmem:[%s2829] sm:$0x1]
    %v2832 = vlaneseq
    %v2833 = vshrl.u32 %v2832, 7
    %v2834 = vsub.s32 0, %v2833
    %v2835 = vrot.slane %v2830, %v2834
    %v2849 = vunpack.c.l.b16 %v2817
    %v2850 = vunpack.c.l.b16 %v2818
    %v2851 = vunpack.c.l.b16 %v2819
    %v2852 = vunpack.c.l.b16 %v2820
    %v2853 = vunpack.c.l.b16 %v2821
    %v2854 = vunpack.c.l.b16 %v2822
    %v2855 = vunpack.c.l.b16 %v2823
    %v2856 = vunpack.c.l.b16 %v2824
    %v2857 = vunpack.c.l.b16 %v2825
    %v2858 = vunpack.c.l.b16 %v2826
    %v2859 = vunpack.c.l.b16 %v2827
    %v2860 = vunpack.c.l.b16 %v2828
    %v2861 = vpack.c.b16 %v2850, %v2849
    %v2862 = vpack.c.b16 %v2852, %v2851
    %v2863 = vpack.c.b16 %v2854, %v2853
    %v2864 = vpack.c.b16 %v2856, %v2855
    %v2865 = vpack.c.b16 %v2858, %v2857
    %v2866 = vpack.c.b16 %v2860, %v2859
    %v2874 = vsel %vm1382, %v2812, 0
    %v2877 = vsel %vm1382, %v2813, 0
    %v2880 = vsel %vm1382, %v2814, 0
    %v2883 = vsel %vm1382, %v2815, 0
    %2885 = vmatprep.subr.bf16.mxu0 0
    %2886 = vmatpush1.bf16.msra.mxu0 0
    %2887 = vmatprep.subr.bf16.mxu0 0
    %2888 = vmatpush1.bf16.msra.mxu0 0
    %2889 = vmatprep.subr.bf16.mxu0 0
    %2890 = vmatpush1.bf16.msra.mxu0 %v2866
    %2891 = vmatprep.subr.bf16.mxu0 0
    %2892 = vmatpush1.bf16.msra.mxu0 %v2865
    %2893 = vmatprep.subr.bf16.mxu0 0
    %2894 = vmatpush1.bf16.msra.mxu0 %v2864
    %2895 = vmatprep.subr.bf16.mxu0 0
    %2896 = vmatpush1.bf16.msra.mxu0 %v2863
    %2897 = vmatprep.subr.bf16.mxu0 0
    %2898 = vmatpush1.bf16.msra.mxu0 %v2862
    %2899 = vmatprep.subr.bf16.mxu0 0
    %2900 = vmatpush1.bf16.msra.mxu0 %v2861
    %2901 = vmatprep.subr.bf16.mxu0 0
    %2902 = vmatpush2.bf16.msra.mxu0 0
    %2903 = vmatprep.subr.bf16.mxu0 0
    %2904 = vmatpush2.bf16.msra.mxu0 0
    %2905 = vmatprep.subr.bf16.mxu0 0
    %2906 = vmatpush2.bf16.msra.mxu0 0
    %2907 = vmatprep.subr.bf16.mxu0 0
    %2908 = vmatpush2.bf16.msra.mxu0 0
    %2909 = vmatprep.subr.bf16.mxu0 0
    %2910 = vmatpush2.bf16.msra.mxu0 0
    %2911 = vmatprep.subr.bf16.mxu0 0
    %2912 = vmatpush2.bf16.msra.mxu0 0
    %2913 = vmatprep.subr.bf16.mxu0 0
    %2914 = vmatpush2.bf16.msra.mxu0 0
    %2915 = vmatprep.subr.bf16.mxu0 0
    %2916 = vmatpush2.bf16.msra.mxu0 0
    %2917 = vmatprep.mubr.bf16.mxu0 0
    %2918 = vmatmul.mubr.bf16.gmra.mxu0 %v2874
    %v2919 = vpop.f32.mrf.mxu0
    %v2920 = vadd.f32 %v2835, %v2919
    %v2921 = vpop.f32.mrf.mxu0
    %v2922 = vpop.f32.mrf.mxu0
    %v2923 = vadd.f32 %v2835, %v2922
    %v2924 = vpop.f32.mrf.mxu0
    %2925 = vmatprep.mubr.bf16.mxu0 0
    %2926 = vmatmul.mubr.bf16.gmra.mxu0 %v2877
    %v2927 = vpop.f32.mrf.mxu0
    %v2928 = vadd.f32 %v2835, %v2927
    %v2929 = vpop.f32.mrf.mxu0
    %v2930 = vpop.f32.mrf.mxu0
    %v2931 = vadd.f32 %v2835, %v2930
    %v2932 = vpop.f32.mrf.mxu0
    %2933 = vmatprep.mubr.bf16.mxu0 0
    %2934 = vmatmul.mubr.bf16.gmra.mxu0 %v2880
    %v2935 = vpop.f32.mrf.mxu0
    %v2936 = vadd.f32 %v2835, %v2935
    %v2937 = vpop.f32.mrf.mxu0
    %v2938 = vpop.f32.mrf.mxu0
    %v2939 = vadd.f32 %v2835, %v2938
    %v2940 = vpop.f32.mrf.mxu0
    %2941 = vmatprep.mubr.bf16.mxu0 0
    %2942 = vmatmul.mubr.bf16.gmra.mxu0 %v2883
    %v2943 = vpop.f32.mrf.mxu0
    %v2944 = vadd.f32 %v2835, %v2943
    %v2945 = vpop.f32.mrf.mxu0
    %v2946 = vpop.f32.mrf.mxu0
    %v2947 = vpop.f32.mrf.mxu0
    %2948 = vdwg.mxu0
    %vm2949 = vcmp.ge.f32.partialorder %v2920, 0.0
    %vm2950 = vcmp.ge.f32.partialorder %v2923, 0.0
    %vm2951 = vcmp.ge.f32.partialorder %v2928, 0.0
    %vm2952 = vcmp.ge.f32.partialorder %v2931, 0.0
    %vm2953 = vcmp.ge.f32.partialorder %v2936, 0.0
    %vm2954 = vcmp.ge.f32.partialorder %v2939, 0.0
    %vm2955 = vcmp.ge.f32.partialorder %v2944, 0.0
    %v2956 = vmul.f32 %v2920, 0.01
    %v2957 = vmul.f32 %v2923, 0.01
    %v2958 = vmul.f32 %v2928, 0.01
    %v2959 = vmul.f32 %v2931, 0.01
    %v2960 = vmul.f32 %v2936, 0.01
    %v2961 = vmul.f32 %v2939, 0.01
    %v2962 = vmul.f32 %v2944, 0.01
    %v2963 = vsel %vm2949, %v2920, %v2956
    %v2964 = vsel %vm2950, %v2923, %v2957
    %v2965 = vsel %vm2951, %v2928, %v2958
    %v2966 = vsel %vm2952, %v2931, %v2959
    %v2967 = vsel %vm2953, %v2936, %v2960
    %v2968 = vsel %vm2954, %v2939, %v2961
    %v2969 = vsel %vm2955, %v2944, %v2962
    %s2970 = scalar_lea.vmem [#allocation22], 1
    %v2971 = vld [vmem:[%s2970] sm:$0x1]
    %v2973 = vlaneseq
    %v2974 = vshrl.u32 %v2973, 7
    %v2975 = vsub.s32 0, %v2974
    %v2976 = vrot.slane %v2971, %v2975
    %v2978 = vmul.f32 %v2963, %v2976
    %v2979 = vmul.f32 %v2964, %v2976
    %v2980 = vmul.f32 %v2965, %v2976
    %v2981 = vmul.f32 %v2966, %v2976
    %v2982 = vmul.f32 %v2967, %v2976
    %v2983 = vmul.f32 %v2968, %v2976
    %v2984 = vmul.f32 %v2969, %v2976
    %v2985 = vsel %vm1382, %v2978, 0.0
    %2986 = vadd.xlane.f32.xlu0 %v2985
    %v2987 = vpop.xlane.xlu0 %2986
    %v2988 = vsel %vm1382, %v2979, 0.0
    %2989 = vadd.xlane.f32.xlu0 %v2988
    %v2990 = vpop.xlane.xlu0 %2989
    %v2991 = vsel %vm1382, %v2980, 0.0
    %2992 = vadd.xlane.f32.xlu0 %v2991
    %v2993 = vpop.xlane.xlu0 %2992
    %v2994 = vsel %vm1382, %v2981, 0.0
    %2995 = vadd.xlane.f32.xlu0 %v2994
    %v2996 = vpop.xlane.xlu0 %2995
    %v2997 = vsel %vm1382, %v2982, 0.0
    %2998 = vadd.xlane.f32.xlu0 %v2997
    %v2999 = vpop.xlane.xlu0 %2998
    %v3000 = vsel %vm1382, %v2983, 0.0
    %3001 = vadd.xlane.f32.xlu0 %v3000
    %v3002 = vpop.xlane.xlu0 %3001
    %v3003 = vsel %vm1512, %v2984, 0.0
    %3004 = vadd.xlane.f32.xlu0 %v3003
    %v3005 = vpop.xlane.xlu0 %3004
    %s3006 = scalar_lea.vmem %s39, 1
    %v3007 = vld [vmem:[%s3006] sm:$0x1]
    %v3009 = vlaneseq
    %v3010 = vshrl.u32 %v3009, 7
    %v3011 = vsub.s32 0, %v3010
    %v3012 = vrot.slane %v3007, %v3011
    %v3014 = vadd.f32 %v2987, %v3012
    %v3015 = vadd.f32 %v2990, %v3012
    %v3016 = vadd.f32 %v2993, %v3012
    %v3017 = vadd.f32 %v2996, %v3012
    %v3018 = vadd.f32 %v2999, %v3012
    %v3019 = vadd.f32 %v3002, %v3012
    %v3020 = vadd.f32 %v3005, %v3012
    %3022 = vset.pattern.permute.xlu0 0
    %3023 = vperm.xlu0 %3022, %v3014
    %v3024 = vpop.permute.xlu0 %3023
    %3027 = vset.pattern.permute.xlu0 0
    %3028 = vperm.xlu0 %3027, %v3015
    %v3029 = vpop.permute.xlu0 %3028
    %3032 = vset.pattern.permute.xlu0 0
    %3033 = vperm.xlu0 %3032, %v3016
    %v3034 = vpop.permute.xlu0 %3033
    %3037 = vset.pattern.permute.xlu0 0
    %3038 = vperm.xlu0 %3037, %v3017
    %v3039 = vpop.permute.xlu0 %3038
    %3042 = vset.pattern.permute.xlu0 0
    %3043 = vperm.xlu0 %3042, %v3018
    %v3044 = vpop.permute.xlu0 %3043
    %3047 = vset.pattern.permute.xlu0 0
    %3048 = vperm.xlu0 %3047, %v3019
    %v3049 = vpop.permute.xlu0 %3048
    %3052 = vset.pattern.permute.xlu0 0
    %3053 = vperm.xlu0 %3052, %v3020
    %v3054 = vpop.permute.xlu0 %3053
    %v3056 = vmul.f32 %v3024, %v462
    %v3057 = vmul.f32 %v3029, %v463
    %v3058 = vmul.f32 %v3034, %v464
    %v3059 = vmul.f32 %v3039, %v465
    %v3060 = vmul.f32 %v3044, %v466
    %v3061 = vmul.f32 %v3049, %v467
    %v3062 = vmul.f32 %v3054, %v468
    %v3064 = vsel %vm680, %v3062, 0
    %3066 = vmatprep.subr.mxu0 0.0
    %3067 = vmatpush1.msra.mxu0 0.0
    %3068 = vmatprep.subr.mxu0 0.0
    %3069 = vmatpush1.msra.mxu0 0.0
    %3070 = vmatprep.subr.mxu0 0.0
    %3071 = vmatpush1.msra.mxu0 0.0
    %3072 = vmatprep.subr.mxu0 0.0
    %3073 = vmatpush1.msra.mxu0 0.0
    %3074 = vmatprep.subr.mxu0 0.0
    %3075 = vmatpush1.msra.mxu0 0.0
    %3076 = vmatprep.subr.mxu0 0.0
    %3077 = vmatpush1.msra.mxu0 0.0
    %3078 = vmatprep.subr.mxu0 0.0
    %3079 = vmatpush1.msra.mxu0 0.0
    %3080 = vmatprep.subr.mxu0 0.0
    %3081 = vmatpush1.msra.mxu0 0.0
    %3082 = vmatprep.subr.mxu0 0.0
    %3083 = vmatpush1.msra.mxu0 0.0
    %3084 = vmatprep.subr.mxu0 0.0
    %3085 = vmatpush1.msra.mxu0 %v3064
    %3086 = vmatprep.subr.mxu0 0.0
    %3087 = vmatpush1.msra.mxu0 %v3061
    %3088 = vmatprep.subr.mxu0 0.0
    %3089 = vmatpush1.msra.mxu0 %v3060
    %3090 = vmatprep.subr.mxu0 0.0
    %3091 = vmatpush1.msra.mxu0 %v3059
    %3092 = vmatprep.subr.mxu0 0.0
    %3093 = vmatpush1.msra.mxu0 %v3058
    %3094 = vmatprep.subr.mxu0 0.0
    %3095 = vmatpush1.msra.mxu0 %v3057
    %3096 = vmatprep.subr.mxu0 0.0
    %3097 = vmatpush1.msra.mxu0 %v3056
    %3098 = vmatprep.subr.mxu0 0.0
    %3099 = vmatpush2.msra.mxu0 0.0
    %3100 = vmatprep.subr.mxu0 0.0
    %3101 = vmatpush2.msra.mxu0 0.0
    %3102 = vmatprep.subr.mxu0 0.0
    %3103 = vmatpush2.msra.mxu0 0.0
    %3104 = vmatprep.subr.mxu0 0.0
    %3105 = vmatpush2.msra.mxu0 0.0
    %3106 = vmatprep.subr.mxu0 0.0
    %3107 = vmatpush2.msra.mxu0 0.0
    %3108 = vmatprep.subr.mxu0 0.0
    %3109 = vmatpush2.msra.mxu0 0.0
    %3110 = vmatprep.subr.mxu0 0.0
    %3111 = vmatpush2.msra.mxu0 0.0
    %3112 = vmatprep.subr.mxu0 0.0
    %3113 = vmatpush2.msra.mxu0 0.0
    %3114 = vmatprep.subr.mxu0 0.0
    %3115 = vmatpush2.msra.mxu0 0.0
    %3116 = vmatprep.subr.mxu0 0.0
    %3117 = vmatpush2.msra.mxu0 0.0
    %3118 = vmatprep.subr.mxu0 0.0
    %3119 = vmatpush2.msra.mxu0 0.0
    %3120 = vmatprep.subr.mxu0 0.0
    %3121 = vmatpush2.msra.mxu0 0.0
    %3122 = vmatprep.subr.mxu0 0.0
    %3123 = vmatpush2.msra.mxu0 0.0
    %3124 = vmatprep.subr.mxu0 0.0
    %3125 = vmatpush2.msra.mxu0 0.0
    %3126 = vmatprep.subr.mxu0 0.0
    %3127 = vmatpush2.msra.mxu0 0.0
    %3128 = vmatprep.subr.mxu0 0.0
    %3129 = vmatpush2.msra.mxu0 0.0
    %3130 = vmatprep.mubr.f32.mxu0 0.0
    %3131 = vmatmul.mubr.f32.gmra.mxu0 %v1574
    %v3132 = vpop.f32.mrf.mxu0
    %v3133 = vadd.f32 0.0, %v3132
    %v3134 = vpop.f32.mrf.mxu0
    %3135 = vmatprep.mubr.f32.mxu0 0.0
    %3136 = vmatmul.mubr.f32.gmra.mxu0 %v1577
    %v3137 = vpop.f32.mrf.mxu0
    %v3138 = vadd.f32 0.0, %v3137
    %v3139 = vpop.f32.mrf.mxu0
    %3140 = vdwg.mxu0
    %v3141 = vsub.f32 %v3133, %v458
    %v3142 = vsub.f32 %v3138, %v459
    %v3143 = vsel %vm494, %v3141, -inf
    %3144 = vmax.xlane.f32.xlu0 %v3143
    %v3145 = vpop.xlane.xlu0 %3144
    %v3146 = vsel %vm1662, %v3142, -inf
    %3147 = vmax.xlane.f32.xlu0 %v3146
    %v3148 = vpop.xlane.xlu0 %3147
    %v3149 = vsub.f32 %v3141, %v3145
    %v3150 = vsub.f32 %v3142, %v3148
    %v3151 = vmul.f32 %v3149, 1.442695
    %v3152 = vpow.pop %v3151
    %v3153 = vmul.f32 %v3150, 1.442695
    %v3154 = vpow.pop %v3153
    %v3155 = vsel %vm494, %v3152, 0.0
    %3156 = vadd.xlane.f32.xlu0 %v3155
    %v3157 = vpop.xlane.xlu0 %3156
    %v3158 = vsel %vm1662, %v3154, 0.0
    %3159 = vadd.xlane.f32.xlu0 %v3158
    %v3160 = vpop.xlane.xlu0 %3159
    %v3161 = vrcp.pop %v3157
    %v3162 = vrcp.pop %v3160
    %v3163 = vmul.f32 %v3152, %v3161
    %v3164 = vmul.f32 %v3154, %v3162
    %v3165 = vpack.c.bf16 %v3164, %v3163
    %s3166 = scalar_lea.vmem [#allocation28], 1
    %v3167 = vld [vmem:[%s3166] sm:$0x1]
    %v3169 = vsel %vm494, %v3165, 0
    %3171 = vmatprep.subr.bf16.mxu0 0
    %3172 = vmatpush1.bf16.msra.mxu0 0
    %3173 = vmatprep.subr.bf16.mxu0 0
    %3174 = vmatpush1.bf16.msra.mxu0 0
    %3175 = vmatprep.subr.bf16.mxu0 0
    %3176 = vmatpush1.bf16.msra.mxu0 0
    %3177 = vmatprep.subr.bf16.mxu0 0
    %3178 = vmatpush1.bf16.msra.mxu0 0
    %3179 = vmatprep.subr.bf16.mxu0 0
    %3180 = vmatpush1.bf16.msra.mxu0 0
    %3181 = vmatprep.subr.bf16.mxu0 0
    %3182 = vmatpush1.bf16.msra.mxu0 0
    %3183 = vmatprep.subr.bf16.mxu0 0
    %3184 = vmatpush1.bf16.msra.mxu0 0
    %3185 = vmatprep.subr.bf16.mxu0 0
    %3186 = vmatpush1.bf16.msra.mxu0 %v509
    %3187 = vmatprep.subr.bf16.mxu0 0
    %3188 = vmatpush2.bf16.msra.mxu0 0
    %3189 = vmatprep.subr.bf16.mxu0 0
    %3190 = vmatpush2.bf16.msra.mxu0 0
    %3191 = vmatprep.subr.bf16.mxu0 0
    %3192 = vmatpush2.bf16.msra.mxu0 0
    %3193 = vmatprep.subr.bf16.mxu0 0
    %3194 = vmatpush2.bf16.msra.mxu0 0
    %3195 = vmatprep.subr.bf16.mxu0 0
    %3196 = vmatpush2.bf16.msra.mxu0 0
    %3197 = vmatprep.subr.bf16.mxu0 0
    %3198 = vmatpush2.bf16.msra.mxu0 0
    %3199 = vmatprep.subr.bf16.mxu0 0
    %3200 = vmatpush2.bf16.msra.mxu0 0
    %3201 = vmatprep.subr.bf16.mxu0 0
    %3202 = vmatpush2.bf16.msra.mxu0 0
    %3203 = vmatprep.mubr.bf16.mxu0 0
    %3204 = vmatmul.mubr.bf16.gmra.mxu0 %v3169
    %v3205 = vpop.f32.mrf.mxu0
    %v3206 = vadd.f32 0.0, %v3205
    %v3207 = vpop.f32.mrf.mxu0
    %v3208 = vpop.f32.mrf.mxu0
    %v3209 = vadd.f32 0.0, %v3208
    %v3210 = vpop.f32.mrf.mxu0
    %3211 = vdwg.mxu0
    %v3212 = vpack.c.bf16 %v3209, %v3206
    %s3213 = scalar_lea.vmem [#allocation32], 20
    %v3214 = vld [vmem:[%s3213] sm:$0xf]
    %v3215 = vld [vmem:[%s3213 + $0x4] sm:$0xf]
    %v3216 = vld [vmem:[%s3213 + $0x8] sm:$0xf]
    %v3217 = vld [vmem:[%s3213 + $0xc] sm:$0xf]
    %v3218 = vld [vmem:[%s3213 + $0x10] sm:$0x3]
    %v3224 = vunpack.c.l.b16 %v3214
    %v3225 = vunpack.c.l.b16 %v3215
    %v3226 = vunpack.c.l.b16 %v3216
    %v3227 = vunpack.c.l.b16 %v3217
    %v3228 = vunpack.c.l.b16 %v3218
    %v3229 = vpack.c.b16 %v3225, %v3224
    %v3230 = vpack.c.b16 %v3227, %v3226
    %v3231 = vpack.c.b16 %v3228, %v3228
    %v3235 = vsel %vm680, %v3231, 0
    %3237 = vmatprep.subr.bf16.mxu0 0
    %3238 = vmatpush1.bf16.msra.mxu0 0
    %3239 = vmatprep.subr.bf16.mxu0 0
    %3240 = vmatpush1.bf16.msra.mxu0 0
    %3241 = vmatprep.subr.bf16.mxu0 0
    %3242 = vmatpush1.bf16.msra.mxu0 0
    %3243 = vmatprep.subr.bf16.mxu0 0
    %3244 = vmatpush1.bf16.msra.mxu0 0
    %3245 = vmatprep.subr.bf16.mxu0 0
    %3246 = vmatpush1.bf16.msra.mxu0 0
    %3247 = vmatprep.subr.bf16.mxu0 0
    %3248 = vmatpush1.bf16.msra.mxu0 %v3235
    %3249 = vmatprep.subr.bf16.mxu0 0
    %3250 = vmatpush1.bf16.msra.mxu0 %v3230
    %3251 = vmatprep.subr.bf16.mxu0 0
    %3252 = vmatpush1.bf16.msra.mxu0 %v3229
    %3253 = vmatprep.subr.bf16.mxu0 0
    %3254 = vmatpush2.bf16.msra.mxu0 0
    %3255 = vmatprep.subr.bf16.mxu0 0
    %3256 = vmatpush2.bf16.msra.mxu0 0
    %3257 = vmatprep.subr.bf16.mxu0 0
    %3258 = vmatpush2.bf16.msra.mxu0 0
    %3259 = vmatprep.subr.bf16.mxu0 0
    %3260 = vmatpush2.bf16.msra.mxu0 0
    %3261 = vmatprep.subr.bf16.mxu0 0
    %3262 = vmatpush2.bf16.msra.mxu0 0
    %3263 = vmatprep.subr.bf16.mxu0 0
    %3264 = vmatpush2.bf16.msra.mxu0 0
    %3265 = vmatprep.subr.bf16.mxu0 0
    %3266 = vmatpush2.bf16.msra.mxu0 0
    %3267 = vmatprep.subr.bf16.mxu0 0
    %3268 = vmatpush2.bf16.msra.mxu0 0
    %3269 = vmatprep.mubr.bf16.mxu0 0
    %3270 = vmatmul.mubr.bf16.gmra.mxu0 %v1750
    %v3271 = vpop.f32.mrf.mxu0
    %v3272 = vadd.f32 0.0, %v3271
    %v3273 = vpop.f32.mrf.mxu0
    %v3274 = vpop.f32.mrf.mxu0
    %v3275 = vadd.f32 0.0, %v3274
    %v3276 = vpop.f32.mrf.mxu0
    %3277 = vdwg.mxu0
    %v3279 = vlaneseq
    %v3280 = vshrl.u32 %v3279, 7
    %v3281 = vsub.s32 0, %v3280
    %v3282 = vrot.slane %v3167, %v3281
    %v3284 = vadd.f32 %v3282, %v3272
    %v3285 = vadd.f32 %v3282, %v3275
    %s3286 = scalar_lea.vmem [#allocation35], 20
    %v3287 = vld [vmem:[%s3286] sm:$0xf]
    %v3288 = vld [vmem:[%s3286 + $0x4] sm:$0xf]
    %v3289 = vld [vmem:[%s3286 + $0x8] sm:$0xf]
    %v3290 = vld [vmem:[%s3286 + $0xc] sm:$0xf]
    %v3291 = vld [vmem:[%s3286 + $0x10] sm:$0x3]
    %v3297 = vunpack.c.l.b16 %v3287
    %v3298 = vunpack.c.l.b16 %v3288
    %v3299 = vunpack.c.l.b16 %v3289
    %v3300 = vunpack.c.l.b16 %v3290
    %v3301 = vunpack.c.l.b16 %v3291
    %v3302 = vpack.c.b16 %v3298, %v3297
    %v3303 = vpack.c.b16 %v3300, %v3299
    %v3304 = vpack.c.b16 %v3301, %v3301
    %v3308 = vsel %vm667, %v3212, 0
    %v3311 = vsel %vm680, %v3304, 0
    %3313 = vmatprep.subr.bf16.mxu0 0
    %3314 = vmatpush1.bf16.msra.mxu0 0
    %3315 = vmatprep.subr.bf16.mxu0 0
    %3316 = vmatpush1.bf16.msra.mxu0 0
    %3317 = vmatprep.subr.bf16.mxu0 0
    %3318 = vmatpush1.bf16.msra.mxu0 0
    %3319 = vmatprep.subr.bf16.mxu0 0
    %3320 = vmatpush1.bf16.msra.mxu0 0
    %3321 = vmatprep.subr.bf16.mxu0 0
    %3322 = vmatpush1.bf16.msra.mxu0 0
    %3323 = vmatprep.subr.bf16.mxu0 0
    %3324 = vmatpush1.bf16.msra.mxu0 %v3311
    %3325 = vmatprep.subr.bf16.mxu0 0
    %3326 = vmatpush1.bf16.msra.mxu0 %v3303
    %3327 = vmatprep.subr.bf16.mxu0 0
    %3328 = vmatpush1.bf16.msra.mxu0 %v3302
    %3329 = vmatprep.subr.bf16.mxu0 0
    %3330 = vmatpush2.bf16.msra.mxu0 0
    %3331 = vmatprep.subr.bf16.mxu0 0
    %3332 = vmatpush2.bf16.msra.mxu0 0
    %3333 = vmatprep.subr.bf16.mxu0 0
    %3334 = vmatpush2.bf16.msra.mxu0 0
    %3335 = vmatprep.subr.bf16.mxu0 0
    %3336 = vmatpush2.bf16.msra.mxu0 0
    %3337 = vmatprep.subr.bf16.mxu0 0
    %3338 = vmatpush2.bf16.msra.mxu0 0
    %3339 = vmatprep.subr.bf16.mxu0 0
    %3340 = vmatpush2.bf16.msra.mxu0 0
    %3341 = vmatprep.subr.bf16.mxu0 0
    %3342 = vmatpush2.bf16.msra.mxu0 0
    %3343 = vmatprep.subr.bf16.mxu0 0
    %3344 = vmatpush2.bf16.msra.mxu0 0
    %3345 = vmatprep.mubr.bf16.mxu0 0
    %3346 = vmatmul.mubr.bf16.gmra.mxu0 %v3308
    %v3347 = vpop.f32.mrf.mxu0
    %v3348 = vadd.f32 0.0, %v3347
    %v3349 = vpop.f32.mrf.mxu0
    %v3350 = vpop.f32.mrf.mxu0
    %v3351 = vadd.f32 0.0, %v3350
    %v3352 = vpop.f32.mrf.mxu0
    %3353 = vdwg.mxu0
    %v3354 = vadd.f32 %v3284, %v3348
    %v3355 = vadd.f32 %v3285, %v3351
    %3356 = vmatprep.subr.bf16.mxu0 0
    %3357 = vmatpush1.bf16.msra.mxu0 0
    %3358 = vmatprep.subr.bf16.mxu0 0
    %3359 = vmatpush1.bf16.msra.mxu0 0
    %3360 = vmatprep.subr.bf16.mxu0 0
    %3361 = vmatpush1.bf16.msra.mxu0 0
    %3362 = vmatprep.subr.bf16.mxu0 0
    %3363 = vmatpush1.bf16.msra.mxu0 0
    %3364 = vmatprep.subr.bf16.mxu0 0
    %3365 = vmatpush1.bf16.msra.mxu0 0
    %3366 = vmatprep.subr.bf16.mxu0 0
    %3367 = vmatpush1.bf16.msra.mxu0 0
    %3368 = vmatprep.subr.bf16.mxu0 0
    %3369 = vmatpush1.bf16.msra.mxu0 0
    %3370 = vmatprep.subr.bf16.mxu0 0
    %3371 = vmatpush1.bf16.msra.mxu0 %v1881
    %3372 = vmatprep.subr.bf16.mxu0 0
    %3373 = vmatpush2.bf16.msra.mxu0 0
    %3374 = vmatprep.subr.bf16.mxu0 0
    %3375 = vmatpush2.bf16.msra.mxu0 0
    %3376 = vmatprep.subr.bf16.mxu0 0
    %3377 = vmatpush2.bf16.msra.mxu0 0
    %3378 = vmatprep.subr.bf16.mxu0 0
    %3379 = vmatpush2.bf16.msra.mxu0 0
    %3380 = vmatprep.subr.bf16.mxu0 0
    %3381 = vmatpush2.bf16.msra.mxu0 0
    %3382 = vmatprep.subr.bf16.mxu0 0
    %3383 = vmatpush2.bf16.msra.mxu0 0
    %3384 = vmatprep.subr.bf16.mxu0 0
    %3385 = vmatpush2.bf16.msra.mxu0 0
    %3386 = vmatprep.subr.bf16.mxu0 0
    %3387 = vmatpush2.bf16.msra.mxu0 0
    %3388 = vmatprep.mubr.bf16.mxu0 0
    %3389 = vmatmul.mubr.bf16.gmra.mxu0 %v3169
    %v3390 = vpop.f32.mrf.mxu0
    %v3391 = vadd.f32 0.0, %v3390
    %v3392 = vpop.f32.mrf.mxu0
    %v3393 = vpop.f32.mrf.mxu0
    %v3394 = vadd.f32 0.0, %v3393
    %v3395 = vpop.f32.mrf.mxu0
    %3396 = vdwg.mxu0
    %v3397 = vpack.c.bf16 %v3394, %v3391
    %v3398 = vld [vmem:[#allocation34] sm:$0xf]
    %v3399 = vld [vmem:[#allocation34 + $0x4] sm:$0xf]
    %v3400 = vld [vmem:[#allocation34 + $0x8] sm:$0xf]
    %v3401 = vld [vmem:[#allocation34 + $0xc] sm:$0xf]
    %v3402 = vld [vmem:[#allocation34 + $0x10] sm:$0xf]
    %v3403 = vld [vmem:[#allocation34 + $0x14] sm:$0xf]
    %v3410 = vunpack.c.l.b16 %v3398
    %v3411 = vunpack.c.l.b16 %v3399
    %v3412 = vunpack.c.l.b16 %v3400
    %v3413 = vunpack.c.l.b16 %v3401
    %v3414 = vunpack.c.l.b16 %v3402
    %v3415 = vunpack.c.l.b16 %v3403
    %v3416 = vpack.c.b16 %v3411, %v3410
    %v3417 = vpack.c.b16 %v3413, %v3412
    %v3418 = vpack.c.b16 %v3415, %v3414
    %v3423 = vsel %vm2171, %v1999, 0
    %3425 = vmatprep.subr.bf16.mxu0 0
    %3426 = vmatpush1.bf16.msra.mxu0 0
    %3427 = vmatprep.subr.bf16.mxu0 0
    %3428 = vmatpush1.bf16.msra.mxu0 0
    %3429 = vmatprep.subr.bf16.mxu0 0
    %3430 = vmatpush1.bf16.msra.mxu0 0
    %3431 = vmatprep.subr.bf16.mxu0 0
    %3432 = vmatpush1.bf16.msra.mxu0 0
    %3433 = vmatprep.subr.bf16.mxu0 0
    %3434 = vmatpush1.bf16.msra.mxu0 0
    %3435 = vmatprep.subr.bf16.mxu0 0
    %3436 = vmatpush1.bf16.msra.mxu0 %v3418
    %3437 = vmatprep.subr.bf16.mxu0 0
    %3438 = vmatpush1.bf16.msra.mxu0 %v3417
    %3439 = vmatprep.subr.bf16.mxu0 0
    %3440 = vmatpush1.bf16.msra.mxu0 %v3416
    %3441 = vmatprep.subr.bf16.mxu0 0
    %3442 = vmatpush2.bf16.msra.mxu0 0
    %3443 = vmatprep.subr.bf16.mxu0 0
    %3444 = vmatpush2.bf16.msra.mxu0 0
    %3445 = vmatprep.subr.bf16.mxu0 0
    %3446 = vmatpush2.bf16.msra.mxu0 0
    %3447 = vmatprep.subr.bf16.mxu0 0
    %3448 = vmatpush2.bf16.msra.mxu0 0
    %3449 = vmatprep.subr.bf16.mxu0 0
    %3450 = vmatpush2.bf16.msra.mxu0 0
    %3451 = vmatprep.subr.bf16.mxu0 0
    %3452 = vmatpush2.bf16.msra.mxu0 0
    %3453 = vmatprep.subr.bf16.mxu0 0
    %3454 = vmatpush2.bf16.msra.mxu0 0
    %3455 = vmatprep.subr.bf16.mxu0 0
    %3456 = vmatpush2.bf16.msra.mxu0 0
    %3457 = vmatprep.mubr.bf16.mxu0 0
    %3458 = vmatmul.mubr.bf16.gmra.mxu0 %v3423
    %v3459 = vpop.f32.mrf.mxu0
    %v3460 = vadd.f32 0.0, %v3459
    %v3461 = vpop.f32.mrf.mxu0
    %v3462 = vpop.f32.mrf.mxu0
    %v3463 = vadd.f32 0.0, %v3462
    %v3464 = vpop.f32.mrf.mxu0
    %3465 = vdwg.mxu0
    %v3466 = vadd.f32 %v3354, %v3460
    %v3467 = vadd.f32 %v3355, %v3463
    %v3468 = vld [vmem:[#allocation37] sm:$0xf]
    %v3469 = vld [vmem:[#allocation37 + $0x4] sm:$0xf]
    %v3470 = vld [vmem:[#allocation37 + $0x8] sm:$0xf]
    %v3471 = vld [vmem:[#allocation37 + $0xc] sm:$0xf]
    %v3472 = vld [vmem:[#allocation37 + $0x10] sm:$0xf]
    %v3473 = vld [vmem:[#allocation37 + $0x14] sm:$0xf]
    %v3480 = vunpack.c.l.b16 %v3468
    %v3481 = vunpack.c.l.b16 %v3469
    %v3482 = vunpack.c.l.b16 %v3470
    %v3483 = vunpack.c.l.b16 %v3471
    %v3484 = vunpack.c.l.b16 %v3472
    %v3485 = vunpack.c.l.b16 %v3473
    %v3486 = vpack.c.b16 %v3481, %v3480
    %v3487 = vpack.c.b16 %v3483, %v3482
    %v3488 = vpack.c.b16 %v3485, %v3484
    %v3493 = vsel %vm2171, %v3397, 0
    %3495 = vmatprep.subr.bf16.mxu0 0
    %3496 = vmatpush1.bf16.msra.mxu0 0
    %3497 = vmatprep.subr.bf16.mxu0 0
    %3498 = vmatpush1.bf16.msra.mxu0 0
    %3499 = vmatprep.subr.bf16.mxu0 0
    %3500 = vmatpush1.bf16.msra.mxu0 0
    %3501 = vmatprep.subr.bf16.mxu0 0
    %3502 = vmatpush1.bf16.msra.mxu0 0
    %3503 = vmatprep.subr.bf16.mxu0 0
    %3504 = vmatpush1.bf16.msra.mxu0 0
    %3505 = vmatprep.subr.bf16.mxu0 0
    %3506 = vmatpush1.bf16.msra.mxu0 %v3488
    %3507 = vmatprep.subr.bf16.mxu0 0
    %3508 = vmatpush1.bf16.msra.mxu0 %v3487
    %3509 = vmatprep.subr.bf16.mxu0 0
    %3510 = vmatpush1.bf16.msra.mxu0 %v3486
    %3511 = vmatprep.subr.bf16.mxu0 0
    %3512 = vmatpush2.bf16.msra.mxu0 0
    %3513 = vmatprep.subr.bf16.mxu0 0
    %3514 = vmatpush2.bf16.msra.mxu0 0
    %3515 = vmatprep.subr.bf16.mxu0 0
    %3516 = vmatpush2.bf16.msra.mxu0 0
    %3517 = vmatprep.subr.bf16.mxu0 0
    %3518 = vmatpush2.bf16.msra.mxu0 0
    %3519 = vmatprep.subr.bf16.mxu0 0
    %3520 = vmatpush2.bf16.msra.mxu0 0
    %3521 = vmatprep.subr.bf16.mxu0 0
    %3522 = vmatpush2.bf16.msra.mxu0 0
    %3523 = vmatprep.subr.bf16.mxu0 0
    %3524 = vmatpush2.bf16.msra.mxu0 0
    %3525 = vmatprep.subr.bf16.mxu0 0
    %3526 = vmatpush2.bf16.msra.mxu0 0
    %3527 = vmatprep.mubr.bf16.mxu0 0
    %3528 = vmatmul.mubr.bf16.gmra.mxu0 %v3493
    %v3529 = vpop.f32.mrf.mxu0
    %v3530 = vadd.f32 0.0, %v3529
    %v3531 = vpop.f32.mrf.mxu0
    %v3532 = vpop.f32.mrf.mxu0
    %v3533 = vadd.f32 0.0, %v3532
    %v3534 = vpop.f32.mrf.mxu0
    %3535 = vdwg.mxu0
    %v3536 = vadd.f32 %v3466, %v3530
    %v3537 = vadd.f32 %v3467, %v3533
    %vm3538 = vcmp.ge.f32.partialorder %v3536, 0.0
    %vm3539 = vcmp.ge.f32.partialorder %v3537, 0.0
    %v3540 = vmul.f32 %v3536, 0.01
    %v3541 = vmul.f32 %v3537, 0.01
    %v3542 = vsel %vm3538, %v3536, %v3540
    %v3543 = vsel %vm3539, %v3537, %v3541
    %v3544 = vpack.c.bf16 %v3543, %v3542
    %v3545 = vld [vmem:[#allocation5] sm:$0xf]
    %v3546 = vld [vmem:[#allocation5 + $0x4] sm:$0x1]
    %v3547 = vld [vmem:[#allocation8] sm:$0x1]
    %v3548 = vld [vmem:[#allocation11] sm:$0x3]
    %v3549 = vmul.f32 %v3548, 1e+08
    %v3550 = vld [vmem:[#allocation14] sm:$0x3]
    %v3551 = vld [vmem:[#allocation16] sm:$0xff]
    %v3552 = vld [vmem:[#allocation16 + $0x8] sm:$0x3]
    %v3555 = vunpack.c.l.b16 %v3545
    %v3556 = vunpack.c.l.b16 %v3546
    %v3557 = vpack.c.b16 %v3556, %v3555
    %v3559 = vsel %vm494, %v3557, 0
    %3561 = vmatprep.subr.bf16.mxu0 0
    %3562 = vmatpush1.bf16.msra.mxu0 0
    %3563 = vmatprep.subr.bf16.mxu0 0
    %3564 = vmatpush1.bf16.msra.mxu0 0
    %3565 = vmatprep.subr.bf16.mxu0 0
    %3566 = vmatpush1.bf16.msra.mxu0 0
    %3567 = vmatprep.subr.bf16.mxu0 0
    %3568 = vmatpush1.bf16.msra.mxu0 0
    %3569 = vmatprep.subr.bf16.mxu0 0
    %3570 = vmatpush1.bf16.msra.mxu0 0
    %3571 = vmatprep.subr.bf16.mxu0 0
    %3572 = vmatpush1.bf16.msra.mxu0 0
    %3573 = vmatprep.subr.bf16.mxu0 0
    %3574 = vmatpush1.bf16.msra.mxu0 0
    %3575 = vmatprep.subr.bf16.mxu0 0
    %3576 = vmatpush1.bf16.msra.mxu0 %v509
    %3577 = vmatprep.subr.bf16.mxu0 0
    %3578 = vmatpush2.bf16.msra.mxu0 0
    %3579 = vmatprep.subr.bf16.mxu0 0
    %3580 = vmatpush2.bf16.msra.mxu0 0
    %3581 = vmatprep.subr.bf16.mxu0 0
    %3582 = vmatpush2.bf16.msra.mxu0 0
    %3583 = vmatprep.subr.bf16.mxu0 0
    %3584 = vmatpush2.bf16.msra.mxu0 0
    %3585 = vmatprep.subr.bf16.mxu0 0
    %3586 = vmatpush2.bf16.msra.mxu0 0
    %3587 = vmatprep.subr.bf16.mxu0 0
    %3588 = vmatpush2.bf16.msra.mxu0 0
    %3589 = vmatprep.subr.bf16.mxu0 0
    %3590 = vmatpush2.bf16.msra.mxu0 0
    %3591 = vmatprep.subr.bf16.mxu0 0
    %3592 = vmatpush2.bf16.msra.mxu0 0
    %3593 = vmatprep.mubr.bf16.mxu0 0
    %3594 = vmatmul.mubr.bf16.gmra.mxu0 %v3559
    %v3595 = vpop.f32.mrf.mxu0
    %v3596 = vadd.f32 0.0, %v3595
    %v3597 = vpop.f32.mrf.mxu0
    %v3598 = vpop.f32.mrf.mxu0
    %v3599 = vadd.f32 0.0, %v3598
    %v3600 = vpop.f32.mrf.mxu0
    %3601 = vdwg.mxu0
    %v3602 = vand.u32 2147483647, %v3596
    %v3603 = vand.u32 2147483647, %v3599
    %v3604 = vpack.c.bf16 %v3603, %v3602
    %3605 = vmatprep.subr.bf16.mxu0 0
    %3606 = vmatpush1.bf16.msra.mxu0 0
    %3607 = vmatprep.subr.bf16.mxu0 0
    %3608 = vmatpush1.bf16.msra.mxu0 0
    %3609 = vmatprep.subr.bf16.mxu0 0
    %3610 = vmatpush1.bf16.msra.mxu0 0
    %3611 = vmatprep.subr.bf16.mxu0 0
    %3612 = vmatpush1.bf16.msra.mxu0 0
    %3613 = vmatprep.subr.bf16.mxu0 0
    %3614 = vmatpush1.bf16.msra.mxu0 0
    %3615 = vmatprep.subr.bf16.mxu0 0
    %3616 = vmatpush1.bf16.msra.mxu0 0
    %3617 = vmatprep.subr.bf16.mxu0 0
    %3618 = vmatpush1.bf16.msra.mxu0 0
    %3619 = vmatprep.subr.bf16.mxu0 0
    %3620 = vmatpush1.bf16.msra.mxu0 %v1881
    %3621 = vmatprep.subr.bf16.mxu0 0
    %3622 = vmatpush2.bf16.msra.mxu0 0
    %3623 = vmatprep.subr.bf16.mxu0 0
    %3624 = vmatpush2.bf16.msra.mxu0 0
    %3625 = vmatprep.subr.bf16.mxu0 0
    %3626 = vmatpush2.bf16.msra.mxu0 0
    %3627 = vmatprep.subr.bf16.mxu0 0
    %3628 = vmatpush2.bf16.msra.mxu0 0
    %3629 = vmatprep.subr.bf16.mxu0 0
    %3630 = vmatpush2.bf16.msra.mxu0 0
    %3631 = vmatprep.subr.bf16.mxu0 0
    %3632 = vmatpush2.bf16.msra.mxu0 0
    %3633 = vmatprep.subr.bf16.mxu0 0
    %3634 = vmatpush2.bf16.msra.mxu0 0
    %3635 = vmatprep.subr.bf16.mxu0 0
    %3636 = vmatpush2.bf16.msra.mxu0 0
    %3637 = vmatprep.mubr.bf16.mxu0 0
    %3638 = vmatmul.mubr.bf16.gmra.mxu0 %v3559
    %v3639 = vpop.f32.mrf.mxu0
    %v3640 = vadd.f32 0.0, %v3639
    %v3641 = vpop.f32.mrf.mxu0
    %v3642 = vpop.f32.mrf.mxu0
    %v3643 = vadd.f32 0.0, %v3642
    %v3644 = vpop.f32.mrf.mxu0
    %3645 = vdwg.mxu0
    %v3646 = vand.u32 2147483647, %v3640
    %v3647 = vand.u32 2147483647, %v3643
    %v3648 = vpack.c.bf16 %v3647, %v3646
    %v3650 = vsel %vm507, %v3544, 0
    %3652 = vmatprep.subr.bf16.mxu0 0
    %3653 = vmatpush1.bf16.msra.mxu0 0
    %3654 = vmatprep.subr.bf16.mxu0 0
    %3655 = vmatpush1.bf16.msra.mxu0 0
    %3656 = vmatprep.subr.bf16.mxu0 0
    %3657 = vmatpush1.bf16.msra.mxu0 0
    %3658 = vmatprep.subr.bf16.mxu0 0
    %3659 = vmatpush1.bf16.msra.mxu0 0
    %3660 = vmatprep.subr.bf16.mxu0 0
    %3661 = vmatpush1.bf16.msra.mxu0 0
    %3662 = vmatprep.subr.bf16.mxu0 0
    %3663 = vmatpush1.bf16.msra.mxu0 0
    %3664 = vmatprep.subr.bf16.mxu0 0
    %3665 = vmatpush1.bf16.msra.mxu0 0
    %3666 = vmatprep.subr.bf16.mxu0 0
    %3667 = vmatpush1.bf16.msra.mxu0 %v3650
    %3668 = vmatprep.subr.bf16.mxu0 0
    %3669 = vmatpush2.bf16.msra.mxu0 0
    %3670 = vmatprep.subr.bf16.mxu0 0
    %3671 = vmatpush2.bf16.msra.mxu0 0
    %3672 = vmatprep.subr.bf16.mxu0 0
    %3673 = vmatpush2.bf16.msra.mxu0 0
    %3674 = vmatprep.subr.bf16.mxu0 0
    %3675 = vmatpush2.bf16.msra.mxu0 0
    %3676 = vmatprep.subr.bf16.mxu0 0
    %3677 = vmatpush2.bf16.msra.mxu0 0
    %3678 = vmatprep.subr.bf16.mxu0 0
    %3679 = vmatpush2.bf16.msra.mxu0 0
    %3680 = vmatprep.subr.bf16.mxu0 0
    %3681 = vmatpush2.bf16.msra.mxu0 0
    %3682 = vmatprep.subr.bf16.mxu0 0
    %3683 = vmatpush2.bf16.msra.mxu0 0
    %3684 = vmatprep.mubr.bf16.mxu0 0
    %3685 = vmatmul.mubr.bf16.gmra.mxu0 %v3559
    %v3686 = vpop.f32.mrf.mxu0
    %v3687 = vadd.f32 0.0, %v3686
    %v3688 = vpop.f32.mrf.mxu0
    %v3689 = vpop.f32.mrf.mxu0
    %v3690 = vadd.f32 0.0, %v3689
    %v3691 = vpop.f32.mrf.mxu0
    %3692 = vdwg.mxu0
    %v3693 = vand.u32 2147483647, %v3687
    %v3694 = vand.u32 2147483647, %v3690
    %v3695 = vpack.c.bf16 %v3694, %v3693
    %s3696 = scalar_lea.vmem %s31, 4
    %v3697 = vld [vmem:[%s3696] sm:$0x3]
    %s3698 = scalar_lea.vmem %s43, 80
    %v3699 = vld [vmem:[%s3698] sm:$0xff]
    %v3700 = vld [vmem:[%s3698 + $0x8] sm:$0xff]
    %v3701 = vld [vmem:[%s3698 + $0x10] sm:$0xff]
    %v3702 = vld [vmem:[%s3698 + $0x18] sm:$0xff]
    %v3703 = vld [vmem:[%s3698 + $0x20] sm:$0x33]
    %v3709 = vunpack.c.l.b16 %v3699
    %v3710 = vunpack.c.h.b16 %v3699
    %v3711 = vunpack.c.l.b16 %v3700
    %v3712 = vunpack.c.h.b16 %v3700
    %v3713 = vunpack.c.l.b16 %v3701
    %v3714 = vunpack.c.h.b16 %v3701
    %v3715 = vunpack.c.l.b16 %v3702
    %v3716 = vunpack.c.h.b16 %v3702
    %v3717 = vunpack.c.l.b16 %v3703
    %v3718 = vunpack.c.h.b16 %v3703
    %v3719 = vpack.c.b16 %v3711, %v3709
    %v3720 = vpack.c.b16 %v3712, %v3710
    %v3721 = vpack.c.b16 %v3715, %v3713
    %v3722 = vpack.c.b16 %v3716, %v3714
    %v3723 = vpack.c.b16 %v3717, %v3717
    %v3724 = vpack.c.b16 %v3718, %v3718
    %v3730 = vsel %vm667, %v3604, 0
    %v3733 = vsel %vm680, %v3723, 0
    %v3736 = vsel %vm680, %v3724, 0
    %3738 = vmatprep.subr.bf16.mxu0 0
    %3739 = vmatpush1.bf16.msra.mxu0 0
    %3740 = vmatprep.subr.bf16.mxu0 0
    %3741 = vmatpush1.bf16.msra.mxu0 0
    %3742 = vmatprep.subr.bf16.mxu0 0
    %3743 = vmatpush1.bf16.msra.mxu0 0
    %3744 = vmatprep.subr.bf16.mxu0 0
    %3745 = vmatpush1.bf16.msra.mxu0 0
    %3746 = vmatprep.subr.bf16.mxu0 0
    %3747 = vmatpush1.bf16.msra.mxu0 0
    %3748 = vmatprep.subr.bf16.mxu0 %v3736
    %3749 = vmatpush1.bf16.msra.mxu0 %v3733
    %3750 = vmatprep.subr.bf16.mxu0 %v3722
    %3751 = vmatpush1.bf16.msra.mxu0 %v3721
    %3752 = vmatprep.subr.bf16.mxu0 %v3720
    %3753 = vmatpush1.bf16.msra.mxu0 %v3719
    %3754 = vmatprep.subr.bf16.mxu0 0
    %3755 = vmatpush2.bf16.msra.mxu0 0
    %3756 = vmatprep.subr.bf16.mxu0 0
    %3757 = vmatpush2.bf16.msra.mxu0 0
    %3758 = vmatprep.subr.bf16.mxu0 0
    %3759 = vmatpush2.bf16.msra.mxu0 0
    %3760 = vmatprep.subr.bf16.mxu0 0
    %3761 = vmatpush2.bf16.msra.mxu0 0
    %3762 = vmatprep.subr.bf16.mxu0 0
    %3763 = vmatpush2.bf16.msra.mxu0 0
    %3764 = vmatprep.subr.bf16.mxu0 0
    %3765 = vmatpush2.bf16.msra.mxu0 0
    %3766 = vmatprep.subr.bf16.mxu0 0
    %3767 = vmatpush2.bf16.msra.mxu0 0
    %3768 = vmatprep.subr.bf16.mxu0 0
    %3769 = vmatpush2.bf16.msra.mxu0 0
    %3770 = vmatprep.mubr.bf16.mxu0 0
    %3771 = vmatmul.mubr.bf16.gmra.mxu0 %v3730
    %v3772 = vpop.f32.mrf.mxu0
    %v3773 = vadd.f32 0.0, %v3772
    %v3774 = vpop.f32.mrf.mxu0
    %v3775 = vadd.f32 0.0, %v3774
    %v3776 = vpop.f32.mrf.mxu0
    %v3777 = vadd.f32 0.0, %v3776
    %v3778 = vpop.f32.mrf.mxu0
    %v3779 = vadd.f32 0.0, %v3778
    %3780 = vdwg.mxu0
    %v3782 = vlaneseq
    %v3783 = vshrl.u32 %v3782, 7
    %v3784 = vsub.s32 0, %v3783
    %v3785 = vrot.slane %v3697, %v3784
    %v3786 = vlaneseq
    %v3787 = vshrl.u32 %v3786, 7
    %v3788 = vsub.s32 1, %v3787
    %v3789 = vrot.slane %v3697, %v3788
    %v3792 = vadd.f32 %v3785, %v3773
    %v3793 = vadd.f32 %v3789, %v3775
    %v3794 = vadd.f32 %v3785, %v3777
    %v3795 = vadd.f32 %v3789, %v3779
    %s3796 = scalar_lea.vmem [#allocation29], 48
    %v3797 = vld [vmem:[%s3796] sm:$0xff]
    %v3798 = vld [vmem:[%s3796 + $0x8] sm:$0xff]
    %v3799 = vld [vmem:[%s3796 + $0x10] sm:$0xff]
    %v3800 = vld [vmem:[%s3796 + $0x18] sm:$0xff]
    %v3801 = vld [vmem:[%s3796 + $0x20] sm:$0xff]
    %v3802 = vld [vmem:[%s3796 + $0x28] sm:$0xff]
    %v3809 = vunpack.c.l.b16 %v3797
    %v3810 = vunpack.c.h.b16 %v3797
    %v3811 = vunpack.c.l.b16 %v3798
    %v3812 = vunpack.c.h.b16 %v3798
    %v3813 = vunpack.c.l.b16 %v3799
    %v3814 = vunpack.c.h.b16 %v3799
    %v3815 = vunpack.c.l.b16 %v3800
    %v3816 = vunpack.c.h.b16 %v3800
    %v3817 = vunpack.c.l.b16 %v3801
    %v3818 = vunpack.c.h.b16 %v3801
    %v3819 = vunpack.c.l.b16 %v3802
    %v3820 = vunpack.c.h.b16 %v3802
    %v3821 = vpack.c.b16 %v3811, %v3809
    %v3822 = vpack.c.b16 %v3812, %v3810
    %v3823 = vpack.c.b16 %v3815, %v3813
    %v3824 = vpack.c.b16 %v3816, %v3814
    %v3825 = vpack.c.b16 %v3819, %v3817
    %v3826 = vpack.c.b16 %v3820, %v3818
    %v3834 = vsel %vm2171, %v3648, 0
    %3836 = vmatprep.subr.bf16.mxu0 0
    %3837 = vmatpush1.bf16.msra.mxu0 0
    %3838 = vmatprep.subr.bf16.mxu0 0
    %3839 = vmatpush1.bf16.msra.mxu0 0
    %3840 = vmatprep.subr.bf16.mxu0 0
    %3841 = vmatpush1.bf16.msra.mxu0 0
    %3842 = vmatprep.subr.bf16.mxu0 0
    %3843 = vmatpush1.bf16.msra.mxu0 0
    %3844 = vmatprep.subr.bf16.mxu0 0
    %3845 = vmatpush1.bf16.msra.mxu0 0
    %3846 = vmatprep.subr.bf16.mxu0 %v3826
    %3847 = vmatpush1.bf16.msra.mxu0 %v3825
    %3848 = vmatprep.subr.bf16.mxu0 %v3824
    %3849 = vmatpush1.bf16.msra.mxu0 %v3823
    %3850 = vmatprep.subr.bf16.mxu0 %v3822
    %3851 = vmatpush1.bf16.msra.mxu0 %v3821
    %3852 = vmatprep.subr.bf16.mxu0 0
    %3853 = vmatpush2.bf16.msra.mxu0 0
    %3854 = vmatprep.subr.bf16.mxu0 0
    %3855 = vmatpush2.bf16.msra.mxu0 0
    %3856 = vmatprep.subr.bf16.mxu0 0
    %3857 = vmatpush2.bf16.msra.mxu0 0
    %3858 = vmatprep.subr.bf16.mxu0 0
    %3859 = vmatpush2.bf16.msra.mxu0 0
    %3860 = vmatprep.subr.bf16.mxu0 0
    %3861 = vmatpush2.bf16.msra.mxu0 0
    %3862 = vmatprep.subr.bf16.mxu0 0
    %3863 = vmatpush2.bf16.msra.mxu0 0
    %3864 = vmatprep.subr.bf16.mxu0 0
    %3865 = vmatpush2.bf16.msra.mxu0 0
    %3866 = vmatprep.subr.bf16.mxu0 0
    %3867 = vmatpush2.bf16.msra.mxu0 0
    %3868 = vmatprep.mubr.bf16.mxu0 0
    %3869 = vmatmul.mubr.bf16.gmra.mxu0 %v3834
    %v3870 = vpop.f32.mrf.mxu0
    %v3871 = vadd.f32 0.0, %v3870
    %v3872 = vpop.f32.mrf.mxu0
    %v3873 = vadd.f32 0.0, %v3872
    %v3874 = vpop.f32.mrf.mxu0
    %v3875 = vadd.f32 0.0, %v3874
    %v3876 = vpop.f32.mrf.mxu0
    %v3877 = vadd.f32 0.0, %v3876
    %3878 = vdwg.mxu0
    %v3879 = vadd.f32 %v3792, %v3871
    %v3880 = vadd.f32 %v3793, %v3873
    %v3881 = vadd.f32 %v3794, %v3875
    %v3882 = vadd.f32 %v3795, %v3877
    %v3883 = vld [vmem:[#allocation31] sm:$0xff]
    %v3884 = vld [vmem:[#allocation31 + $0x8] sm:$0xff]
    %v3885 = vld [vmem:[#allocation31 + $0x10] sm:$0xff]
    %v3886 = vld [vmem:[#allocation31 + $0x18] sm:$0xff]
    %v3887 = vld [vmem:[#allocation31 + $0x20] sm:$0xff]
    %v3888 = vld [vmem:[#allocation31 + $0x28] sm:$0xff]
    %v3895 = vunpack.c.l.b16 %v3883
    %v3896 = vunpack.c.h.b16 %v3883
    %v3897 = vunpack.c.l.b16 %v3884
    %v3898 = vunpack.c.h.b16 %v3884
    %v3899 = vunpack.c.l.b16 %v3885
    %v3900 = vunpack.c.h.b16 %v3885
    %v3901 = vunpack.c.l.b16 %v3886
    %v3902 = vunpack.c.h.b16 %v3886
    %v3903 = vunpack.c.l.b16 %v3887
    %v3904 = vunpack.c.h.b16 %v3887
    %v3905 = vunpack.c.l.b16 %v3888
    %v3906 = vunpack.c.h.b16 %v3888
    %v3907 = vpack.c.b16 %v3897, %v3895
    %v3908 = vpack.c.b16 %v3898, %v3896
    %v3909 = vpack.c.b16 %v3901, %v3899
    %v3910 = vpack.c.b16 %v3902, %v3900
    %v3911 = vpack.c.b16 %v3905, %v3903
    %v3912 = vpack.c.b16 %v3906, %v3904
    %v3920 = vsel %vm2171, %v3695, 0
    %3922 = vmatprep.subr.bf16.mxu0 0
    %3923 = vmatpush1.bf16.msra.mxu0 0
    %3924 = vmatprep.subr.bf16.mxu0 0
    %3925 = vmatpush1.bf16.msra.mxu0 0
    %3926 = vmatprep.subr.bf16.mxu0 0
    %3927 = vmatpush1.bf16.msra.mxu0 0
    %3928 = vmatprep.subr.bf16.mxu0 0
    %3929 = vmatpush1.bf16.msra.mxu0 0
    %3930 = vmatprep.subr.bf16.mxu0 0
    %3931 = vmatpush1.bf16.msra.mxu0 0
    %3932 = vmatprep.subr.bf16.mxu0 %v3912
    %3933 = vmatpush1.bf16.msra.mxu0 %v3911
    %3934 = vmatprep.subr.bf16.mxu0 %v3910
    %3935 = vmatpush1.bf16.msra.mxu0 %v3909
    %3936 = vmatprep.subr.bf16.mxu0 %v3908
    %3937 = vmatpush1.bf16.msra.mxu0 %v3907
    %3938 = vmatprep.subr.bf16.mxu0 0
    %3939 = vmatpush2.bf16.msra.mxu0 0
    %3940 = vmatprep.subr.bf16.mxu0 0
    %3941 = vmatpush2.bf16.msra.mxu0 0
    %3942 = vmatprep.subr.bf16.mxu0 0
    %3943 = vmatpush2.bf16.msra.mxu0 0
    %3944 = vmatprep.subr.bf16.mxu0 0
    %3945 = vmatpush2.bf16.msra.mxu0 0
    %3946 = vmatprep.subr.bf16.mxu0 0
    %3947 = vmatpush2.bf16.msra.mxu0 0
    %3948 = vmatprep.subr.bf16.mxu0 0
    %3949 = vmatpush2.bf16.msra.mxu0 0
    %3950 = vmatprep.subr.bf16.mxu0 0
    %3951 = vmatpush2.bf16.msra.mxu0 0
    %3952 = vmatprep.subr.bf16.mxu0 0
    %3953 = vmatpush2.bf16.msra.mxu0 0
    %3954 = vmatprep.mubr.bf16.mxu0 0
    %3955 = vmatmul.mubr.bf16.gmra.mxu0 %v3920
    %v3956 = vpop.f32.mrf.mxu0
    %v3957 = vadd.f32 0.0, %v3956
    %v3958 = vpop.f32.mrf.mxu0
    %v3959 = vadd.f32 0.0, %v3958
    %v3960 = vpop.f32.mrf.mxu0
    %v3961 = vadd.f32 0.0, %v3960
    %v3962 = vpop.f32.mrf.mxu0
    %v3963 = vadd.f32 0.0, %v3962
    %3964 = vdwg.mxu0
    %v3965 = vadd.f32 %v3879, %v3957
    %v3966 = vadd.f32 %v3880, %v3959
    %v3967 = vadd.f32 %v3881, %v3961
    %v3968 = vadd.f32 %v3882, %v3963
    %vm3969 = vcmp.ge.f32.partialorder %v3965, 0.0
    %vm3970 = vcmp.ge.f32.partialorder %v3966, 0.0
    %vm3971 = vcmp.ge.f32.partialorder %v3967, 0.0
    %vm3972 = vcmp.ge.f32.partialorder %v3968, 0.0
    %v3973 = vmul.f32 %v3965, 0.01
    %v3974 = vmul.f32 %v3966, 0.01
    %v3975 = vmul.f32 %v3967, 0.01
    %v3976 = vmul.f32 %v3968, 0.01
    %v3977 = vsel %vm3969, %v3965, %v3973
    %v3978 = vsel %vm3970, %v3966, %v3974
    %v3979 = vsel %vm3971, %v3967, %v3975
    %v3980 = vsel %vm3972, %v3968, %v3976
    %v3981 = vpack.c.bf16 %v3979, %v3977
    %v3982 = vpack.c.bf16 %v3980, %v3978
    %s3983 = scalar_lea.vmem [#allocation17], 384
    %v3984 = vld [vmem:[%s3983] sm:$0xff]
    %v3985 = vld [vmem:[%s3983 + $0x8] sm:$0xff]
    %v3986 = vld [vmem:[%s3983 + $0x10] sm:$0xff]
    %v3987 = vld [vmem:[%s3983 + $0x18] sm:$0xff]
    %v3988 = vld [vmem:[%s3983 + $0x20] sm:$0xff]
    %v3989 = vld [vmem:[%s3983 + $0x28] sm:$0xff]
    %v3990 = vld [vmem:[%s3983 + $0x30] sm:$0xff]
    %v3991 = vld [vmem:[%s3983 + $0x38] sm:$0xff]
    %v3992 = vld [vmem:[%s3983 + $0x40] sm:$0xff]
    %v3993 = vld [vmem:[%s3983 + $0x48] sm:$0xff]
    %v3994 = vld [vmem:[%s3983 + $0x50] sm:$0xff]
    %v3995 = vld [vmem:[%s3983 + $0x58] sm:$0xff]
    %v3996 = vld [vmem:[%s3983 + $0x60] sm:$0xff]
    %v3997 = vld [vmem:[%s3983 + $0x68] sm:$0xff]
    %v3998 = vld [vmem:[%s3983 + $0x70] sm:$0xff]
    %v3999 = vld [vmem:[%s3983 + $0x78] sm:$0xff]
    %v4000 = vld [vmem:[%s3983 + $0x80] sm:$0xff]
    %v4001 = vld [vmem:[%s3983 + $0x88] sm:$0xff]
    %v4002 = vld [vmem:[%s3983 + $0x90] sm:$0xff]
    %v4003 = vld [vmem:[%s3983 + $0x98] sm:$0xff]
    %v4004 = vld [vmem:[%s3983 + $0xa0] sm:$0xff]
    %v4005 = vld [vmem:[%s3983 + $0xa8] sm:$0xff]
    %v4006 = vld [vmem:[%s3983 + $0xb0] sm:$0xff]
    %v4007 = vld [vmem:[%s3983 + $0xb8] sm:$0xff]
    %s4008 = scalar_lea.vmem [#allocation23], 4
    %v4009 = vld [vmem:[%s4008] sm:$0x3]
    %v4011 = vlaneseq
    %v4012 = vshrl.u32 %v4011, 7
    %v4013 = vsub.s32 0, %v4012
    %v4014 = vrot.slane %v4009, %v4013
    %v4015 = vlaneseq
    %v4016 = vshrl.u32 %v4015, 7
    %v4017 = vsub.s32 1, %v4016
    %v4018 = vrot.slane %v4009, %v4017
    %v4045 = vunpack.c.l.b16 %v3984
    %v4046 = vunpack.c.h.b16 %v3984
    %v4047 = vunpack.c.l.b16 %v3985
    %v4048 = vunpack.c.h.b16 %v3985
    %v4049 = vunpack.c.l.b16 %v3986
    %v4050 = vunpack.c.h.b16 %v3986
    %v4051 = vunpack.c.l.b16 %v3987
    %v4052 = vunpack.c.h.b16 %v3987
    %v4053 = vunpack.c.l.b16 %v3988
    %v4054 = vunpack.c.h.b16 %v3988
    %v4055 = vunpack.c.l.b16 %v3989
    %v4056 = vunpack.c.h.b16 %v3989
    %v4057 = vunpack.c.l.b16 %v3990
    %v4058 = vunpack.c.h.b16 %v3990
    %v4059 = vunpack.c.l.b16 %v3991
    %v4060 = vunpack.c.h.b16 %v3991
    %v4061 = vunpack.c.l.b16 %v3992
    %v4062 = vunpack.c.h.b16 %v3992
    %v4063 = vunpack.c.l.b16 %v3993
    %v4064 = vunpack.c.h.b16 %v3993
    %v4065 = vunpack.c.l.b16 %v3994
    %v4066 = vunpack.c.h.b16 %v3994
    %v4067 = vunpack.c.l.b16 %v3995
    %v4068 = vunpack.c.h.b16 %v3995
    %v4069 = vunpack.c.l.b16 %v3996
    %v4070 = vunpack.c.h.b16 %v3996
    %v4071 = vunpack.c.l.b16 %v3997
    %v4072 = vunpack.c.h.b16 %v3997
    %v4073 = vunpack.c.l.b16 %v3998
    %v4074 = vunpack.c.h.b16 %v3998
    %v4075 = vunpack.c.l.b16 %v3999
    %v4076 = vunpack.c.h.b16 %v3999
    %v4077 = vunpack.c.l.b16 %v4000
    %v4078 = vunpack.c.h.b16 %v4000
    %v4079 = vunpack.c.l.b16 %v4001
    %v4080 = vunpack.c.h.b16 %v4001
    %v4081 = vunpack.c.l.b16 %v4002
    %v4082 = vunpack.c.h.b16 %v4002
    %v4083 = vunpack.c.l.b16 %v4003
    %v4084 = vunpack.c.h.b16 %v4003
    %v4085 = vunpack.c.l.b16 %v4004
    %v4086 = vunpack.c.h.b16 %v4004
    %v4087 = vunpack.c.l.b16 %v4005
    %v4088 = vunpack.c.h.b16 %v4005
    %v4089 = vunpack.c.l.b16 %v4006
    %v4090 = vunpack.c.h.b16 %v4006
    %v4091 = vunpack.c.l.b16 %v4007
    %v4092 = vunpack.c.h.b16 %v4007
    %v4093 = vpack.c.b16 %v4047, %v4045
    %v4094 = vpack.c.b16 %v4048, %v4046
    %v4095 = vpack.c.b16 %v4051, %v4049
    %v4096 = vpack.c.b16 %v4052, %v4050
    %v4097 = vpack.c.b16 %v4055, %v4053
    %v4098 = vpack.c.b16 %v4056, %v4054
    %v4099 = vpack.c.b16 %v4059, %v4057
    %v4100 = vpack.c.b16 %v4060, %v4058
    %v4101 = vpack.c.b16 %v4063, %v4061
    %v4102 = vpack.c.b16 %v4064, %v4062
    %v4103 = vpack.c.b16 %v4067, %v4065
    %v4104 = vpack.c.b16 %v4068, %v4066
    %v4105 = vpack.c.b16 %v4071, %v4069
    %v4106 = vpack.c.b16 %v4072, %v4070
    %v4107 = vpack.c.b16 %v4075, %v4073
    %v4108 = vpack.c.b16 %v4076, %v4074
    %v4109 = vpack.c.b16 %v4079, %v4077
    %v4110 = vpack.c.b16 %v4080, %v4078
    %v4111 = vpack.c.b16 %v4083, %v4081
    %v4112 = vpack.c.b16 %v4084, %v4082
    %v4113 = vpack.c.b16 %v4087, %v4085
    %v4114 = vpack.c.b16 %v4088, %v4086
    %v4115 = vpack.c.b16 %v4091, %v4089
    %v4116 = vpack.c.b16 %v4092, %v4090
    %v4142 = vsel %vm989, %v3982, 0
    %4144 = vmatprep.subr.bf16.mxu0 %v4108
    %4145 = vmatpush1.bf16.msra.mxu0 %v4107
    %4146 = vmatprep.subr.bf16.mxu0 %v4106
    %4147 = vmatpush1.bf16.msra.mxu0 %v4105
    %4148 = vmatprep.subr.bf16.mxu0 %v4104
    %4149 = vmatpush1.bf16.msra.mxu0 %v4103
    %4150 = vmatprep.subr.bf16.mxu0 %v4102
    %4151 = vmatpush1.bf16.msra.mxu0 %v4101
    %4152 = vmatprep.subr.bf16.mxu0 %v4100
    %4153 = vmatpush1.bf16.msra.mxu0 %v4099
    %4154 = vmatprep.subr.bf16.mxu0 %v4098
    %4155 = vmatpush1.bf16.msra.mxu0 %v4097
    %4156 = vmatprep.subr.bf16.mxu0 %v4096
    %4157 = vmatpush1.bf16.msra.mxu0 %v4095
    %4158 = vmatprep.subr.bf16.mxu0 %v4094
    %4159 = vmatpush1.bf16.msra.mxu0 %v4093
    %4160 = vmatprep.subr.bf16.mxu0 0
    %4161 = vmatpush2.bf16.msra.mxu0 0
    %4162 = vmatprep.subr.bf16.mxu0 0
    %4163 = vmatpush2.bf16.msra.mxu0 0
    %4164 = vmatprep.subr.bf16.mxu0 0
    %4165 = vmatpush2.bf16.msra.mxu0 0
    %4166 = vmatprep.subr.bf16.mxu0 0
    %4167 = vmatpush2.bf16.msra.mxu0 0
    %4168 = vmatprep.subr.bf16.mxu0 %v4116
    %4169 = vmatpush2.bf16.msra.mxu0 %v4115
    %4170 = vmatprep.subr.bf16.mxu0 %v4114
    %4171 = vmatpush2.bf16.msra.mxu0 %v4113
    %4172 = vmatprep.subr.bf16.mxu0 %v4112
    %4173 = vmatpush2.bf16.msra.mxu0 %v4111
    %4174 = vmatprep.subr.bf16.mxu0 %v4110
    %4175 = vmatpush2.bf16.msra.mxu0 %v4109
    %4176 = vmatprep.mubr.bf16.mxu0 %v4142
    %4177 = vmatmul.mubr.bf16.gmra.mxu0 %v3981
    %v4178 = vpop.f32.mrf.mxu0
    %v4179 = vadd.f32 %v4014, %v4178
    %v4180 = vpop.f32.mrf.mxu0
    %v4181 = vadd.f32 %v4018, %v4180
    %v4182 = vpop.f32.mrf.mxu0
    %v4183 = vadd.f32 %v4014, %v4182
    %v4184 = vpop.f32.mrf.mxu0
    %v4185 = vadd.f32 %v4018, %v4184
    %4186 = vdwg.mxu0
    %vm4187 = vcmp.ge.f32.partialorder %v4179, 0.0
    %vm4188 = vcmp.ge.f32.partialorder %v4181, 0.0
    %vm4189 = vcmp.ge.f32.partialorder %v4183, 0.0
    %vm4190 = vcmp.ge.f32.partialorder %v4185, 0.0
    %v4191 = vmul.f32 %v4179, 0.01
    %v4192 = vmul.f32 %v4181, 0.01
    %v4193 = vmul.f32 %v4183, 0.01
    %v4194 = vmul.f32 %v4185, 0.01
    %v4195 = vsel %vm4187, %v4179, %v4191
    %v4196 = vsel %vm4188, %v4181, %v4192
    %v4197 = vsel %vm4189, %v4183, %v4193
    %v4198 = vsel %vm4190, %v4185, %v4194
    %v4199 = vpack.c.bf16 %v4197, %v4195
    %v4200 = vpack.c.bf16 %v4198, %v4196
    %s4201 = scalar_lea.vmem [#allocation19], 192
    %v4202 = vld [vmem:[%s4201] sm:$0xf]
    %v4203 = vld [vmem:[%s4201 + $0x4] sm:$0xf]
    %v4204 = vld [vmem:[%s4201 + $0x8] sm:$0xf]
    %v4205 = vld [vmem:[%s4201 + $0xc] sm:$0xf]
    %v4206 = vld [vmem:[%s4201 + $0x10] sm:$0xf]
    %v4207 = vld [vmem:[%s4201 + $0x14] sm:$0xf]
    %v4208 = vld [vmem:[%s4201 + $0x18] sm:$0xf]
    %v4209 = vld [vmem:[%s4201 + $0x1c] sm:$0xf]
    %v4210 = vld [vmem:[%s4201 + $0x20] sm:$0xf]
    %v4211 = vld [vmem:[%s4201 + $0x24] sm:$0xf]
    %v4212 = vld [vmem:[%s4201 + $0x28] sm:$0xf]
    %v4213 = vld [vmem:[%s4201 + $0x2c] sm:$0xf]
    %v4214 = vld [vmem:[%s4201 + $0x30] sm:$0xf]
    %v4215 = vld [vmem:[%s4201 + $0x34] sm:$0xf]
    %v4216 = vld [vmem:[%s4201 + $0x38] sm:$0xf]
    %v4217 = vld [vmem:[%s4201 + $0x3c] sm:$0xf]
    %v4218 = vld [vmem:[%s4201 + $0x40] sm:$0xf]
    %v4219 = vld [vmem:[%s4201 + $0x44] sm:$0xf]
    %v4220 = vld [vmem:[%s4201 + $0x48] sm:$0xf]
    %v4221 = vld [vmem:[%s4201 + $0x4c] sm:$0xf]
    %v4222 = vld [vmem:[%s4201 + $0x50] sm:$0xf]
    %v4223 = vld [vmem:[%s4201 + $0x54] sm:$0xf]
    %v4224 = vld [vmem:[%s4201 + $0x58] sm:$0xf]
    %v4225 = vld [vmem:[%s4201 + $0x5c] sm:$0xf]
    %s4226 = scalar_lea.vmem [#allocation25], 2
    %v4227 = vld [vmem:[%s4226] sm:$0x1]
    %v4229 = vlaneseq
    %v4230 = vshrl.u32 %v4229, 7
    %v4231 = vsub.s32 0, %v4230
    %v4232 = vrot.slane %v4227, %v4231
    %v4258 = vunpack.c.l.b16 %v4202
    %v4259 = vunpack.c.l.b16 %v4203
    %v4260 = vunpack.c.l.b16 %v4204
    %v4261 = vunpack.c.l.b16 %v4205
    %v4262 = vunpack.c.l.b16 %v4206
    %v4263 = vunpack.c.l.b16 %v4207
    %v4264 = vunpack.c.l.b16 %v4208
    %v4265 = vunpack.c.l.b16 %v4209
    %v4266 = vunpack.c.l.b16 %v4210
    %v4267 = vunpack.c.l.b16 %v4211
    %v4268 = vunpack.c.l.b16 %v4212
    %v4269 = vunpack.c.l.b16 %v4213
    %v4270 = vunpack.c.l.b16 %v4214
    %v4271 = vunpack.c.l.b16 %v4215
    %v4272 = vunpack.c.l.b16 %v4216
    %v4273 = vunpack.c.l.b16 %v4217
    %v4274 = vunpack.c.l.b16 %v4218
    %v4275 = vunpack.c.l.b16 %v4219
    %v4276 = vunpack.c.l.b16 %v4220
    %v4277 = vunpack.c.l.b16 %v4221
    %v4278 = vunpack.c.l.b16 %v4222
    %v4279 = vunpack.c.l.b16 %v4223
    %v4280 = vunpack.c.l.b16 %v4224
    %v4281 = vunpack.c.l.b16 %v4225
    %v4282 = vpack.c.b16 %v4259, %v4258
    %v4283 = vpack.c.b16 %v4261, %v4260
    %v4284 = vpack.c.b16 %v4263, %v4262
    %v4285 = vpack.c.b16 %v4265, %v4264
    %v4286 = vpack.c.b16 %v4267, %v4266
    %v4287 = vpack.c.b16 %v4269, %v4268
    %v4288 = vpack.c.b16 %v4271, %v4270
    %v4289 = vpack.c.b16 %v4273, %v4272
    %v4290 = vpack.c.b16 %v4275, %v4274
    %v4291 = vpack.c.b16 %v4277, %v4276
    %v4292 = vpack.c.b16 %v4279, %v4278
    %v4293 = vpack.c.b16 %v4281, %v4280
    %v4307 = vsel %vm989, %v4200, 0
    %4309 = vmatprep.subr.bf16.mxu0 0
    %4310 = vmatpush1.bf16.msra.mxu0 %v4289
    %4311 = vmatprep.subr.bf16.mxu0 0
    %4312 = vmatpush1.bf16.msra.mxu0 %v4288
    %4313 = vmatprep.subr.bf16.mxu0 0
    %4314 = vmatpush1.bf16.msra.mxu0 %v4287
    %4315 = vmatprep.subr.bf16.mxu0 0
    %4316 = vmatpush1.bf16.msra.mxu0 %v4286
    %4317 = vmatprep.subr.bf16.mxu0 0
    %4318 = vmatpush1.bf16.msra.mxu0 %v4285
    %4319 = vmatprep.subr.bf16.mxu0 0
    %4320 = vmatpush1.bf16.msra.mxu0 %v4284
    %4321 = vmatprep.subr.bf16.mxu0 0
    %4322 = vmatpush1.bf16.msra.mxu0 %v4283
    %4323 = vmatprep.subr.bf16.mxu0 0
    %4324 = vmatpush1.bf16.msra.mxu0 %v4282
    %4325 = vmatprep.subr.bf16.mxu0 0
    %4326 = vmatpush2.bf16.msra.mxu0 0
    %4327 = vmatprep.subr.bf16.mxu0 0
    %4328 = vmatpush2.bf16.msra.mxu0 0
    %4329 = vmatprep.subr.bf16.mxu0 0
    %4330 = vmatpush2.bf16.msra.mxu0 0
    %4331 = vmatprep.subr.bf16.mxu0 0
    %4332 = vmatpush2.bf16.msra.mxu0 0
    %4333 = vmatprep.subr.bf16.mxu0 0
    %4334 = vmatpush2.bf16.msra.mxu0 %v4293
    %4335 = vmatprep.subr.bf16.mxu0 0
    %4336 = vmatpush2.bf16.msra.mxu0 %v4292
    %4337 = vmatprep.subr.bf16.mxu0 0
    %4338 = vmatpush2.bf16.msra.mxu0 %v4291
    %4339 = vmatprep.subr.bf16.mxu0 0
    %4340 = vmatpush2.bf16.msra.mxu0 %v4290
    %4341 = vmatprep.mubr.bf16.mxu0 %v4307
    %4342 = vmatmul.mubr.bf16.gmra.mxu0 %v4199
    %v4343 = vpop.f32.mrf.mxu0
    %v4344 = vadd.f32 %v4232, %v4343
    %v4345 = vpop.f32.mrf.mxu0
    %v4346 = vpop.f32.mrf.mxu0
    %v4347 = vadd.f32 %v4232, %v4346
    %v4348 = vpop.f32.mrf.mxu0
    %4349 = vdwg.mxu0
    %vm4350 = vcmp.ge.f32.partialorder %v4344, 0.0
    %vm4351 = vcmp.ge.f32.partialorder %v4347, 0.0
    %v4352 = vmul.f32 %v4344, 0.01
    %v4353 = vmul.f32 %v4347, 0.01
    %v4354 = vsel %vm4350, %v4344, %v4352
    %v4355 = vsel %vm4351, %v4347, %v4353
    %v4356 = vpack.c.bf16 %v4355, %v4354
    %s4357 = scalar_lea.vmem [#allocation20], 96
    %v4358 = vld [vmem:[%s4357] sm:$0xf]
    %v4359 = vld [vmem:[%s4357 + $0x4] sm:$0xf]
    %v4360 = vld [vmem:[%s4357 + $0x8] sm:$0xf]
    %v4361 = vld [vmem:[%s4357 + $0xc] sm:$0xf]
    %v4362 = vld [vmem:[%s4357 + $0x10] sm:$0xf]
    %v4363 = vld [vmem:[%s4357 + $0x14] sm:$0xf]
    %v4364 = vld [vmem:[%s4357 + $0x18] sm:$0xf]
    %v4365 = vld [vmem:[%s4357 + $0x1c] sm:$0xf]
    %v4366 = vld [vmem:[%s4357 + $0x20] sm:$0xf]
    %v4367 = vld [vmem:[%s4357 + $0x24] sm:$0xf]
    %v4368 = vld [vmem:[%s4357 + $0x28] sm:$0xf]
    %v4369 = vld [vmem:[%s4357 + $0x2c] sm:$0xf]
    %s4370 = scalar_lea.vmem [#allocation26], 2
    %v4371 = vld [vmem:[%s4370] sm:$0x1]
    %v4373 = vlaneseq
    %v4374 = vshrl.u32 %v4373, 7
    %v4375 = vsub.s32 0, %v4374
    %v4376 = vrot.slane %v4371, %v4375
    %v4390 = vunpack.c.l.b16 %v4358
    %v4391 = vunpack.c.l.b16 %v4359
    %v4392 = vunpack.c.l.b16 %v4360
    %v4393 = vunpack.c.l.b16 %v4361
    %v4394 = vunpack.c.l.b16 %v4362
    %v4395 = vunpack.c.l.b16 %v4363
    %v4396 = vunpack.c.l.b16 %v4364
    %v4397 = vunpack.c.l.b16 %v4365
    %v4398 = vunpack.c.l.b16 %v4366
    %v4399 = vunpack.c.l.b16 %v4367
    %v4400 = vunpack.c.l.b16 %v4368
    %v4401 = vunpack.c.l.b16 %v4369
    %v4402 = vpack.c.b16 %v4391, %v4390
    %v4403 = vpack.c.b16 %v4393, %v4392
    %v4404 = vpack.c.b16 %v4395, %v4394
    %v4405 = vpack.c.b16 %v4397, %v4396
    %v4406 = vpack.c.b16 %v4399, %v4398
    %v4407 = vpack.c.b16 %v4401, %v4400
    %v4415 = vsel %vm1382, %v4356, 0
    %4417 = vmatprep.subr.bf16.mxu0 0
    %4418 = vmatpush1.bf16.msra.mxu0 0
    %4419 = vmatprep.subr.bf16.mxu0 0
    %4420 = vmatpush1.bf16.msra.mxu0 0
    %4421 = vmatprep.subr.bf16.mxu0 0
    %4422 = vmatpush1.bf16.msra.mxu0 %v4407
    %4423 = vmatprep.subr.bf16.mxu0 0
    %4424 = vmatpush1.bf16.msra.mxu0 %v4406
    %4425 = vmatprep.subr.bf16.mxu0 0
    %4426 = vmatpush1.bf16.msra.mxu0 %v4405
    %4427 = vmatprep.subr.bf16.mxu0 0
    %4428 = vmatpush1.bf16.msra.mxu0 %v4404
    %4429 = vmatprep.subr.bf16.mxu0 0
    %4430 = vmatpush1.bf16.msra.mxu0 %v4403
    %4431 = vmatprep.subr.bf16.mxu0 0
    %4432 = vmatpush1.bf16.msra.mxu0 %v4402
    %4433 = vmatprep.subr.bf16.mxu0 0
    %4434 = vmatpush2.bf16.msra.mxu0 0
    %4435 = vmatprep.subr.bf16.mxu0 0
    %4436 = vmatpush2.bf16.msra.mxu0 0
    %4437 = vmatprep.subr.bf16.mxu0 0
    %4438 = vmatpush2.bf16.msra.mxu0 0
    %4439 = vmatprep.subr.bf16.mxu0 0
    %4440 = vmatpush2.bf16.msra.mxu0 0
    %4441 = vmatprep.subr.bf16.mxu0 0
    %4442 = vmatpush2.bf16.msra.mxu0 0
    %4443 = vmatprep.subr.bf16.mxu0 0
    %4444 = vmatpush2.bf16.msra.mxu0 0
    %4445 = vmatprep.subr.bf16.mxu0 0
    %4446 = vmatpush2.bf16.msra.mxu0 0
    %4447 = vmatprep.subr.bf16.mxu0 0
    %4448 = vmatpush2.bf16.msra.mxu0 0
    %4449 = vmatprep.mubr.bf16.mxu0 0
    %4450 = vmatmul.mubr.bf16.gmra.mxu0 %v4415
    %v4451 = vpop.f32.mrf.mxu0
    %v4452 = vadd.f32 %v4376, %v4451
    %v4453 = vpop.f32.mrf.mxu0
    %v4454 = vpop.f32.mrf.mxu0
    %v4455 = vadd.f32 %v4376, %v4454
    %v4456 = vpop.f32.mrf.mxu0
    %4457 = vdwg.mxu0
    %vm4458 = vcmp.ge.f32.partialorder %v4452, 0.0
    %vm4459 = vcmp.ge.f32.partialorder %v4455, 0.0
    %v4460 = vmul.f32 %v4452, 0.01
    %v4461 = vmul.f32 %v4455, 0.01
    %v4462 = vsel %vm4458, %v4452, %v4460
    %v4463 = vsel %vm4459, %v4455, %v4461
    %s4464 = scalar_lea.vmem [#allocation22], 2
    %v4465 = vld [vmem:[%s4464] sm:$0x1]
    %v4467 = vlaneseq
    %v4468 = vshrl.u32 %v4467, 7
    %v4469 = vsub.s32 0, %v4468
    %v4470 = vrot.slane %v4465, %v4469
    %v4472 = vmul.f32 %v4462, %v4470
    %v4473 = vmul.f32 %v4463, %v4470
    %v4474 = vsel %vm1382, %v4472, 0.0
    %4475 = vadd.xlane.f32.xlu0 %v4474
    %v4476 = vpop.xlane.xlu0 %4475
    %v4477 = vsel %vm1512, %v4473, 0.0
    %4478 = vadd.xlane.f32.xlu0 %v4477
    %v4479 = vpop.xlane.xlu0 %4478
    %s4480 = scalar_lea.vmem %s39, 2
    %v4481 = vld [vmem:[%s4480] sm:$0x1]
    %v4483 = vlaneseq
    %v4484 = vshrl.u32 %v4483, 7
    %v4485 = vsub.s32 0, %v4484
    %v4486 = vrot.slane %v4481, %v4485
    %v4488 = vadd.f32 %v4476, %v4486
    %v4489 = vadd.f32 %v4479, %v4486
    %4491 = vset.pattern.permute.xlu0 0
    %4492 = vperm.xlu0 %4491, %v4488
    %v4493 = vpop.permute.xlu0 %4492
    %4496 = vset.pattern.permute.xlu0 0
    %4497 = vperm.xlu0 %4496, %v4489
    %v4498 = vpop.permute.xlu0 %4497
    %v4500 = vmul.f32 %v4493, %v3551
    %v4501 = vmul.f32 %v4498, %v3552
    %v4503 = vsel %vm494, %v3550, 0
    %v4506 = vsel %vm680, %v4501, 0
    %4508 = vmatprep.subr.mxu0 0.0
    %4509 = vmatpush1.msra.mxu0 0.0
    %4510 = vmatprep.subr.mxu0 0.0
    %4511 = vmatpush1.msra.mxu0 0.0
    %4512 = vmatprep.subr.mxu0 0.0
    %4513 = vmatpush1.msra.mxu0 0.0
    %4514 = vmatprep.subr.mxu0 0.0
    %4515 = vmatpush1.msra.mxu0 0.0
    %4516 = vmatprep.subr.mxu0 0.0
    %4517 = vmatpush1.msra.mxu0 0.0
    %4518 = vmatprep.subr.mxu0 0.0
    %4519 = vmatpush1.msra.mxu0 0.0
    %4520 = vmatprep.subr.mxu0 0.0
    %4521 = vmatpush1.msra.mxu0 0.0
    %4522 = vmatprep.subr.mxu0 0.0
    %4523 = vmatpush1.msra.mxu0 0.0
    %4524 = vmatprep.subr.mxu0 0.0
    %4525 = vmatpush1.msra.mxu0 0.0
    %4526 = vmatprep.subr.mxu0 0.0
    %4527 = vmatpush1.msra.mxu0 0.0
    %4528 = vmatprep.subr.mxu0 0.0
    %4529 = vmatpush1.msra.mxu0 0.0
    %4530 = vmatprep.subr.mxu0 0.0
    %4531 = vmatpush1.msra.mxu0 0.0
    %4532 = vmatprep.subr.mxu0 0.0
    %4533 = vmatpush1.msra.mxu0 0.0
    %4534 = vmatprep.subr.mxu0 0.0
    %4535 = vmatpush1.msra.mxu0 0.0
    %4536 = vmatprep.subr.mxu0 0.0
    %4537 = vmatpush1.msra.mxu0 %v4506
    %4538 = vmatprep.subr.mxu0 0.0
    %4539 = vmatpush1.msra.mxu0 %v4500
    %4540 = vmatprep.subr.mxu0 0.0
    %4541 = vmatpush2.msra.mxu0 0.0
    %4542 = vmatprep.subr.mxu0 0.0
    %4543 = vmatpush2.msra.mxu0 0.0
    %4544 = vmatprep.subr.mxu0 0.0
    %4545 = vmatpush2.msra.mxu0 0.0
    %4546 = vmatprep.subr.mxu0 0.0
    %4547 = vmatpush2.msra.mxu0 0.0
    %4548 = vmatprep.subr.mxu0 0.0
    %4549 = vmatpush2.msra.mxu0 0.0
    %4550 = vmatprep.subr.mxu0 0.0
    %4551 = vmatpush2.msra.mxu0 0.0
    %4552 = vmatprep.subr.mxu0 0.0
    %4553 = vmatpush2.msra.mxu0 0.0
    %4554 = vmatprep.subr.mxu0 0.0
    %4555 = vmatpush2.msra.mxu0 0.0
    %4556 = vmatprep.subr.mxu0 0.0
    %4557 = vmatpush2.msra.mxu0 0.0
    %4558 = vmatprep.subr.mxu0 0.0
    %4559 = vmatpush2.msra.mxu0 0.0
    %4560 = vmatprep.subr.mxu0 0.0
    %4561 = vmatpush2.msra.mxu0 0.0
    %4562 = vmatprep.subr.mxu0 0.0
    %4563 = vmatpush2.msra.mxu0 0.0
    %4564 = vmatprep.subr.mxu0 0.0
    %4565 = vmatpush2.msra.mxu0 0.0
    %4566 = vmatprep.subr.mxu0 0.0
    %4567 = vmatpush2.msra.mxu0 0.0
    %4568 = vmatprep.subr.mxu0 0.0
    %4569 = vmatpush2.msra.mxu0 0.0
    %4570 = vmatprep.subr.mxu0 0.0
    %4571 = vmatpush2.msra.mxu0 0.0
    %4572 = vmatprep.mubr.f32.mxu0 0.0
    %4573 = vmatmul.mubr.f32.gmra.mxu0 %v4503
    %v4574 = vpop.f32.mrf.mxu0
    %v4575 = vadd.f32 0.0, %v4574
    %v4576 = vpop.f32.mrf.mxu0
    %4577 = vdwg.mxu0
    %v4578 = vsub.f32 %v4575, %v3549
    %v4579 = vsel %vm1662, %v4578, -inf
    %4580 = vmax.xlane.f32.xlu0 %v4579
    %v4581 = vpop.xlane.xlu0 %4580
    %v4582 = vsub.f32 %v4578, %v4581
    %v4583 = vmul.f32 %v4582, 1.442695
    %v4584 = vpow.pop %v4583
    %v4585 = vsel %vm1662, %v4584, 0.0
    %4586 = vadd.xlane.f32.xlu0 %v4585
    %v4587 = vpop.xlane.xlu0 %4586
    %v4588 = vrcp.pop %v4587
    %v4589 = vmul.f32 %v4584, %v4588
    %v4590 = vpack.c.bf16 %v4589, %v4589
    %s4591 = scalar_lea.vmem [#allocation28], 2
    %v4592 = vld [vmem:[%s4591] sm:$0x1]
    %v4594 = vsel %vm494, %v3547, 0
    %4596 = vmatprep.subr.bf16.mxu0 0
    %4597 = vmatpush1.bf16.msra.mxu0 0
    %4598 = vmatprep.subr.bf16.mxu0 0
    %4599 = vmatpush1.bf16.msra.mxu0 0
    %4600 = vmatprep.subr.bf16.mxu0 0
    %4601 = vmatpush1.bf16.msra.mxu0 0
    %4602 = vmatprep.subr.bf16.mxu0 0
    %4603 = vmatpush1.bf16.msra.mxu0 0
    %4604 = vmatprep.subr.bf16.mxu0 0
    %4605 = vmatpush1.bf16.msra.mxu0 0
    %4606 = vmatprep.subr.bf16.mxu0 0
    %4607 = vmatpush1.bf16.msra.mxu0 0
    %4608 = vmatprep.subr.bf16.mxu0 0
    %4609 = vmatpush1.bf16.msra.mxu0 0
    %4610 = vmatprep.subr.bf16.mxu0 0
    %4611 = vmatpush1.bf16.msra.mxu0 %v509
    %4612 = vmatprep.subr.bf16.mxu0 0
    %4613 = vmatpush2.bf16.msra.mxu0 0
    %4614 = vmatprep.subr.bf16.mxu0 0
    %4615 = vmatpush2.bf16.msra.mxu0 0
    %4616 = vmatprep.subr.bf16.mxu0 0
    %4617 = vmatpush2.bf16.msra.mxu0 0
    %4618 = vmatprep.subr.bf16.mxu0 0
    %4619 = vmatpush2.bf16.msra.mxu0 0
    %4620 = vmatprep.subr.bf16.mxu0 0
    %4621 = vmatpush2.bf16.msra.mxu0 0
    %4622 = vmatprep.subr.bf16.mxu0 0
    %4623 = vmatpush2.bf16.msra.mxu0 0
    %4624 = vmatprep.subr.bf16.mxu0 0
    %4625 = vmatpush2.bf16.msra.mxu0 0
    %4626 = vmatprep.subr.bf16.mxu0 0
    %4627 = vmatpush2.bf16.msra.mxu0 0
    %4628 = vmatprep.mubr.bf16.mxu0 0
    %4629 = vmatmul.mubr.bf16.gmra.mxu0 %v4594
    %v4630 = vpop.f32.mrf.mxu0
    %v4631 = vadd.f32 0.0, %v4630
    %v4632 = vpop.f32.mrf.mxu0
    %v4633 = vpop.f32.mrf.mxu0
    %v4634 = vpop.f32.mrf.mxu0
    %4635 = vdwg.mxu0
    %v4636 = vpack.c.bf16 %v4631, %v4631
    %v4638 = vsel %vm494, %v4590, 0
    %4640 = vmatprep.subr.bf16.mxu0 0
    %4641 = vmatpush1.bf16.msra.mxu0 0
    %4642 = vmatprep.subr.bf16.mxu0 0
    %4643 = vmatpush1.bf16.msra.mxu0 0
    %4644 = vmatprep.subr.bf16.mxu0 0
    %4645 = vmatpush1.bf16.msra.mxu0 0
    %4646 = vmatprep.subr.bf16.mxu0 0
    %4647 = vmatpush1.bf16.msra.mxu0 0
    %4648 = vmatprep.subr.bf16.mxu0 0
    %4649 = vmatpush1.bf16.msra.mxu0 0
    %4650 = vmatprep.subr.bf16.mxu0 0
    %4651 = vmatpush1.bf16.msra.mxu0 0
    %4652 = vmatprep.subr.bf16.mxu0 0
    %4653 = vmatpush1.bf16.msra.mxu0 0
    %4654 = vmatprep.subr.bf16.mxu0 0
    %4655 = vmatpush1.bf16.msra.mxu0 %v509
    %4656 = vmatprep.subr.bf16.mxu0 0
    %4657 = vmatpush2.bf16.msra.mxu0 0
    %4658 = vmatprep.subr.bf16.mxu0 0
    %4659 = vmatpush2.bf16.msra.mxu0 0
    %4660 = vmatprep.subr.bf16.mxu0 0
    %4661 = vmatpush2.bf16.msra.mxu0 0
    %4662 = vmatprep.subr.bf16.mxu0 0
    %4663 = vmatpush2.bf16.msra.mxu0 0
    %4664 = vmatprep.subr.bf16.mxu0 0
    %4665 = vmatpush2.bf16.msra.mxu0 0
    %4666 = vmatprep.subr.bf16.mxu0 0
    %4667 = vmatpush2.bf16.msra.mxu0 0
    %4668 = vmatprep.subr.bf16.mxu0 0
    %4669 = vmatpush2.bf16.msra.mxu0 0
    %4670 = vmatprep.subr.bf16.mxu0 0
    %4671 = vmatpush2.bf16.msra.mxu0 0
    %4672 = vmatprep.mubr.bf16.mxu0 0
    %4673 = vmatmul.mubr.bf16.gmra.mxu0 %v4638
    %v4674 = vpop.f32.mrf.mxu0
    %v4675 = vadd.f32 0.0, %v4674
    %v4676 = vpop.f32.mrf.mxu0
    %v4677 = vpop.f32.mrf.mxu0
    %v4678 = vpop.f32.mrf.mxu0
    %4679 = vdwg.mxu0
    %v4680 = vpack.c.bf16 %v4675, %v4675
    %s4681 = scalar_lea.vmem [#allocation32], 40
    %v4682 = vld [vmem:[%s4681] sm:$0xf]
    %v4683 = vld [vmem:[%s4681 + $0x4] sm:$0xf]
    %v4684 = vld [vmem:[%s4681 + $0x8] sm:$0xf]
    %v4685 = vld [vmem:[%s4681 + $0xc] sm:$0xf]
    %v4686 = vld [vmem:[%s4681 + $0x10] sm:$0x3]
    %v4692 = vunpack.c.l.b16 %v4682
    %v4693 = vunpack.c.l.b16 %v4683
    %v4694 = vunpack.c.l.b16 %v4684
    %v4695 = vunpack.c.l.b16 %v4685
    %v4696 = vunpack.c.l.b16 %v4686
    %v4697 = vpack.c.b16 %v4693, %v4692
    %v4698 = vpack.c.b16 %v4695, %v4694
    %v4699 = vpack.c.b16 %v4696, %v4696
    %v4703 = vsel %vm667, %v4636, 0
    %v4706 = vsel %vm680, %v4699, 0
    %4708 = vmatprep.subr.bf16.mxu0 0
    %4709 = vmatpush1.bf16.msra.mxu0 0
    %4710 = vmatprep.subr.bf16.mxu0 0
    %4711 = vmatpush1.bf16.msra.mxu0 0
    %4712 = vmatprep.subr.bf16.mxu0 0
    %4713 = vmatpush1.bf16.msra.mxu0 0
    %4714 = vmatprep.subr.bf16.mxu0 0
    %4715 = vmatpush1.bf16.msra.mxu0 0
    %4716 = vmatprep.subr.bf16.mxu0 0
    %4717 = vmatpush1.bf16.msra.mxu0 0
    %4718 = vmatprep.subr.bf16.mxu0 0
    %4719 = vmatpush1.bf16.msra.mxu0 %v4706
    %4720 = vmatprep.subr.bf16.mxu0 0
    %4721 = vmatpush1.bf16.msra.mxu0 %v4698
    %4722 = vmatprep.subr.bf16.mxu0 0
    %4723 = vmatpush1.bf16.msra.mxu0 %v4697
    %4724 = vmatprep.subr.bf16.mxu0 0
    %4725 = vmatpush2.bf16.msra.mxu0 0
    %4726 = vmatprep.subr.bf16.mxu0 0
    %4727 = vmatpush2.bf16.msra.mxu0 0
    %4728 = vmatprep.subr.bf16.mxu0 0
    %4729 = vmatpush2.bf16.msra.mxu0 0
    %4730 = vmatprep.subr.bf16.mxu0 0
    %4731 = vmatpush2.bf16.msra.mxu0 0
    %4732 = vmatprep.subr.bf16.mxu0 0
    %4733 = vmatpush2.bf16.msra.mxu0 0
    %4734 = vmatprep.subr.bf16.mxu0 0
    %4735 = vmatpush2.bf16.msra.mxu0 0
    %4736 = vmatprep.subr.bf16.mxu0 0
    %4737 = vmatpush2.bf16.msra.mxu0 0
    %4738 = vmatprep.subr.bf16.mxu0 0
    %4739 = vmatpush2.bf16.msra.mxu0 0
    %4740 = vmatprep.mubr.bf16.mxu0 0
    %4741 = vmatmul.mubr.bf16.gmra.mxu0 %v4703
    %v4742 = vpop.f32.mrf.mxu0
    %v4743 = vadd.f32 0.0, %v4742
    %v4744 = vpop.f32.mrf.mxu0
    %v4745 = vpop.f32.mrf.mxu0
    %v4746 = vpop.f32.mrf.mxu0
    %4747 = vdwg.mxu0
    %v4749 = vlaneseq
    %v4750 = vshrl.u32 %v4749, 7
    %v4751 = vsub.s32 0, %v4750
    %v4752 = vrot.slane %v4592, %v4751
    %v4754 = vadd.f32 %v4752, %v4743
    %s4755 = scalar_lea.vmem [#allocation35], 40
    %v4756 = vld [vmem:[%s4755] sm:$0xf]
    %v4757 = vld [vmem:[%s4755 + $0x4] sm:$0xf]
    %v4758 = vld [vmem:[%s4755 + $0x8] sm:$0xf]
    %v4759 = vld [vmem:[%s4755 + $0xc] sm:$0xf]
    %v4760 = vld [vmem:[%s4755 + $0x10] sm:$0x3]
    %v4766 = vunpack.c.l.b16 %v4756
    %v4767 = vunpack.c.l.b16 %v4757
    %v4768 = vunpack.c.l.b16 %v4758
    %v4769 = vunpack.c.l.b16 %v4759
    %v4770 = vunpack.c.l.b16 %v4760
    %v4771 = vpack.c.b16 %v4767, %v4766
    %v4772 = vpack.c.b16 %v4769, %v4768
    %v4773 = vpack.c.b16 %v4770, %v4770
    %v4777 = vsel %vm667, %v4680, 0
    %v4780 = vsel %vm680, %v4773, 0
    %4782 = vmatprep.subr.bf16.mxu0 0
    %4783 = vmatpush1.bf16.msra.mxu0 0
    %4784 = vmatprep.subr.bf16.mxu0 0
    %4785 = vmatpush1.bf16.msra.mxu0 0
    %4786 = vmatprep.subr.bf16.mxu0 0
    %4787 = vmatpush1.bf16.msra.mxu0 0
    %4788 = vmatprep.subr.bf16.mxu0 0
    %4789 = vmatpush1.bf16.msra.mxu0 0
    %4790 = vmatprep.subr.bf16.mxu0 0
    %4791 = vmatpush1.bf16.msra.mxu0 0
    %4792 = vmatprep.subr.bf16.mxu0 0
    %4793 = vmatpush1.bf16.msra.mxu0 %v4780
    %4794 = vmatprep.subr.bf16.mxu0 0
    %4795 = vmatpush1.bf16.msra.mxu0 %v4772
    %4796 = vmatprep.subr.bf16.mxu0 0
    %4797 = vmatpush1.bf16.msra.mxu0 %v4771
    %4798 = vmatprep.subr.bf16.mxu0 0
    %4799 = vmatpush2.bf16.msra.mxu0 0
    %4800 = vmatprep.subr.bf16.mxu0 0
    %4801 = vmatpush2.bf16.msra.mxu0 0
    %4802 = vmatprep.subr.bf16.mxu0 0
    %4803 = vmatpush2.bf16.msra.mxu0 0
    %4804 = vmatprep.subr.bf16.mxu0 0
    %4805 = vmatpush2.bf16.msra.mxu0 0
    %4806 = vmatprep.subr.bf16.mxu0 0
    %4807 = vmatpush2.bf16.msra.mxu0 0
    %4808 = vmatprep.subr.bf16.mxu0 0
    %4809 = vmatpush2.bf16.msra.mxu0 0
    %4810 = vmatprep.subr.bf16.mxu0 0
    %4811 = vmatpush2.bf16.msra.mxu0 0
    %4812 = vmatprep.subr.bf16.mxu0 0
    %4813 = vmatpush2.bf16.msra.mxu0 0
    %4814 = vmatprep.mubr.bf16.mxu0 0
    %4815 = vmatmul.mubr.bf16.gmra.mxu0 %v4777
    %v4816 = vpop.f32.mrf.mxu0
    %v4817 = vadd.f32 0.0, %v4816
    %v4818 = vpop.f32.mrf.mxu0
    %v4819 = vpop.f32.mrf.mxu0
    %v4820 = vpop.f32.mrf.mxu0
    %4821 = vdwg.mxu0
    %v4822 = vadd.f32 %v4754, %v4817
    %4823 = vmatprep.subr.bf16.mxu0 0
    %4824 = vmatpush1.bf16.msra.mxu0 0
    %4825 = vmatprep.subr.bf16.mxu0 0
    %4826 = vmatpush1.bf16.msra.mxu0 0
    %4827 = vmatprep.subr.bf16.mxu0 0
    %4828 = vmatpush1.bf16.msra.mxu0 0
    %4829 = vmatprep.subr.bf16.mxu0 0
    %4830 = vmatpush1.bf16.msra.mxu0 0
    %4831 = vmatprep.subr.bf16.mxu0 0
    %4832 = vmatpush1.bf16.msra.mxu0 0
    %4833 = vmatprep.subr.bf16.mxu0 0
    %4834 = vmatpush1.bf16.msra.mxu0 0
    %4835 = vmatprep.subr.bf16.mxu0 0
    %4836 = vmatpush1.bf16.msra.mxu0 0
    %4837 = vmatprep.subr.bf16.mxu0 0
    %4838 = vmatpush1.bf16.msra.mxu0 %v1881
    %4839 = vmatprep.subr.bf16.mxu0 0
    %4840 = vmatpush2.bf16.msra.mxu0 0
    %4841 = vmatprep.subr.bf16.mxu0 0
    %4842 = vmatpush2.bf16.msra.mxu0 0
    %4843 = vmatprep.subr.bf16.mxu0 0
    %4844 = vmatpush2.bf16.msra.mxu0 0
    %4845 = vmatprep.subr.bf16.mxu0 0
    %4846 = vmatpush2.bf16.msra.mxu0 0
    %4847 = vmatprep.subr.bf16.mxu0 0
    %4848 = vmatpush2.bf16.msra.mxu0 0
    %4849 = vmatprep.subr.bf16.mxu0 0
    %4850 = vmatpush2.bf16.msra.mxu0 0
    %4851 = vmatprep.subr.bf16.mxu0 0
    %4852 = vmatpush2.bf16.msra.mxu0 0
    %4853 = vmatprep.subr.bf16.mxu0 0
    %4854 = vmatpush2.bf16.msra.mxu0 0
    %4855 = vmatprep.mubr.bf16.mxu0 0
    %4856 = vmatmul.mubr.bf16.gmra.mxu0 %v4594
    %v4857 = vpop.f32.mrf.mxu0
    %v4858 = vadd.f32 0.0, %v4857
    %v4859 = vpop.f32.mrf.mxu0
    %v4860 = vpop.f32.mrf.mxu0
    %v4861 = vpop.f32.mrf.mxu0
    %4862 = vdwg.mxu0
    %v4863 = vpack.c.bf16 %v4858, %v4858
    %4864 = vmatprep.subr.bf16.mxu0 0
    %4865 = vmatpush1.bf16.msra.mxu0 0
    %4866 = vmatprep.subr.bf16.mxu0 0
    %4867 = vmatpush1.bf16.msra.mxu0 0
    %4868 = vmatprep.subr.bf16.mxu0 0
    %4869 = vmatpush1.bf16.msra.mxu0 0
    %4870 = vmatprep.subr.bf16.mxu0 0
    %4871 = vmatpush1.bf16.msra.mxu0 0
    %4872 = vmatprep.subr.bf16.mxu0 0
    %4873 = vmatpush1.bf16.msra.mxu0 0
    %4874 = vmatprep.subr.bf16.mxu0 0
    %4875 = vmatpush1.bf16.msra.mxu0 0
    %4876 = vmatprep.subr.bf16.mxu0 0
    %4877 = vmatpush1.bf16.msra.mxu0 0
    %4878 = vmatprep.subr.bf16.mxu0 0
    %4879 = vmatpush1.bf16.msra.mxu0 %v1881
    %4880 = vmatprep.subr.bf16.mxu0 0
    %4881 = vmatpush2.bf16.msra.mxu0 0
    %4882 = vmatprep.subr.bf16.mxu0 0
    %4883 = vmatpush2.bf16.msra.mxu0 0
    %4884 = vmatprep.subr.bf16.mxu0 0
    %4885 = vmatpush2.bf16.msra.mxu0 0
    %4886 = vmatprep.subr.bf16.mxu0 0
    %4887 = vmatpush2.bf16.msra.mxu0 0
    %4888 = vmatprep.subr.bf16.mxu0 0
    %4889 = vmatpush2.bf16.msra.mxu0 0
    %4890 = vmatprep.subr.bf16.mxu0 0
    %4891 = vmatpush2.bf16.msra.mxu0 0
    %4892 = vmatprep.subr.bf16.mxu0 0
    %4893 = vmatpush2.bf16.msra.mxu0 0
    %4894 = vmatprep.subr.bf16.mxu0 0
    %4895 = vmatpush2.bf16.msra.mxu0 0
    %4896 = vmatprep.mubr.bf16.mxu0 0
    %4897 = vmatmul.mubr.bf16.gmra.mxu0 %v4638
    %v4898 = vpop.f32.mrf.mxu0
    %v4899 = vadd.f32 0.0, %v4898
    %v4900 = vpop.f32.mrf.mxu0
    %v4901 = vpop.f32.mrf.mxu0
    %v4902 = vpop.f32.mrf.mxu0
    %4903 = vdwg.mxu0
    %v4904 = vpack.c.bf16 %v4899, %v4899
    %s4905 = scalar_lea.vmem [#allocation34], 24
    %v4906 = vld [vmem:[%s4905] sm:$0xf]
    %v4907 = vld [vmem:[%s4905 + $0x4] sm:$0xf]
    %v4908 = vld [vmem:[%s4905 + $0x8] sm:$0xf]
    %v4909 = vld [vmem:[%s4905 + $0xc] sm:$0xf]
    %v4910 = vld [vmem:[%s4905 + $0x10] sm:$0xf]
    %v4911 = vld [vmem:[%s4905 + $0x14] sm:$0xf]
    %v4918 = vunpack.c.l.b16 %v4906
    %v4919 = vunpack.c.l.b16 %v4907
    %v4920 = vunpack.c.l.b16 %v4908
    %v4921 = vunpack.c.l.b16 %v4909
    %v4922 = vunpack.c.l.b16 %v4910
    %v4923 = vunpack.c.l.b16 %v4911
    %v4924 = vpack.c.b16 %v4919, %v4918
    %v4925 = vpack.c.b16 %v4921, %v4920
    %v4926 = vpack.c.b16 %v4923, %v4922
    %v4931 = vsel %vm2171, %v4863, 0
    %4933 = vmatprep.subr.bf16.mxu0 0
    %4934 = vmatpush1.bf16.msra.mxu0 0
    %4935 = vmatprep.subr.bf16.mxu0 0
    %4936 = vmatpush1.bf16.msra.mxu0 0
    %4937 = vmatprep.subr.bf16.mxu0 0
    %4938 = vmatpush1.bf16.msra.mxu0 0
    %4939 = vmatprep.subr.bf16.mxu0 0
    %4940 = vmatpush1.bf16.msra.mxu0 0
    %4941 = vmatprep.subr.bf16.mxu0 0
    %4942 = vmatpush1.bf16.msra.mxu0 0
    %4943 = vmatprep.subr.bf16.mxu0 0
    %4944 = vmatpush1.bf16.msra.mxu0 %v4926
    %4945 = vmatprep.subr.bf16.mxu0 0
    %4946 = vmatpush1.bf16.msra.mxu0 %v4925
    %4947 = vmatprep.subr.bf16.mxu0 0
    %4948 = vmatpush1.bf16.msra.mxu0 %v4924
    %4949 = vmatprep.subr.bf16.mxu0 0
    %4950 = vmatpush2.bf16.msra.mxu0 0
    %4951 = vmatprep.subr.bf16.mxu0 0
    %4952 = vmatpush2.bf16.msra.mxu0 0
    %4953 = vmatprep.subr.bf16.mxu0 0
    %4954 = vmatpush2.bf16.msra.mxu0 0
    %4955 = vmatprep.subr.bf16.mxu0 0
    %4956 = vmatpush2.bf16.msra.mxu0 0
    %4957 = vmatprep.subr.bf16.mxu0 0
    %4958 = vmatpush2.bf16.msra.mxu0 0
    %4959 = vmatprep.subr.bf16.mxu0 0
    %4960 = vmatpush2.bf16.msra.mxu0 0
    %4961 = vmatprep.subr.bf16.mxu0 0
    %4962 = vmatpush2.bf16.msra.mxu0 0
    %4963 = vmatprep.subr.bf16.mxu0 0
    %4964 = vmatpush2.bf16.msra.mxu0 0
    %4965 = vmatprep.mubr.bf16.mxu0 0
    %4966 = vmatmul.mubr.bf16.gmra.mxu0 %v4931
    %v4967 = vpop.f32.mrf.mxu0
    %v4968 = vadd.f32 0.0, %v4967
    %v4969 = vpop.f32.mrf.mxu0
    %v4970 = vpop.f32.mrf.mxu0
    %v4971 = vpop.f32.mrf.mxu0
    %4972 = vdwg.mxu0
    %v4973 = vadd.f32 %v4822, %v4968
    %s4974 = scalar_lea.vmem [#allocation37], 24
    %v4975 = vld [vmem:[%s4974] sm:$0xf]
    %v4976 = vld [vmem:[%s4974 + $0x4] sm:$0xf]
    %v4977 = vld [vmem:[%s4974 + $0x8] sm:$0xf]
    %v4978 = vld [vmem:[%s4974 + $0xc] sm:$0xf]
    %v4979 = vld [vmem:[%s4974 + $0x10] sm:$0xf]
    %v4980 = vld [vmem:[%s4974 + $0x14] sm:$0xf]
    %v4987 = vunpack.c.l.b16 %v4975
    %v4988 = vunpack.c.l.b16 %v4976
    %v4989 = vunpack.c.l.b16 %v4977
    %v4990 = vunpack.c.l.b16 %v4978
    %v4991 = vunpack.c.l.b16 %v4979
    %v4992 = vunpack.c.l.b16 %v4980
    %v4993 = vpack.c.b16 %v4988, %v4987
    %v4994 = vpack.c.b16 %v4990, %v4989
    %v4995 = vpack.c.b16 %v4992, %v4991
    %v5000 = vsel %vm2171, %v4904, 0
    %5002 = vmatprep.subr.bf16.mxu0 0
    %5003 = vmatpush1.bf16.msra.mxu0 0
    %5004 = vmatprep.subr.bf16.mxu0 0
    %5005 = vmatpush1.bf16.msra.mxu0 0
    %5006 = vmatprep.subr.bf16.mxu0 0
    %5007 = vmatpush1.bf16.msra.mxu0 0
    %5008 = vmatprep.subr.bf16.mxu0 0
    %5009 = vmatpush1.bf16.msra.mxu0 0
    %5010 = vmatprep.subr.bf16.mxu0 0
    %5011 = vmatpush1.bf16.msra.mxu0 0
    %5012 = vmatprep.subr.bf16.mxu0 0
    %5013 = vmatpush1.bf16.msra.mxu0 %v4995
    %5014 = vmatprep.subr.bf16.mxu0 0
    %5015 = vmatpush1.bf16.msra.mxu0 %v4994
    %5016 = vmatprep.subr.bf16.mxu0 0
    %5017 = vmatpush1.bf16.msra.mxu0 %v4993
    %5018 = vmatprep.subr.bf16.mxu0 0
    %5019 = vmatpush2.bf16.msra.mxu0 0
    %5020 = vmatprep.subr.bf16.mxu0 0
    %5021 = vmatpush2.bf16.msra.mxu0 0
    %5022 = vmatprep.subr.bf16.mxu0 0
    %5023 = vmatpush2.bf16.msra.mxu0 0
    %5024 = vmatprep.subr.bf16.mxu0 0
    %5025 = vmatpush2.bf16.msra.mxu0 0
    %5026 = vmatprep.subr.bf16.mxu0 0
    %5027 = vmatpush2.bf16.msra.mxu0 0
    %5028 = vmatprep.subr.bf16.mxu0 0
    %5029 = vmatpush2.bf16.msra.mxu0 0
    %5030 = vmatprep.subr.bf16.mxu0 0
    %5031 = vmatpush2.bf16.msra.mxu0 0
    %5032 = vmatprep.subr.bf16.mxu0 0
    %5033 = vmatpush2.bf16.msra.mxu0 0
    %5034 = vmatprep.mubr.bf16.mxu0 0
    %5035 = vmatmul.mubr.bf16.gmra.mxu0 %v5000
    %v5036 = vpop.f32.mrf.mxu0
    %v5037 = vadd.f32 0.0, %v5036
    %v5038 = vpop.f32.mrf.mxu0
    %v5039 = vpop.f32.mrf.mxu0
    %v5040 = vpop.f32.mrf.mxu0
    %5041 = vdwg.mxu0
    %v5042 = vadd.f32 %v4973, %v5037
    %5043 = vmatprep.subr.bf16.mxu0 0
    %5044 = vmatpush1.bf16.msra.mxu0 0
    %5045 = vmatprep.subr.bf16.mxu0 0
    %5046 = vmatpush1.bf16.msra.mxu0 0
    %5047 = vmatprep.subr.bf16.mxu0 0
    %5048 = vmatpush1.bf16.msra.mxu0 0
    %5049 = vmatprep.subr.bf16.mxu0 0
    %5050 = vmatpush1.bf16.msra.mxu0 0
    %5051 = vmatprep.subr.bf16.mxu0 0
    %5052 = vmatpush1.bf16.msra.mxu0 0
    %5053 = vmatprep.subr.bf16.mxu0 0
    %5054 = vmatpush1.bf16.msra.mxu0 0
    %5055 = vmatprep.subr.bf16.mxu0 0
    %5056 = vmatpush1.bf16.msra.mxu0 0
    %5057 = vmatprep.subr.bf16.mxu0 0
    %5058 = vmatpush1.bf16.msra.mxu0 %v3650
    %5059 = vmatprep.subr.bf16.mxu0 0
    %5060 = vmatpush2.bf16.msra.mxu0 0
    %5061 = vmatprep.subr.bf16.mxu0 0
    %5062 = vmatpush2.bf16.msra.mxu0 0
    %5063 = vmatprep.subr.bf16.mxu0 0
    %5064 = vmatpush2.bf16.msra.mxu0 0
    %5065 = vmatprep.subr.bf16.mxu0 0
    %5066 = vmatpush2.bf16.msra.mxu0 0
    %5067 = vmatprep.subr.bf16.mxu0 0
    %5068 = vmatpush2.bf16.msra.mxu0 0
    %5069 = vmatprep.subr.bf16.mxu0 0
    %5070 = vmatpush2.bf16.msra.mxu0 0
    %5071 = vmatprep.subr.bf16.mxu0 0
    %5072 = vmatpush2.bf16.msra.mxu0 0
    %5073 = vmatprep.subr.bf16.mxu0 0
    %5074 = vmatpush2.bf16.msra.mxu0 0
    %5075 = vmatprep.mubr.bf16.mxu0 0
    %5076 = vmatmul.mubr.bf16.gmra.mxu0 %v4594
    %v5077 = vpop.f32.mrf.mxu0
    %v5078 = vadd.f32 0.0, %v5077
    %v5079 = vpop.f32.mrf.mxu0
    %v5080 = vpop.f32.mrf.mxu0
    %v5081 = vpop.f32.mrf.mxu0
    %5082 = vdwg.mxu0
    %v5083 = vpack.c.bf16 %v5078, %v5078
    %5084 = vmatprep.subr.bf16.mxu0 0
    %5085 = vmatpush1.bf16.msra.mxu0 0
    %5086 = vmatprep.subr.bf16.mxu0 0
    %5087 = vmatpush1.bf16.msra.mxu0 0
    %5088 = vmatprep.subr.bf16.mxu0 0
    %5089 = vmatpush1.bf16.msra.mxu0 0
    %5090 = vmatprep.subr.bf16.mxu0 0
    %5091 = vmatpush1.bf16.msra.mxu0 0
    %5092 = vmatprep.subr.bf16.mxu0 0
    %5093 = vmatpush1.bf16.msra.mxu0 0
    %5094 = vmatprep.subr.bf16.mxu0 0
    %5095 = vmatpush1.bf16.msra.mxu0 0
    %5096 = vmatprep.subr.bf16.mxu0 0
    %5097 = vmatpush1.bf16.msra.mxu0 0
    %5098 = vmatprep.subr.bf16.mxu0 0
    %5099 = vmatpush1.bf16.msra.mxu0 %v3650
    %5100 = vmatprep.subr.bf16.mxu0 0
    %5101 = vmatpush2.bf16.msra.mxu0 0
    %5102 = vmatprep.subr.bf16.mxu0 0
    %5103 = vmatpush2.bf16.msra.mxu0 0
    %5104 = vmatprep.subr.bf16.mxu0 0
    %5105 = vmatpush2.bf16.msra.mxu0 0
    %5106 = vmatprep.subr.bf16.mxu0 0
    %5107 = vmatpush2.bf16.msra.mxu0 0
    %5108 = vmatprep.subr.bf16.mxu0 0
    %5109 = vmatpush2.bf16.msra.mxu0 0
    %5110 = vmatprep.subr.bf16.mxu0 0
    %5111 = vmatpush2.bf16.msra.mxu0 0
    %5112 = vmatprep.subr.bf16.mxu0 0
    %5113 = vmatpush2.bf16.msra.mxu0 0
    %5114 = vmatprep.subr.bf16.mxu0 0
    %5115 = vmatpush2.bf16.msra.mxu0 0
    %5116 = vmatprep.mubr.bf16.mxu0 0
    %5117 = vmatmul.mubr.bf16.gmra.mxu0 %v4638
    %v5118 = vpop.f32.mrf.mxu0
    %v5119 = vadd.f32 0.0, %v5118
    %v5120 = vpop.f32.mrf.mxu0
    %v5121 = vpop.f32.mrf.mxu0
    %v5122 = vpop.f32.mrf.mxu0
    %5123 = vdwg.mxu0
    %v5124 = vpack.c.bf16 %v5119, %v5119
    %v5125 = vld [vmem:[%s53] sm:$0xf]
    %v5126 = vld [vmem:[%s53 + $0x4] sm:$0xf]
    %v5127 = vld [vmem:[%s53 + $0x8] sm:$0xf]
    %v5128 = vld [vmem:[%s53 + $0xc] sm:$0xf]
    %v5129 = vld [vmem:[%s53 + $0x10] sm:$0xf]
    %v5130 = vld [vmem:[%s53 + $0x14] sm:$0xf]
    %v5137 = vunpack.c.l.b16 %v5125
    %v5138 = vunpack.c.l.b16 %v5126
    %v5139 = vunpack.c.l.b16 %v5127
    %v5140 = vunpack.c.l.b16 %v5128
    %v5141 = vunpack.c.l.b16 %v5129
    %v5142 = vunpack.c.l.b16 %v5130
    %v5143 = vpack.c.b16 %v5138, %v5137
    %v5144 = vpack.c.b16 %v5140, %v5139
    %v5145 = vpack.c.b16 %v5142, %v5141
    %v5150 = vsel %vm2171, %v5083, 0
    %5152 = vmatprep.subr.bf16.mxu0 0
    %5153 = vmatpush1.bf16.msra.mxu0 0
    %5154 = vmatprep.subr.bf16.mxu0 0
    %5155 = vmatpush1.bf16.msra.mxu0 0
    %5156 = vmatprep.subr.bf16.mxu0 0
    %5157 = vmatpush1.bf16.msra.mxu0 0
    %5158 = vmatprep.subr.bf16.mxu0 0
    %5159 = vmatpush1.bf16.msra.mxu0 0
    %5160 = vmatprep.subr.bf16.mxu0 0
    %5161 = vmatpush1.bf16.msra.mxu0 0
    %5162 = vmatprep.subr.bf16.mxu0 0
    %5163 = vmatpush1.bf16.msra.mxu0 %v5145
    %5164 = vmatprep.subr.bf16.mxu0 0
    %5165 = vmatpush1.bf16.msra.mxu0 %v5144
    %5166 = vmatprep.subr.bf16.mxu0 0
    %5167 = vmatpush1.bf16.msra.mxu0 %v5143
    %5168 = vmatprep.subr.bf16.mxu0 0
    %5169 = vmatpush2.bf16.msra.mxu0 0
    %5170 = vmatprep.subr.bf16.mxu0 0
    %5171 = vmatpush2.bf16.msra.mxu0 0
    %5172 = vmatprep.subr.bf16.mxu0 0
    %5173 = vmatpush2.bf16.msra.mxu0 0
    %5174 = vmatprep.subr.bf16.mxu0 0
    %5175 = vmatpush2.bf16.msra.mxu0 0
    %5176 = vmatprep.subr.bf16.mxu0 0
    %5177 = vmatpush2.bf16.msra.mxu0 0
    %5178 = vmatprep.subr.bf16.mxu0 0
    %5179 = vmatpush2.bf16.msra.mxu0 0
    %5180 = vmatprep.subr.bf16.mxu0 0
    %5181 = vmatpush2.bf16.msra.mxu0 0
    %5182 = vmatprep.subr.bf16.mxu0 0
    %5183 = vmatpush2.bf16.msra.mxu0 0
    %5184 = vmatprep.mubr.bf16.mxu0 0
    %5185 = vmatmul.mubr.bf16.gmra.mxu0 %v5150
    %v5186 = vpop.f32.mrf.mxu0
    %v5187 = vadd.f32 0.0, %v5186
    %v5188 = vpop.f32.mrf.mxu0
    %v5189 = vpop.f32.mrf.mxu0
    %v5190 = vpop.f32.mrf.mxu0
    %5191 = vdwg.mxu0
    %v5192 = vadd.f32 %v5042, %v5187
    %v5193 = vld [vmem:[#allocation38] sm:$0xf]
    %v5194 = vld [vmem:[#allocation38 + $0x4] sm:$0xf]
    %v5195 = vld [vmem:[#allocation38 + $0x8] sm:$0xf]
    %v5196 = vld [vmem:[#allocation38 + $0xc] sm:$0xf]
    %v5197 = vld [vmem:[#allocation38 + $0x10] sm:$0xf]
    %v5198 = vld [vmem:[#allocation38 + $0x14] sm:$0xf]
    %v5205 = vunpack.c.l.b16 %v5193
    %v5206 = vunpack.c.l.b16 %v5194
    %v5207 = vunpack.c.l.b16 %v5195
    %v5208 = vunpack.c.l.b16 %v5196
    %v5209 = vunpack.c.l.b16 %v5197
    %v5210 = vunpack.c.l.b16 %v5198
    %v5211 = vpack.c.b16 %v5206, %v5205
    %v5212 = vpack.c.b16 %v5208, %v5207
    %v5213 = vpack.c.b16 %v5210, %v5209
    %v5218 = vsel %vm2171, %v5124, 0
    %5220 = vmatprep.subr.bf16.mxu0 0
    %5221 = vmatpush1.bf16.msra.mxu0 0
    %5222 = vmatprep.subr.bf16.mxu0 0
    %5223 = vmatpush1.bf16.msra.mxu0 0
    %5224 = vmatprep.subr.bf16.mxu0 0
    %5225 = vmatpush1.bf16.msra.mxu0 0
    %5226 = vmatprep.subr.bf16.mxu0 0
    %5227 = vmatpush1.bf16.msra.mxu0 0
    %5228 = vmatprep.subr.bf16.mxu0 0
    %5229 = vmatpush1.bf16.msra.mxu0 0
    %5230 = vmatprep.subr.bf16.mxu0 0
    %5231 = vmatpush1.bf16.msra.mxu0 %v5213
    %5232 = vmatprep.subr.bf16.mxu0 0
    %5233 = vmatpush1.bf16.msra.mxu0 %v5212
    %5234 = vmatprep.subr.bf16.mxu0 0
    %5235 = vmatpush1.bf16.msra.mxu0 %v5211
    %5236 = vmatprep.subr.bf16.mxu0 0
    %5237 = vmatpush2.bf16.msra.mxu0 0
    %5238 = vmatprep.subr.bf16.mxu0 0
    %5239 = vmatpush2.bf16.msra.mxu0 0
    %5240 = vmatprep.subr.bf16.mxu0 0
    %5241 = vmatpush2.bf16.msra.mxu0 0
    %5242 = vmatprep.subr.bf16.mxu0 0
    %5243 = vmatpush2.bf16.msra.mxu0 0
    %5244 = vmatprep.subr.bf16.mxu0 0
    %5245 = vmatpush2.bf16.msra.mxu0 0
    %5246 = vmatprep.subr.bf16.mxu0 0
    %5247 = vmatpush2.bf16.msra.mxu0 0
    %5248 = vmatprep.subr.bf16.mxu0 0
    %5249 = vmatpush2.bf16.msra.mxu0 0
    %5250 = vmatprep.subr.bf16.mxu0 0
    %5251 = vmatpush2.bf16.msra.mxu0 0
    %5252 = vmatprep.mubr.bf16.mxu0 0
    %5253 = vmatmul.mubr.bf16.gmra.mxu0 %v5218
    %v5254 = vpop.f32.mrf.mxu0
    %v5255 = vadd.f32 0.0, %v5254
    %v5256 = vpop.f32.mrf.mxu0
    %v5257 = vpop.f32.mrf.mxu0
    %v5258 = vpop.f32.mrf.mxu0
    %5259 = vdwg.mxu0
    %v5260 = vadd.f32 %v5192, %v5255
    %vm5261 = vcmask 25600
    %5262 = vst.msk [vmem:[#allocation40] sm:$0x3] %vm5261, %v5260
    // Predicated region
    $region218: #{tpu_custom_call.1} parent=1 // pred_check
      _
    $region219: #{tpu_custom_call.1} parent=1 // pred_check_branch
      %5264 = sbr.rel (0) target = $region221
    $region220: #{tpu_custom_call.1} parent=1 // pred_region
      %s5266 = ssub.s32 32, 32
      %5267 = vsyncadd [#allocation4], %s5266
      %s5269 = sshll.u32 [#allocation40], 4
      %s5270 = int_to_ptr.vmem [resolvable:$true] %s5269
      %5272 = dma.vmem_to_hbm [thread:$0]  %s5270, 32, %s61, [#allocation4]
    $region221: #{tpu_custom_call.1} parent=1 // pred_fallthru
      _
    // Predicated region
    $region222: #{tpu_custom_call.1} parent=1 // pred_check
      _
    $region223: #{tpu_custom_call.1} parent=1 // pred_check_branch
      %5274 = sbr.rel (0) target = $region225
    $region224: #{tpu_custom_call.1} parent=1 // pred_region
      %5275 = dma.done [#allocation4], 32
    $region225: #{tpu_custom_call.1} parent=1 // pred_fallthru
      _
    %5276 = vsyncpa [#allocation3], 1
    %5277 = vsyncpa [#allocation6], 1
    %5278 = vsyncpa [#allocation9], 1
    %5279 = vsyncpa [#allocation12], 1
    %5280 = vsyncpa [#allocation15], 1
    %5281 = vsyncpa [#allocation18], 1
    %5282 = vsyncpa [#allocation21], 1
    %5283 = vsyncpa [#allocation24], 1
    %5284 = vsyncpa [#allocation27], 1
    %5285 = vsyncpa [#allocation30], 1
    %5286 = vsyncpa [#allocation33], 1
    %5287 = vsyncpa [#allocation36], 1
    %5288 = vsyncpa [#allocation39], 1
    %5289 = vsyncpa [#allocation4], 1

</llo_original>
